<compile_context>
chip_gen: v7x
topology: tpu7x:2x2x1
jax: 0.10.0
libtpu: 0.0.40
codegen_flags: <defaults>
</compile_context>

<pallas_src>
import jax
import jax.numpy as jnp
from jax import lax
from jax.experimental import pallas as pl
from jax.experimental.pallas import tpu as pltpu

GP = 128  # per-gate lane pitch (one vreg lane width)


# ---------------------------------------------------------------------------
# Fused kernel: BiGRU over time + attention pooling, single invocation.
# ---------------------------------------------------------------------------
def _bigru_attn_kernel(x_ref, m_ref, ms_ref, q_ref,
                       wx_ref, bx_ref, whh_ref, bhh_ref,
                       w1_ref, w2_ref, blin_ref, watt_ref,
                       out_ref,
                       gi_ref, f_ref, b_ref):
    T, B, In2 = x_ref.shape
    G3 = whh_ref.shape[1]          # 3 * GP
    H2 = out_ref.shape[1]          # 2H
    H = H2 // 2
    D4 = w2_ref.shape[1]           # 4H

    # ---- (1) input projection hoisted off the recurrence: one MXU op -------
    gi_all = (jnp.dot(x_ref[...].reshape(T * B, In2), wx_ref[...],
                      preferred_element_type=jnp.float32) + bx_ref[...])
    gi_ref[...] = gi_all.reshape(T, B, G3)

    whh = whh_ref[...]             # (GP, 3*GP) block-diagonal (loop-invariant)
    bhh = bhh_ref[...]             # (1, 3*GP)

    # ---- (2) serial recurrence: ONE matmul per step on the h-chain ---------
    def body(t, h):
        gi = gi_ref[t]                                              # (B, 3*GP)
        gh = jnp.dot(h, whh, preferred_element_type=jnp.float32) + bhh
        # (3) gate slices are whole-vreg (128-lane aligned)
        r = jax.nn.sigmoid(gi[:, :GP] + gh[:, :GP])
        z = jax.nn.sigmoid(gi[:, GP:2 * GP] + gh[:, GP:2 * GP])
        n = jnp.tanh(gi[:, 2 * GP:] + r * gh[:, 2 * GP:])
        hc = (1.0 - z) * n + z * h
        m = m_ref[t]                                                # (B, GP)
        h = m * hc + (1.0 - m) * h      # freeze past sequence end (per lane)
        # (4) unmasked full-width scratch stores (softmax masks padded steps)
        f_ref[t] = h                    # fwd-aligned view (lanes 0:H valid)
        b_ref[T - 1 - t] = h            # bwd-aligned view (lanes H:2H valid)
        return h

    h0 = jnp.zeros((B, GP), jnp.float32)
    lax.fori_loop(0, T, body, h0, unroll=(True if T <= 16 else 4))

    # ---- (5) attention pooling, all VMEM-resident ---------------------------
    f = f_ref[...]                       # (T, B, GP)
    b = b_ref[...]                       # (T, B, GP)
    lane = lax.broadcasted_iota(jnp.int32, (1, 1, GP), 2)
    # emb[t] = [hf(t) | hb(t) | 0...]  (lanes >= 2H are zero in both buffers)
    emb = jnp.where(lane < H, f, b)      # (T, B, GP)

    # Linear(cat(emb_v, q)) == emb @ W1 + q @ W2 + b_lin  (weights pre-split)
    g = jnp.dot(emb.reshape(T * B, GP), w1_ref[...],
                preferred_element_type=jnp.float32).reshape(T, B, D4)
    qc = jnp.dot(q_ref[...], w2_ref[...],
                 preferred_element_type=jnp.float32) + blin_ref[...]   # (B, 4H)
    emb_h = jnp.tanh(g + qc[None])                                     # (T, B, 4H)
    att = jnp.sum(emb_h * watt_ref[...], axis=2, keepdims=True)        # (T, B, 1)

    # masked softmax over time (matches torch: no max subtraction, +1e-4 denom)
    e = jnp.exp(att) * ms_ref[...]                                     # (T, B, 1)
    denom = jnp.sum(e, axis=0, keepdims=True) + 0.0001                 # (1, B, 1)
    w = e * pl.reciprocal(denom, approx=True)                          # (T, B, 1)

    pooled = jnp.sum(w * emb, axis=0)                                  # (B, GP)
    out_ref[...] = pooled[:, :H2]        # single full store of (B, 2H)


# ---------------------------------------------------------------------------
# Wrapper: weight repacking + single pallas_call
# ---------------------------------------------------------------------------
def bigru_attention_sent(x, lens, q_vs, params):
    T, B, In = x.shape
    H = params["wih_f"].shape[0] // 3
    f32 = jnp.float32

    # --- masks ---------------------------------------------------------------
    m_f = (jnp.arange(T)[:, None] < lens[None, :]).astype(f32)        # (T, B)
    m_b = m_f[::-1]                                                    # bwd-aligned
    mask_soft = m_f[:, :, None]                                        # (T, B, 1)
    mcat = jnp.zeros((T, B, GP), f32)
    mcat = mcat.at[:, :, :H].set(jnp.broadcast_to(m_f[:, :, None], (T, B, H)))
    mcat = mcat.at[:, :, H:2 * H].set(jnp.broadcast_to(m_b[:, :, None], (T, B, H)))

    # --- fused fwd/bwd input: row t holds [x(t) | x(T-1-t)] -------------------
    xcat = jnp.concatenate([x, x[::-1]], axis=2)                       # (T, B, 2*In)

    # --- GRU weights: block-diag, gate blocks padded to 128 lanes -------------
    def pack_ih(w_f, w_b, b_f, b_b):
        W = jnp.zeros((2 * In, 3 * GP), f32)
        bias = jnp.zeros((1, 3 * GP), f32)
        for g in range(3):
            W = W.at[:In, g * GP:g * GP + H].set(w_f[g * H:(g + 1) * H, :].T)
            W = W.at[In:, g * GP + H:g * GP + 2 * H].set(w_b[g * H:(g + 1) * H, :].T)
            bias = bias.at[0, g * GP:g * GP + H].set(b_f[g * H:(g + 1) * H])
            bias = bias.at[0, g * GP + H:g * GP + 2 * H].set(b_b[g * H:(g + 1) * H])
        return W, bias

    def pack_hh(w_f, w_b, b_f, b_b):
        W = jnp.zeros((GP, 3 * GP), f32)
        bias = jnp.zeros((1, 3 * GP), f32)
        for g in range(3):
            W = W.at[:H, g * GP:g * GP + H].set(w_f[g * H:(g + 1) * H, :].T)
            W = W.at[H:2 * H, g * GP + H:g * GP + 2 * H].set(w_b[g * H:(g + 1) * H, :].T)
            bias = bias.at[0, g * GP:g * GP + H].set(b_f[g * H:(g + 1) * H])
            bias = bias.at[0, g * GP + H:g * GP + 2 * H].set(b_b[g * H:(g + 1) * H])
        return W, bias

    wx, bx = pack_ih(params["wih_f"], params["wih_b"], params["bih_f"], params["bih_b"])
    whh, bhh = pack_hh(params["whh_f"], params["whh_b"], params["bhh_f"], params["bhh_b"])

    # --- Linear weight split: emb part (padded to GP rows) + query part -------
    wlin = params["wlin"]                                              # (4H, 4H)
    w1 = jnp.zeros((GP, 4 * H), f32)
    w1 = w1.at[:2 * H, :].set(wlin[:, :2 * H].T)                       # (GP, 4H)
    w2 = wlin[:, 2 * H:].T                                             # (2H, 4H)
    blin = params["blin"][None, :]                                     # (1, 4H)
    watt = params["watt"]                                              # (1, 4H)

    full2 = lambda i: (0, 0)
    full3 = lambda i: (0, 0, 0)

    # TODO(synk): on v7x the two directions could run on separate TensorCores
    # (core_map / parallel grid axis); kept interleaved here since v5e/v6e have
    # a single TC and the interleave provides the ILP.
    return pl.pallas_call(
        _bigru_attn_kernel,
        grid=(1,),
        in_specs=[
            pl.BlockSpec((T, B, 2 * In), full3),      # xcat
            pl.BlockSpec((T, B, GP), full3),          # fused loop mask
            pl.BlockSpec((T, B, 1), full3),           # softmax mask
            pl.BlockSpec((B, 2 * H), full2),          # q_vs
            pl.BlockSpec((2 * In, 3 * GP), full2),    # wx (input weights, packed)
            pl.BlockSpec((1, 3 * GP), full2),         # bx
            pl.BlockSpec((GP, 3 * GP), full2),        # whh (block-diag, packed)
            pl.BlockSpec((1, 3 * GP), full2),         # bhh
            pl.BlockSpec((GP, 4 * H), full2),         # w1 (lin weight, emb part)
            pl.BlockSpec((2 * H, 4 * H), full2),      # w2 (lin weight, q part)
            pl.BlockSpec((1, 4 * H), full2),          # blin
            pl.BlockSpec((1, 4 * H), full2),          # watt
        ],
        out_specs=pl.BlockSpec((B, 2 * H), full2),
        out_shape=jax.ShapeDtypeStruct((B, 2 * H), jnp.float32),
        scratch_shapes=[pltpu.VMEM((T, B, 3 * GP), jnp.float32),   # hoisted gi
                        pltpu.VMEM((T, B, GP), jnp.float32),       # fwd-aligned h
                        pltpu.VMEM((T, B, GP), jnp.float32)],      # bwd-aligned h
        compiler_params=pltpu.CompilerParams(dimension_semantics=("arbitrary",)),
    )(xcat, mcat, mask_soft, q_vs, wx, bx, whh, bhh, w1, w2, blin, watt)


# ---------------------------------------------------------------------------
# Deterministic parameter init (shapes from the module's __init__)
# ---------------------------------------------------------------------------
def init_params(key, in_size, hidden_size):
    H = hidden_size
    kg = 1.0 / float(H) ** 0.5
    kl = 1.0 / float(4 * H) ** 0.5
    ks = jax.random.split(key, 11)
    u = lambda kk, shape, b: jax.random.uniform(kk, shape, jnp.float32, -b, b)
    return dict(
        wih_f=u(ks[0], (3 * H, in_size), kg), whh_f=u(ks[1], (3 * H, H), kg),
        bih_f=u(ks[2], (3 * H,), kg),         bhh_f=u(ks[3], (3 * H,), kg),
        wih_b=u(ks[4], (3 * H, in_size), kg), whh_b=u(ks[5], (3 * H, H), kg),
        bih_b=u(ks[6], (3 * H,), kg),         bhh_b=u(ks[7], (3 * H,), kg),
        wlin=u(ks[8], (4 * H, 4 * H), kl),    blin=u(ks[9], (4 * H,), kl),
        watt=u(ks[10], (1, 4 * H), kl),
    )


# ---------------------------------------------------------------------------
# Pure-JAX reference (mirrors the PyTorch forward) for a sanity check
# ---------------------------------------------------------------------------
def reference(x, lens, q_vs, p):
    T, B, In = x.shape
    H = p["wih_f"].shape[0] // 3
    mask_tb = (jnp.arange(T)[:, None] < lens[None, :]).astype(jnp.float32)

    def run_dir(xs, ms, wih, whh, bih, bhh):
        def step(h, inp):
            xt, mt = inp
            gi = xt @ wih.T + bih
            gh = h @ whh.T + bhh
            r = jax.nn.sigmoid(gi[:, :H] + gh[:, :H])
            z = jax.nn.sigmoid(gi[:, H:2 * H] + gh[:, H:2 * H])
            n = jnp.tanh(gi[:, 2 * H:] + r * gh[:, 2 * H:])
            hc = (1.0 - z) * n + z * h
            m = mt[:, None]
            hn = m * hc + (1.0 - m) * h
            return hn, m * hn
        _, outs = jax.lax.scan(step, jnp.zeros((B, H), jnp.float32), (xs, ms))
        return outs

    out_f = run_dir(x, mask_tb, p["wih_f"], p["whh_f"], p["bih_f"], p["bhh_f"])
    out_b = run_dir(x[::-1], mask_tb[::-1],
                    p["wih_b"], p["whh_b"], p["bih_b"], p["bhh_b"])[::-1]
    emb_v = jnp.concatenate([out_f, out_b], axis=2)
    mat = jnp.concatenate([emb_v, jnp.broadcast_to(q_vs[None], emb_v.shape)], axis=2)
    emb_h = jnp.tanh(mat.reshape(T * B, -1) @ p["wlin"].T + p["blin"])
    att = (emb_h @ p["watt"].T).reshape(T, B)
    e = jnp.exp(att) * mask_tb
    w = e / (e.sum(0, keepdims=True) + 0.0001)
    return (w[:, :, None] * emb_v).sum(0)


if __name__ == "__main__":
    in_size, hidden_size = 16, 16
    T, B = 10, 8

    key = jax.random.PRNGKey(0)
    k_p, k_x, k_q = jax.random.split(key, 3)
    params = init_params(k_p, in_size, hidden_size)

    # packed-sequence style: lengths sorted descending, lens[0] == T
    lens = jnp.array([10, 10, 9, 7, 6, 5, 3, 2], dtype=jnp.int32)
    x = jax.random.normal(k_x, (T, B, in_size), jnp.float32)
    pad = (jnp.arange(T)[:, None] < lens[None, :]).astype(jnp.float32)
    x = x * pad[..., None]                       # pad_packed_sequence pads with zeros
    q_vs = jax.random.normal(k_q, (B, 2 * hidden_size), jnp.float32)

    out = bigru_attention_sent(x, lens, q_vs, params)
    out = jax.block_until_ready(out)

    ref = reference(x, lens, q_vs, params)
    assert out.shape == (B, 2 * hidden_size)
    assert bool(jnp.allclose(out, ref, atol=1e-2, rtol=1e-2)), "mismatch vs JAX reference"
    print("KERNEL_OK")
</pallas_src>

<mosaic_0001>
module attributes {stable_mosaic.version = 11 : i64} {
  func.func @_bigru_attn_kernel(%arg0: i32, %arg1: memref<10x8x32xf32, #tpu.memory_space<vmem>>, %arg2: memref<10x8x128xf32, #tpu.memory_space<vmem>>, %arg3: memref<10x8x1xf32, #tpu.memory_space<vmem>>, %arg4: memref<8x32xf32, #tpu.memory_space<vmem>>, %arg5: memref<32x384xf32, #tpu.memory_space<vmem>>, %arg6: memref<1x384xf32, #tpu.memory_space<vmem>>, %arg7: memref<128x384xf32, #tpu.memory_space<vmem>>, %arg8: memref<1x384xf32, #tpu.memory_space<vmem>>, %arg9: memref<128x64xf32, #tpu.memory_space<vmem>>, %arg10: memref<32x64xf32, #tpu.memory_space<vmem>>, %arg11: memref<1x64xf32, #tpu.memory_space<vmem>>, %arg12: memref<1x64xf32, #tpu.memory_space<vmem>>, %arg13: memref<8x32xf32, #tpu.memory_space<vmem>>, %arg14: memref<10x8x384xf32, #tpu.memory_space<vmem>>, %arg15: memref<10x8x128xf32, #tpu.memory_space<vmem>>, %arg16: memref<10x8x128xf32, #tpu.memory_space<vmem>>) attributes {dimension_semantics = [#tpu.dimension_semantics<arbitrary>], iteration_bounds = array<i64: 1>, scalar_prefetch = 0 : i64, scratch_operands = 3 : i64, tpu.core_type = #tpu.core_type<tc>, window_params = [{pipeline_mode = #tpu.pipeline_mode<synchronous>, transform_indices = @transform_0, window_bounds = array<i64: 10, 8, 32>}, {pipeline_mode = #tpu.pipeline_mode<synchronous>, transform_indices = @transform_1, window_bounds = array<i64: 10, 8, 128>}, {pipeline_mode = #tpu.pipeline_mode<synchronous>, transform_indices = @transform_2, window_bounds = array<i64: 10, 8, 1>}, {pipeline_mode = #tpu.pipeline_mode<synchronous>, transform_indices = @transform_3, window_bounds = array<i64: 8, 32>}, {pipeline_mode = #tpu.pipeline_mode<synchronous>, transform_indices = @transform_4, window_bounds = array<i64: 32, 384>}, {pipeline_mode = #tpu.pipeline_mode<synchronous>, transform_indices = @transform_5, window_bounds = array<i64: 1, 384>}, {pipeline_mode = #tpu.pipeline_mode<synchronous>, transform_indices = @transform_6, window_bounds = array<i64: 128, 384>}, {pipeline_mode = #tpu.pipeline_mode<synchronous>, transform_indices = @transform_7, window_bounds = array<i64: 1, 384>}, {pipeline_mode = #tpu.pipeline_mode<synchronous>, transform_indices = @transform_8, window_bounds = array<i64: 128, 64>}, {pipeline_mode = #tpu.pipeline_mode<synchronous>, transform_indices = @transform_9, window_bounds = array<i64: 32, 64>}, {pipeline_mode = #tpu.pipeline_mode<synchronous>, transform_indices = @transform_10, window_bounds = array<i64: 1, 64>}, {pipeline_mode = #tpu.pipeline_mode<synchronous>, transform_indices = @transform_11, window_bounds = array<i64: 1, 64>}, {pipeline_mode = #tpu.pipeline_mode<synchronous>, transform_indices = @transform_12, window_bounds = array<i64: 8, 32>}]} {
    %c0 = arith.constant 0 : index
    %c0_0 = arith.constant 0 : index
    %c0_1 = arith.constant 0 : index
    %0 = vector.load %arg1[%c0, %c0_0, %c0_1] : memref<10x8x32xf32, #tpu.memory_space<vmem>>, vector<10x8x32xf32>
    %1 = vector.shape_cast %0 : vector<10x8x32xf32> to vector<80x32xf32>
    %c0_2 = arith.constant 0 : index
    %c0_3 = arith.constant 0 : index
    %2 = vector.load %arg5[%c0_2, %c0_3] : memref<32x384xf32, #tpu.memory_space<vmem>>, vector<32x384xf32>
    %cst = arith.constant dense<0.000000e+00> : vector<80x384xf32>
    %3 = tpu.matmul %1, %2, %cst {dimension_numbers = #tpu.dot_dimension_numbers<[1], [0], [0], [1], [0, 0, 1, 1], [], []>} : vector<80x32xf32>, vector<32x384xf32>, vector<80x384xf32> -> vector<80x384xf32>
    %c0_4 = arith.constant 0 : index
    %c0_5 = arith.constant 0 : index
    %4 = vector.load %arg6[%c0_4, %c0_5] : memref<1x384xf32, #tpu.memory_space<vmem>>, vector<1x384xf32>
    %5 = vector.broadcast %4 : vector<1x384xf32> to vector<80x384xf32>
    %6 = arith.addf %3, %5 : vector<80x384xf32>
    %7 = vector.shape_cast %6 : vector<80x384xf32> to vector<10x8x384xf32>
    %c0_6 = arith.constant 0 : index
    %c0_7 = arith.constant 0 : index
    %c0_8 = arith.constant 0 : index
    %8 = vector.load %arg14[%c0_6, %c0_7, %c0_8] : memref<10x8x384xf32, #tpu.memory_space<vmem>>, vector<10x8x384xf32>
    tpu.vector_store %arg14[%c0_6, %c0_7, %c0_8], %7 {strides = array<i32>} : memref<10x8x384xf32, #tpu.memory_space<vmem>>, vector<10x8x384xf32>,
    %c0_9 = arith.constant 0 : index
    %c0_10 = arith.constant 0 : index
    %9 = vector.load %arg7[%c0_9, %c0_10] : memref<128x384xf32, #tpu.memory_space<vmem>>, vector<128x384xf32>
    %c0_11 = arith.constant 0 : index
    %c0_12 = arith.constant 0 : index
    %10 = vector.load %arg8[%c0_11, %c0_12] : memref<1x384xf32, #tpu.memory_space<vmem>>, vector<1x384xf32>
    %cst_13 = arith.constant 0.000000e+00 : f32
    %11 = vector.broadcast %cst_13 : f32 to vector<8x128xf32>
    %c0_i32 = arith.constant 0 : i32
    %12 = arith.index_cast %c0_i32 : i32 to index
    %c0_14 = arith.constant 0 : index
    %c0_15 = arith.constant 0 : index
    %13 = vector.load %arg14[%12, %c0_14, %c0_15] : memref<10x8x384xf32, #tpu.memory_space<vmem>>, vector<1x8x384xf32>
    %14 = vector.shape_cast %13 : vector<1x8x384xf32> to vector<8x384xf32>
    %cst_16 = arith.constant dense<0.000000e+00> : vector<8x384xf32>
    %15 = tpu.matmul %11, %9, %cst_16 {dimension_numbers = #tpu.dot_dimension_numbers<[1], [0], [0], [1], [0, 0, 1, 1], [], []>} : vector<8x128xf32>, vector<128x384xf32>, vector<8x384xf32> -> vector<8x384xf32>
    %16 = vector.broadcast %10 : vector<1x384xf32> to vector<8x384xf32>
    %17 = arith.addf %15, %16 : vector<8x384xf32>
    %18 = vector.extract_strided_slice %14 {offsets = [0, 0], sizes = [8, 128], strides = [1, 1]} : vector<8x384xf32> to vector<8x128xf32>
    %19 = vector.extract_strided_slice %17 {offsets = [0, 0], sizes = [8, 128], strides = [1, 1]} : vector<8x384xf32> to vector<8x128xf32>
    %20 = arith.addf %18, %19 : vector<8x128xf32>
    %21 = arith.negf %20 : vector<8x128xf32>
    %22 = math.exp %21 : vector<8x128xf32>
    %cst_17 = arith.constant 1.000000e+00 : f32
    %23 = vector.broadcast %cst_17 : f32 to vector<8x128xf32>
    %24 = arith.addf %23, %22 : vector<8x128xf32>
    %25 = arith.divf %23, %24 : vector<8x128xf32>
    %26 = vector.extract_strided_slice %14 {offsets = [0, 128], sizes = [8, 128], strides = [1, 1]} : vector<8x384xf32> to vector<8x128xf32>
    %27 = vector.extract_strided_slice %17 {offsets = [0, 128], sizes = [8, 128], strides = [1, 1]} : vector<8x384xf32> to vector<8x128xf32>
    %28 = arith.addf %26, %27 : vector<8x128xf32>
    %29 = arith.negf %28 : vector<8x128xf32>
    %30 = math.exp %29 : vector<8x128xf32>
    %cst_18 = arith.constant 1.000000e+00 : f32
    %31 = vector.broadcast %cst_18 : f32 to vector<8x128xf32>
    %32 = arith.addf %31, %30 : vector<8x128xf32>
    %33 = arith.divf %31, %32 : vector<8x128xf32>
    %34 = vector.extract_strided_slice %14 {offsets = [0, 256], sizes = [8, 128], strides = [1, 1]} : vector<8x384xf32> to vector<8x128xf32>
    %35 = vector.extract_strided_slice %17 {offsets = [0, 256], sizes = [8, 128], strides = [1, 1]} : vector<8x384xf32> to vector<8x128xf32>
    %36 = arith.mulf %25, %35 : vector<8x128xf32>
    %37 = arith.addf %34, %36 : vector<8x128xf32>
    %38 = math.tanh %37 : vector<8x128xf32>
    %cst_19 = arith.constant 1.000000e+00 : f32
    %39 = vector.broadcast %cst_19 : f32 to vector<8x128xf32>
    %40 = arith.subf %39, %33 : vector<8x128xf32>
    %41 = arith.mulf %40, %38 : vector<8x128xf32>
    %42 = arith.mulf %33, %11 : vector<8x128xf32>
    %43 = arith.addf %41, %42 : vector<8x128xf32>
    %44 = arith.index_cast %c0_i32 : i32 to index
    %c0_20 = arith.constant 0 : index
    %c0_21 = arith.constant 0 : index
    %45 = vector.load %arg2[%44, %c0_20, %c0_21] : memref<10x8x128xf32, #tpu.memory_space<vmem>>, vector<1x8x128xf32>
    %46 = vector.shape_cast %45 : vector<1x8x128xf32> to vector<8x128xf32>
    %47 = arith.mulf %46, %43 : vector<8x128xf32>
    %cst_22 = arith.constant 1.000000e+00 : f32
    %48 = vector.broadcast %cst_22 : f32 to vector<8x128xf32>
    %49 = arith.subf %48, %46 : vector<8x128xf32>
    %50 = arith.mulf %49, %11 : vector<8x128xf32>
    %51 = arith.addf %47, %50 : vector<8x128xf32>
    %52 = arith.index_cast %c0_i32 : i32 to index
    %c0_23 = arith.constant 0 : index
    %c0_24 = arith.constant 0 : index
    %53 = vector.load %arg15[%52, %c0_23, %c0_24] : memref<10x8x128xf32, #tpu.memory_space<vmem>>, vector<1x8x128xf32>
    %54 = vector.shape_cast %53 : vector<1x8x128xf32> to vector<8x128xf32>
    %55 = vector.shape_cast %51 : vector<8x128xf32> to vector<1x8x128xf32>
    tpu.vector_store %arg15[%52, %c0_23, %c0_24], %55 {strides = array<i32>} : memref<10x8x128xf32, #tpu.memory_space<vmem>>, vector<1x8x128xf32>,
    %c9_i32 = arith.constant 9 : i32
    %56 = arith.subi %c9_i32, %c0_i32 : i32
    %57 = arith.index_cast %56 : i32 to index
    %c0_25 = arith.constant 0 : index
    %c0_26 = arith.constant 0 : index
    %58 = vector.load %arg16[%57, %c0_25, %c0_26] : memref<10x8x128xf32, #tpu.memory_space<vmem>>, vector<1x8x128xf32>
    %59 = vector.shape_cast %58 : vector<1x8x128xf32> to vector<8x128xf32>
    %60 = vector.shape_cast %51 : vector<8x128xf32> to vector<1x8x128xf32>
    tpu.vector_store %arg16[%57, %c0_25, %c0_26], %60 {strides = array<i32>} : memref<10x8x128xf32, #tpu.memory_space<vmem>>, vector<1x8x128xf32>,
    %c1_i32 = arith.constant 1 : i32
    %61 = arith.index_cast %c1_i32 : i32 to index
    %c0_27 = arith.constant 0 : index
    %c0_28 = arith.constant 0 : index
    %62 = vector.load %arg14[%61, %c0_27, %c0_28] : memref<10x8x384xf32, #tpu.memory_space<vmem>>, vector<1x8x384xf32>
    %63 = vector.shape_cast %62 : vector<1x8x384xf32> to vector<8x384xf32>
    %cst_29 = arith.constant dense<0.000000e+00> : vector<8x384xf32>
    %64 = tpu.matmul %51, %9, %cst_29 {dimension_numbers = #tpu.dot_dimension_numbers<[1], [0], [0], [1], [0, 0, 1, 1], [], []>} : vector<8x128xf32>, vector<128x384xf32>, vector<8x384xf32> -> vector<8x384xf32>
    %65 = vector.broadcast %10 : vector<1x384xf32> to vector<8x384xf32>
    %66 = arith.addf %64, %65 : vector<8x384xf32>
    %67 = vector.extract_strided_slice %63 {offsets = [0, 0], sizes = [8, 128], strides = [1, 1]} : vector<8x384xf32> to vector<8x128xf32>
    %68 = vector.extract_strided_slice %66 {offsets = [0, 0], sizes = [8, 128], strides = [1, 1]} : vector<8x384xf32> to vector<8x128xf32>
    %69 = arith.addf %67, %68 : vector<8x128xf32>
    %70 = arith.negf %69 : vector<8x128xf32>
    %71 = math.exp %70 : vector<8x128xf32>
    %cst_30 = arith.constant 1.000000e+00 : f32
    %72 = vector.broadcast %cst_30 : f32 to vector<8x128xf32>
    %73 = arith.addf %72, %71 : vector<8x128xf32>
    %74 = arith.divf %72, %73 : vector<8x128xf32>
    %75 = vector.extract_strided_slice %63 {offsets = [0, 128], sizes = [8, 128], strides = [1, 1]} : vector<8x384xf32> to vector<8x128xf32>
    %76 = vector.extract_strided_slice %66 {offsets = [0, 128], sizes = [8, 128], strides = [1, 1]} : vector<8x384xf32> to vector<8x128xf32>
    %77 = arith.addf %75, %76 : vector<8x128xf32>
    %78 = arith.negf %77 : vector<8x128xf32>
    %79 = math.exp %78 : vector<8x128xf32>
    %cst_31 = arith.constant 1.000000e+00 : f32
    %80 = vector.broadcast %cst_31 : f32 to vector<8x128xf32>
    %81 = arith.addf %80, %79 : vector<8x128xf32>
    %82 = arith.divf %80, %81 : vector<8x128xf32>
    %83 = vector.extract_strided_slice %63 {offsets = [0, 256], sizes = [8, 128], strides = [1, 1]} : vector<8x384xf32> to vector<8x128xf32>
    %84 = vector.extract_strided_slice %66 {offsets = [0, 256], sizes = [8, 128], strides = [1, 1]} : vector<8x384xf32> to vector<8x128xf32>
    %85 = arith.mulf %74, %84 : vector<8x128xf32>
    %86 = arith.addf %83, %85 : vector<8x128xf32>
    %87 = math.tanh %86 : vector<8x128xf32>
    %cst_32 = arith.constant 1.000000e+00 : f32
    %88 = vector.broadcast %cst_32 : f32 to vector<8x128xf32>
    %89 = arith.subf %88, %82 : vector<8x128xf32>
    %90 = arith.mulf %89, %87 : vector<8x128xf32>
    %91 = arith.mulf %82, %51 : vector<8x128xf32>
    %92 = arith.addf %90, %91 : vector<8x128xf32>
    %93 = arith.index_cast %c1_i32 : i32 to index
    %c0_33 = arith.constant 0 : index
    %c0_34 = arith.constant 0 : index
    %94 = vector.load %arg2[%93, %c0_33, %c0_34] : memref<10x8x128xf32, #tpu.memory_space<vmem>>, vector<1x8x128xf32>
    %95 = vector.shape_cast %94 : vector<1x8x128xf32> to vector<8x128xf32>
    %96 = arith.mulf %95, %92 : vector<8x128xf32>
    %cst_35 = arith.constant 1.000000e+00 : f32
    %97 = vector.broadcast %cst_35 : f32 to vector<8x128xf32>
    %98 = arith.subf %97, %95 : vector<8x128xf32>
    %99 = arith.mulf %98, %51 : vector<8x128xf32>
    %100 = arith.addf %96, %99 : vector<8x128xf32>
    %101 = arith.index_cast %c1_i32 : i32 to index
    %c0_36 = arith.constant 0 : index
    %c0_37 = arith.constant 0 : index
    %102 = vector.load %arg15[%101, %c0_36, %c0_37] : memref<10x8x128xf32, #tpu.memory_space<vmem>>, vector<1x8x128xf32>
    %103 = vector.shape_cast %102 : vector<1x8x128xf32> to vector<8x128xf32>
    %104 = vector.shape_cast %100 : vector<8x128xf32> to vector<1x8x128xf32>
    tpu.vector_store %arg15[%101, %c0_36, %c0_37], %104 {strides = array<i32>} : memref<10x8x128xf32, #tpu.memory_space<vmem>>, vector<1x8x128xf32>,
    %c9_i32_38 = arith.constant 9 : i32
    %105 = arith.subi %c9_i32_38, %c1_i32 : i32
    %106 = arith.index_cast %105 : i32 to index
    %c0_39 = arith.constant 0 : index
    %c0_40 = arith.constant 0 : index
    %107 = vector.load %arg16[%106, %c0_39, %c0_40] : memref<10x8x128xf32, #tpu.memory_space<vmem>>, vector<1x8x128xf32>
    %108 = vector.shape_cast %107 : vector<1x8x128xf32> to vector<8x128xf32>
    %109 = vector.shape_cast %100 : vector<8x128xf32> to vector<1x8x128xf32>
    tpu.vector_store %arg16[%106, %c0_39, %c0_40], %109 {strides = array<i32>} : memref<10x8x128xf32, #tpu.memory_space<vmem>>, vector<1x8x128xf32>,
    %c2_i32 = arith.constant 2 : i32
    %110 = arith.index_cast %c2_i32 : i32 to index
    %c0_41 = arith.constant 0 : index
    %c0_42 = arith.constant 0 : index
    %111 = vector.load %arg14[%110, %c0_41, %c0_42] : memref<10x8x384xf32, #tpu.memory_space<vmem>>, vector<1x8x384xf32>
    %112 = vector.shape_cast %111 : vector<1x8x384xf32> to vector<8x384xf32>
    %cst_43 = arith.constant dense<0.000000e+00> : vector<8x384xf32>
    %113 = tpu.matmul %100, %9, %cst_43 {dimension_numbers = #tpu.dot_dimension_numbers<[1], [0], [0], [1], [0, 0, 1, 1], [], []>} : vector<8x128xf32>, vector<128x384xf32>, vector<8x384xf32> -> vector<8x384xf32>
    %114 = vector.broadcast %10 : vector<1x384xf32> to vector<8x384xf32>
    %115 = arith.addf %113, %114 : vector<8x384xf32>
    %116 = vector.extract_strided_slice %112 {offsets = [0, 0], sizes = [8, 128], strides = [1, 1]} : vector<8x384xf32> to vector<8x128xf32>
    %117 = vector.extract_strided_slice %115 {offsets = [0, 0], sizes = [8, 128], strides = [1, 1]} : vector<8x384xf32> to vector<8x128xf32>
    %118 = arith.addf %116, %117 : vector<8x128xf32>
    %119 = arith.negf %118 : vector<8x128xf32>
    %120 = math.exp %119 : vector<8x128xf32>
    %cst_44 = arith.constant 1.000000e+00 : f32
    %121 = vector.broadcast %cst_44 : f32 to vector<8x128xf32>
    %122 = arith.addf %121, %120 : vector<8x128xf32>
    %123 = arith.divf %121, %122 : vector<8x128xf32>
    %124 = vector.extract_strided_slice %112 {offsets = [0, 128], sizes = [8, 128], strides = [1, 1]} : vector<8x384xf32> to vector<8x128xf32>
    %125 = vector.extract_strided_slice %115 {offsets = [0, 128], sizes = [8, 128], strides = [1, 1]} : vector<8x384xf32> to vector<8x128xf32>
    %126 = arith.addf %124, %125 : vector<8x128xf32>
    %127 = arith.negf %126 : vector<8x128xf32>
    %128 = math.exp %127 : vector<8x128xf32>
    %cst_45 = arith.constant 1.000000e+00 : f32
    %129 = vector.broadcast %cst_45 : f32 to vector<8x128xf32>
    %130 = arith.addf %129, %128 : vector<8x128xf32>
    %131 = arith.divf %129, %130 : vector<8x128xf32>
    %132 = vector.extract_strided_slice %112 {offsets = [0, 256], sizes = [8, 128], strides = [1, 1]} : vector<8x384xf32> to vector<8x128xf32>
    %133 = vector.extract_strided_slice %115 {offsets = [0, 256], sizes = [8, 128], strides = [1, 1]} : vector<8x384xf32> to vector<8x128xf32>
    %134 = arith.mulf %123, %133 : vector<8x128xf32>
    %135 = arith.addf %132, %134 : vector<8x128xf32>
    %136 = math.tanh %135 : vector<8x128xf32>
    %cst_46 = arith.constant 1.000000e+00 : f32
    %137 = vector.broadcast %cst_46 : f32 to vector<8x128xf32>
    %138 = arith.subf %137, %131 : vector<8x128xf32>
    %139 = arith.mulf %138, %136 : vector<8x128xf32>
    %140 = arith.mulf %131, %100 : vector<8x128xf32>
    %141 = arith.addf %139, %140 : vector<8x128xf32>
    %142 = arith.index_cast %c2_i32 : i32 to index
    %c0_47 = arith.constant 0 : index
    %c0_48 = arith.constant 0 : index
    %143 = vector.load %arg2[%142, %c0_47, %c0_48] : memref<10x8x128xf32, #tpu.memory_space<vmem>>, vector<1x8x128xf32>
    %144 = vector.shape_cast %143 : vector<1x8x128xf32> to vector<8x128xf32>
    %145 = arith.mulf %144, %141 : vector<8x128xf32>
    %cst_49 = arith.constant 1.000000e+00 : f32
    %146 = vector.broadcast %cst_49 : f32 to vector<8x128xf32>
    %147 = arith.subf %146, %144 : vector<8x128xf32>
    %148 = arith.mulf %147, %100 : vector<8x128xf32>
    %149 = arith.addf %145, %148 : vector<8x128xf32>
    %150 = arith.index_cast %c2_i32 : i32 to index
    %c0_50 = arith.constant 0 : index
    %c0_51 = arith.constant 0 : index
    %151 = vector.load %arg15[%150, %c0_50, %c0_51] : memref<10x8x128xf32, #tpu.memory_space<vmem>>, vector<1x8x128xf32>
    %152 = vector.shape_cast %151 : vector<1x8x128xf32> to vector<8x128xf32>
    %153 = vector.shape_cast %149 : vector<8x128xf32> to vector<1x8x128xf32>
    tpu.vector_store %arg15[%150, %c0_50, %c0_51], %153 {strides = array<i32>} : memref<10x8x128xf32, #tpu.memory_space<vmem>>, vector<1x8x128xf32>,
    %c9_i32_52 = arith.constant 9 : i32
    %154 = arith.subi %c9_i32_52, %c2_i32 : i32
    %155 = arith.index_cast %154 : i32 to index
    %c0_53 = arith.constant 0 : index
    %c0_54 = arith.constant 0 : index
    %156 = vector.load %arg16[%155, %c0_53, %c0_54] : memref<10x8x128xf32, #tpu.memory_space<vmem>>, vector<1x8x128xf32>
    %157 = vector.shape_cast %156 : vector<1x8x128xf32> to vector<8x128xf32>
    %158 = vector.shape_cast %149 : vector<8x128xf32> to vector<1x8x128xf32>
    tpu.vector_store %arg16[%155, %c0_53, %c0_54], %158 {strides = array<i32>} : memref<10x8x128xf32, #tpu.memory_space<vmem>>, vector<1x8x128xf32>,
    %c3_i32 = arith.constant 3 : i32
    %159 = arith.index_cast %c3_i32 : i32 to index
    %c0_55 = arith.constant 0 : index
    %c0_56 = arith.constant 0 : index
    %160 = vector.load %arg14[%159, %c0_55, %c0_56] : memref<10x8x384xf32, #tpu.memory_space<vmem>>, vector<1x8x384xf32>
    %161 = vector.shape_cast %160 : vector<1x8x384xf32> to vector<8x384xf32>
    %cst_57 = arith.constant dense<0.000000e+00> : vector<8x384xf32>
    %162 = tpu.matmul %149, %9, %cst_57 {dimension_numbers = #tpu.dot_dimension_numbers<[1], [0], [0], [1], [0, 0, 1, 1], [], []>} : vector<8x128xf32>, vector<128x384xf32>, vector<8x384xf32> -> vector<8x384xf32>
    %163 = vector.broadcast %10 : vector<1x384xf32> to vector<8x384xf32>
    %164 = arith.addf %162, %163 : vector<8x384xf32>
    %165 = vector.extract_strided_slice %161 {offsets = [0, 0], sizes = [8, 128], strides = [1, 1]} : vector<8x384xf32> to vector<8x128xf32>
    %166 = vector.extract_strided_slice %164 {offsets = [0, 0], sizes = [8, 128], strides = [1, 1]} : vector<8x384xf32> to vector<8x128xf32>
    %167 = arith.addf %165, %166 : vector<8x128xf32>
    %168 = arith.negf %167 : vector<8x128xf32>
    %169 = math.exp %168 : vector<8x128xf32>
    %cst_58 = arith.constant 1.000000e+00 : f32
    %170 = vector.broadcast %cst_58 : f32 to vector<8x128xf32>
    %171 = arith.addf %170, %169 : vector<8x128xf32>
    %172 = arith.divf %170, %171 : vector<8x128xf32>
    %173 = vector.extract_strided_slice %161 {offsets = [0, 128], sizes = [8, 128], strides = [1, 1]} : vector<8x384xf32> to vector<8x128xf32>
    %174 = vector.extract_strided_slice %164 {offsets = [0, 128], sizes = [8, 128], strides = [1, 1]} : vector<8x384xf32> to vector<8x128xf32>
    %175 = arith.addf %173, %174 : vector<8x128xf32>
    %176 = arith.negf %175 : vector<8x128xf32>
    %177 = math.exp %176 : vector<8x128xf32>
    %cst_59 = arith.constant 1.000000e+00 : f32
    %178 = vector.broadcast %cst_59 : f32 to vector<8x128xf32>
    %179 = arith.addf %178, %177 : vector<8x128xf32>
    %180 = arith.divf %178, %179 : vector<8x128xf32>
    %181 = vector.extract_strided_slice %161 {offsets = [0, 256], sizes = [8, 128], strides = [1, 1]} : vector<8x384xf32> to vector<8x128xf32>
    %182 = vector.extract_strided_slice %164 {offsets = [0, 256], sizes = [8, 128], strides = [1, 1]} : vector<8x384xf32> to vector<8x128xf32>
    %183 = arith.mulf %172, %182 : vector<8x128xf32>
    %184 = arith.addf %181, %183 : vector<8x128xf32>
    %185 = math.tanh %184 : vector<8x128xf32>
    %cst_60 = arith.constant 1.000000e+00 : f32
    %186 = vector.broadcast %cst_60 : f32 to vector<8x128xf32>
    %187 = arith.subf %186, %180 : vector<8x128xf32>
    %188 = arith.mulf %187, %185 : vector<8x128xf32>
    %189 = arith.mulf %180, %149 : vector<8x128xf32>
    %190 = arith.addf %188, %189 : vector<8x128xf32>
    %191 = arith.index_cast %c3_i32 : i32 to index
    %c0_61 = arith.constant 0 : index
    %c0_62 = arith.constant 0 : index
    %192 = vector.load %arg2[%191, %c0_61, %c0_62] : memref<10x8x128xf32, #tpu.memory_space<vmem>>, vector<1x8x128xf32>
    %193 = vector.shape_cast %192 : vector<1x8x128xf32> to vector<8x128xf32>
    %194 = arith.mulf %193, %190 : vector<8x128xf32>
    %cst_63 = arith.constant 1.000000e+00 : f32
    %195 = vector.broadcast %cst_63 : f32 to vector<8x128xf32>
    %196 = arith.subf %195, %193 : vector<8x128xf32>
    %197 = arith.mulf %196, %149 : vector<8x128xf32>
    %198 = arith.addf %194, %197 : vector<8x128xf32>
    %199 = arith.index_cast %c3_i32 : i32 to index
    %c0_64 = arith.constant 0 : index
    %c0_65 = arith.constant 0 : index
    %200 = vector.load %arg15[%199, %c0_64, %c0_65] : memref<10x8x128xf32, #tpu.memory_space<vmem>>, vector<1x8x128xf32>
    %201 = vector.shape_cast %200 : vector<1x8x128xf32> to vector<8x128xf32>
    %202 = vector.shape_cast %198 : vector<8x128xf32> to vector<1x8x128xf32>
    tpu.vector_store %arg15[%199, %c0_64, %c0_65], %202 {strides = array<i32>} : memref<10x8x128xf32, #tpu.memory_space<vmem>>, vector<1x8x128xf32>,
    %c9_i32_66 = arith.constant 9 : i32
    %203 = arith.subi %c9_i32_66, %c3_i32 : i32
    %204 = arith.index_cast %203 : i32 to index
    %c0_67 = arith.constant 0 : index
    %c0_68 = arith.constant 0 : index
    %205 = vector.load %arg16[%204, %c0_67, %c0_68] : memref<10x8x128xf32, #tpu.memory_space<vmem>>, vector<1x8x128xf32>
    %206 = vector.shape_cast %205 : vector<1x8x128xf32> to vector<8x128xf32>
    %207 = vector.shape_cast %198 : vector<8x128xf32> to vector<1x8x128xf32>
    tpu.vector_store %arg16[%204, %c0_67, %c0_68], %207 {strides = array<i32>} : memref<10x8x128xf32, #tpu.memory_space<vmem>>, vector<1x8x128xf32>,
    %c4_i32 = arith.constant 4 : i32
    %208 = arith.index_cast %c4_i32 : i32 to index
    %c0_69 = arith.constant 0 : index
    %c0_70 = arith.constant 0 : index
    %209 = vector.load %arg14[%208, %c0_69, %c0_70] : memref<10x8x384xf32, #tpu.memory_space<vmem>>, vector<1x8x384xf32>
    %210 = vector.shape_cast %209 : vector<1x8x384xf32> to vector<8x384xf32>
    %cst_71 = arith.constant dense<0.000000e+00> : vector<8x384xf32>
    %211 = tpu.matmul %198, %9, %cst_71 {dimension_numbers = #tpu.dot_dimension_numbers<[1], [0], [0], [1], [0, 0, 1, 1], [], []>} : vector<8x128xf32>, vector<128x384xf32>, vector<8x384xf32> -> vector<8x384xf32>
    %212 = vector.broadcast %10 : vector<1x384xf32> to vector<8x384xf32>
    %213 = arith.addf %211, %212 : vector<8x384xf32>
    %214 = vector.extract_strided_slice %210 {offsets = [0, 0], sizes = [8, 128], strides = [1, 1]} : vector<8x384xf32> to vector<8x128xf32>
    %215 = vector.extract_strided_slice %213 {offsets = [0, 0], sizes = [8, 128], strides = [1, 1]} : vector<8x384xf32> to vector<8x128xf32>
    %216 = arith.addf %214, %215 : vector<8x128xf32>
    %217 = arith.negf %216 : vector<8x128xf32>
    %218 = math.exp %217 : vector<8x128xf32>
    %cst_72 = arith.constant 1.000000e+00 : f32
    %219 = vector.broadcast %cst_72 : f32 to vector<8x128xf32>
    %220 = arith.addf %219, %218 : vector<8x128xf32>
    %221 = arith.divf %219, %220 : vector<8x128xf32>
    %222 = vector.extract_strided_slice %210 {offsets = [0, 128], sizes = [8, 128], strides = [1, 1]} : vector<8x384xf32> to vector<8x128xf32>
    %223 = vector.extract_strided_slice %213 {offsets = [0, 128], sizes = [8, 128], strides = [1, 1]} : vector<8x384xf32> to vector<8x128xf32>
    %224 = arith.addf %222, %223 : vector<8x128xf32>
    %225 = arith.negf %224 : vector<8x128xf32>
    %226 = math.exp %225 : vector<8x128xf32>
    %cst_73 = arith.constant 1.000000e+00 : f32
    %227 = vector.broadcast %cst_73 : f32 to vector<8x128xf32>
    %228 = arith.addf %227, %226 : vector<8x128xf32>
    %229 = arith.divf %227, %228 : vector<8x128xf32>
    %230 = vector.extract_strided_slice %210 {offsets = [0, 256], sizes = [8, 128], strides = [1, 1]} : vector<8x384xf32> to vector<8x128xf32>
    %231 = vector.extract_strided_slice %213 {offsets = [0, 256], sizes = [8, 128], strides = [1, 1]} : vector<8x384xf32> to vector<8x128xf32>
    %232 = arith.mulf %221, %231 : vector<8x128xf32>
    %233 = arith.addf %230, %232 : vector<8x128xf32>
    %234 = math.tanh %233 : vector<8x128xf32>
    %cst_74 = arith.constant 1.000000e+00 : f32
    %235 = vector.broadcast %cst_74 : f32 to vector<8x128xf32>
    %236 = arith.subf %235, %229 : vector<8x128xf32>
    %237 = arith.mulf %236, %234 : vector<8x128xf32>
    %238 = arith.mulf %229, %198 : vector<8x128xf32>
    %239 = arith.addf %237, %238 : vector<8x128xf32>
    %240 = arith.index_cast %c4_i32 : i32 to index
    %c0_75 = arith.constant 0 : index
    %c0_76 = arith.constant 0 : index
    %241 = vector.load %arg2[%240, %c0_75, %c0_76] : memref<10x8x128xf32, #tpu.memory_space<vmem>>, vector<1x8x128xf32>
    %242 = vector.shape_cast %241 : vector<1x8x128xf32> to vector<8x128xf32>
    %243 = arith.mulf %242, %239 : vector<8x128xf32>
    %cst_77 = arith.constant 1.000000e+00 : f32
    %244 = vector.broadcast %cst_77 : f32 to vector<8x128xf32>
    %245 = arith.subf %244, %242 : vector<8x128xf32>
    %246 = arith.mulf %245, %198 : vector<8x128xf32>
    %247 = arith.addf %243, %246 : vector<8x128xf32>
    %248 = arith.index_cast %c4_i32 : i32 to index
    %c0_78 = arith.constant 0 : index
    %c0_79 = arith.constant 0 : index
    %249 = vector.load %arg15[%248, %c0_78, %c0_79] : memref<10x8x128xf32, #tpu.memory_space<vmem>>, vector<1x8x128xf32>
    %250 = vector.shape_cast %249 : vector<1x8x128xf32> to vector<8x128xf32>
    %251 = vector.shape_cast %247 : vector<8x128xf32> to vector<1x8x128xf32>
    tpu.vector_store %arg15[%248, %c0_78, %c0_79], %251 {strides = array<i32>} : memref<10x8x128xf32, #tpu.memory_space<vmem>>, vector<1x8x128xf32>,
    %c9_i32_80 = arith.constant 9 : i32
    %252 = arith.subi %c9_i32_80, %c4_i32 : i32
    %253 = arith.index_cast %252 : i32 to index
    %c0_81 = arith.constant 0 : index
    %c0_82 = arith.constant 0 : index
    %254 = vector.load %arg16[%253, %c0_81, %c0_82] : memref<10x8x128xf32, #tpu.memory_space<vmem>>, vector<1x8x128xf32>
    %255 = vector.shape_cast %254 : vector<1x8x128xf32> to vector<8x128xf32>
    %256 = vector.shape_cast %247 : vector<8x128xf32> to vector<1x8x128xf32>
    tpu.vector_store %arg16[%253, %c0_81, %c0_82], %256 {strides = array<i32>} : memref<10x8x128xf32, #tpu.memory_space<vmem>>, vector<1x8x128xf32>,
    %c5_i32 = arith.constant 5 : i32
    %257 = arith.index_cast %c5_i32 : i32 to index
    %c0_83 = arith.constant 0 : index
    %c0_84 = arith.constant 0 : index
    %258 = vector.load %arg14[%257, %c0_83, %c0_84] : memref<10x8x384xf32, #tpu.memory_space<vmem>>, vector<1x8x384xf32>
    %259 = vector.shape_cast %258 : vector<1x8x384xf32> to vector<8x384xf32>
    %cst_85 = arith.constant dense<0.000000e+00> : vector<8x384xf32>
    %260 = tpu.matmul %247, %9, %cst_85 {dimension_numbers = #tpu.dot_dimension_numbers<[1], [0], [0], [1], [0, 0, 1, 1], [], []>} : vector<8x128xf32>, vector<128x384xf32>, vector<8x384xf32> -> vector<8x384xf32>
    %261 = vector.broadcast %10 : vector<1x384xf32> to vector<8x384xf32>
    %262 = arith.addf %260, %261 : vector<8x384xf32>
    %263 = vector.extract_strided_slice %259 {offsets = [0, 0], sizes = [8, 128], strides = [1, 1]} : vector<8x384xf32> to vector<8x128xf32>
    %264 = vector.extract_strided_slice %262 {offsets = [0, 0], sizes = [8, 128], strides = [1, 1]} : vector<8x384xf32> to vector<8x128xf32>
    %265 = arith.addf %263, %264 : vector<8x128xf32>
    %266 = arith.negf %265 : vector<8x128xf32>
    %267 = math.exp %266 : vector<8x128xf32>
    %cst_86 = arith.constant 1.000000e+00 : f32
    %268 = vector.broadcast %cst_86 : f32 to vector<8x128xf32>
    %269 = arith.addf %268, %267 : vector<8x128xf32>
    %270 = arith.divf %268, %269 : vector<8x128xf32>
    %271 = vector.extract_strided_slice %259 {offsets = [0, 128], sizes = [8, 128], strides = [1, 1]} : vector<8x384xf32> to vector<8x128xf32>
    %272 = vector.extract_strided_slice %262 {offsets = [0, 128], sizes = [8, 128], strides = [1, 1]} : vector<8x384xf32> to vector<8x128xf32>
    %273 = arith.addf %271, %272 : vector<8x128xf32>
    %274 = arith.negf %273 : vector<8x128xf32>
    %275 = math.exp %274 : vector<8x128xf32>
    %cst_87 = arith.constant 1.000000e+00 : f32
    %276 = vector.broadcast %cst_87 : f32 to vector<8x128xf32>
    %277 = arith.addf %276, %275 : vector<8x128xf32>
    %278 = arith.divf %276, %277 : vector<8x128xf32>
    %279 = vector.extract_strided_slice %259 {offsets = [0, 256], sizes = [8, 128], strides = [1, 1]} : vector<8x384xf32> to vector<8x128xf32>
    %280 = vector.extract_strided_slice %262 {offsets = [0, 256], sizes = [8, 128], strides = [1, 1]} : vector<8x384xf32> to vector<8x128xf32>
    %281 = arith.mulf %270, %280 : vector<8x128xf32>
    %282 = arith.addf %279, %281 : vector<8x128xf32>
    %283 = math.tanh %282 : vector<8x128xf32>
    %cst_88 = arith.constant 1.000000e+00 : f32
    %284 = vector.broadcast %cst_88 : f32 to vector<8x128xf32>
    %285 = arith.subf %284, %278 : vector<8x128xf32>
    %286 = arith.mulf %285, %283 : vector<8x128xf32>
    %287 = arith.mulf %278, %247 : vector<8x128xf32>
    %288 = arith.addf %286, %287 : vector<8x128xf32>
    %289 = arith.index_cast %c5_i32 : i32 to index
    %c0_89 = arith.constant 0 : index
    %c0_90 = arith.constant 0 : index
    %290 = vector.load %arg2[%289, %c0_89, %c0_90] : memref<10x8x128xf32, #tpu.memory_space<vmem>>, vector<1x8x128xf32>
    %291 = vector.shape_cast %290 : vector<1x8x128xf32> to vector<8x128xf32>
    %292 = arith.mulf %291, %288 : vector<8x128xf32>
    %cst_91 = arith.constant 1.000000e+00 : f32
    %293 = vector.broadcast %cst_91 : f32 to vector<8x128xf32>
    %294 = arith.subf %293, %291 : vector<8x128xf32>
    %295 = arith.mulf %294, %247 : vector<8x128xf32>
    %296 = arith.addf %292, %295 : vector<8x128xf32>
    %297 = arith.index_cast %c5_i32 : i32 to index
    %c0_92 = arith.constant 0 : index
    %c0_93 = arith.constant 0 : index
    %298 = vector.load %arg15[%297, %c0_92, %c0_93] : memref<10x8x128xf32, #tpu.memory_space<vmem>>, vector<1x8x128xf32>
    %299 = vector.shape_cast %298 : vector<1x8x128xf32> to vector<8x128xf32>
    %300 = vector.shape_cast %296 : vector<8x128xf32> to vector<1x8x128xf32>
    tpu.vector_store %arg15[%297, %c0_92, %c0_93], %300 {strides = array<i32>} : memref<10x8x128xf32, #tpu.memory_space<vmem>>, vector<1x8x128xf32>,
    %c9_i32_94 = arith.constant 9 : i32
    %301 = arith.subi %c9_i32_94, %c5_i32 : i32
    %302 = arith.index_cast %301 : i32 to index
    %c0_95 = arith.constant 0 : index
    %c0_96 = arith.constant 0 : index
    %303 = vector.load %arg16[%302, %c0_95, %c0_96] : memref<10x8x128xf32, #tpu.memory_space<vmem>>, vector<1x8x128xf32>
    %304 = vector.shape_cast %303 : vector<1x8x128xf32> to vector<8x128xf32>
    %305 = vector.shape_cast %296 : vector<8x128xf32> to vector<1x8x128xf32>
    tpu.vector_store %arg16[%302, %c0_95, %c0_96], %305 {strides = array<i32>} : memref<10x8x128xf32, #tpu.memory_space<vmem>>, vector<1x8x128xf32>,
    %c6_i32 = arith.constant 6 : i32
    %306 = arith.index_cast %c6_i32 : i32 to index
    %c0_97 = arith.constant 0 : index
    %c0_98 = arith.constant 0 : index
    %307 = vector.load %arg14[%306, %c0_97, %c0_98] : memref<10x8x384xf32, #tpu.memory_space<vmem>>, vector<1x8x384xf32>
    %308 = vector.shape_cast %307 : vector<1x8x384xf32> to vector<8x384xf32>
    %cst_99 = arith.constant dense<0.000000e+00> : vector<8x384xf32>
    %309 = tpu.matmul %296, %9, %cst_99 {dimension_numbers = #tpu.dot_dimension_numbers<[1], [0], [0], [1], [0, 0, 1, 1], [], []>} : vector<8x128xf32>, vector<128x384xf32>, vector<8x384xf32> -> vector<8x384xf32>
    %310 = vector.broadcast %10 : vector<1x384xf32> to vector<8x384xf32>
    %311 = arith.addf %309, %310 : vector<8x384xf32>
    %312 = vector.extract_strided_slice %308 {offsets = [0, 0], sizes = [8, 128], strides = [1, 1]} : vector<8x384xf32> to vector<8x128xf32>
    %313 = vector.extract_strided_slice %311 {offsets = [0, 0], sizes = [8, 128], strides = [1, 1]} : vector<8x384xf32> to vector<8x128xf32>
    %314 = arith.addf %312, %313 : vector<8x128xf32>
    %315 = arith.negf %314 : vector<8x128xf32>
    %316 = math.exp %315 : vector<8x128xf32>
    %cst_100 = arith.constant 1.000000e+00 : f32
    %317 = vector.broadcast %cst_100 : f32 to vector<8x128xf32>
    %318 = arith.addf %317, %316 : vector<8x128xf32>
    %319 = arith.divf %317, %318 : vector<8x128xf32>
    %320 = vector.extract_strided_slice %308 {offsets = [0, 128], sizes = [8, 128], strides = [1, 1]} : vector<8x384xf32> to vector<8x128xf32>
    %321 = vector.extract_strided_slice %311 {offsets = [0, 128], sizes = [8, 128], strides = [1, 1]} : vector<8x384xf32> to vector<8x128xf32>
    %322 = arith.addf %320, %321 : vector<8x128xf32>
    %323 = arith.negf %322 : vector<8x128xf32>
    %324 = math.exp %323 : vector<8x128xf32>
    %cst_101 = arith.constant 1.000000e+00 : f32
    %325 = vector.broadcast %cst_101 : f32 to vector<8x128xf32>
    %326 = arith.addf %325, %324 : vector<8x128xf32>
    %327 = arith.divf %325, %326 : vector<8x128xf32>
    %328 = vector.extract_strided_slice %308 {offsets = [0, 256], sizes = [8, 128], strides = [1, 1]} : vector<8x384xf32> to vector<8x128xf32>
    %329 = vector.extract_strided_slice %311 {offsets = [0, 256], sizes = [8, 128], strides = [1, 1]} : vector<8x384xf32> to vector<8x128xf32>
    %330 = arith.mulf %319, %329 : vector<8x128xf32>
    %331 = arith.addf %328, %330 : vector<8x128xf32>
    %332 = math.tanh %331 : vector<8x128xf32>
    %cst_102 = arith.constant 1.000000e+00 : f32
    %333 = vector.broadcast %cst_102 : f32 to vector<8x128xf32>
    %334 = arith.subf %333, %327 : vector<8x128xf32>
    %335 = arith.mulf %334, %332 : vector<8x128xf32>
    %336 = arith.mulf %327, %296 : vector<8x128xf32>
    %337 = arith.addf %335, %336 : vector<8x128xf32>
    %338 = arith.index_cast %c6_i32 : i32 to index
    %c0_103 = arith.constant 0 : index
    %c0_104 = arith.constant 0 : index
    %339 = vector.load %arg2[%338, %c0_103, %c0_104] : memref<10x8x128xf32, #tpu.memory_space<vmem>>, vector<1x8x128xf32>
    %340 = vector.shape_cast %339 : vector<1x8x128xf32> to vector<8x128xf32>
    %341 = arith.mulf %340, %337 : vector<8x128xf32>
    %cst_105 = arith.constant 1.000000e+00 : f32
    %342 = vector.broadcast %cst_105 : f32 to vector<8x128xf32>
    %343 = arith.subf %342, %340 : vector<8x128xf32>
    %344 = arith.mulf %343, %296 : vector<8x128xf32>
    %345 = arith.addf %341, %344 : vector<8x128xf32>
    %346 = arith.index_cast %c6_i32 : i32 to index
    %c0_106 = arith.constant 0 : index
    %c0_107 = arith.constant 0 : index
    %347 = vector.load %arg15[%346, %c0_106, %c0_107] : memref<10x8x128xf32, #tpu.memory_space<vmem>>, vector<1x8x128xf32>
    %348 = vector.shape_cast %347 : vector<1x8x128xf32> to vector<8x128xf32>
    %349 = vector.shape_cast %345 : vector<8x128xf32> to vector<1x8x128xf32>
    tpu.vector_store %arg15[%346, %c0_106, %c0_107], %349 {strides = array<i32>} : memref<10x8x128xf32, #tpu.memory_space<vmem>>, vector<1x8x128xf32>,
    %c9_i32_108 = arith.constant 9 : i32
    %350 = arith.subi %c9_i32_108, %c6_i32 : i32
    %351 = arith.index_cast %350 : i32 to index
    %c0_109 = arith.constant 0 : index
    %c0_110 = arith.constant 0 : index
    %352 = vector.load %arg16[%351, %c0_109, %c0_110] : memref<10x8x128xf32, #tpu.memory_space<vmem>>, vector<1x8x128xf32>
    %353 = vector.shape_cast %352 : vector<1x8x128xf32> to vector<8x128xf32>
    %354 = vector.shape_cast %345 : vector<8x128xf32> to vector<1x8x128xf32>
    tpu.vector_store %arg16[%351, %c0_109, %c0_110], %354 {strides = array<i32>} : memref<10x8x128xf32, #tpu.memory_space<vmem>>, vector<1x8x128xf32>,
    %c7_i32 = arith.constant 7 : i32
    %355 = arith.index_cast %c7_i32 : i32 to index
    %c0_111 = arith.constant 0 : index
    %c0_112 = arith.constant 0 : index
    %356 = vector.load %arg14[%355, %c0_111, %c0_112] : memref<10x8x384xf32, #tpu.memory_space<vmem>>, vector<1x8x384xf32>
    %357 = vector.shape_cast %356 : vector<1x8x384xf32> to vector<8x384xf32>
    %cst_113 = arith.constant dense<0.000000e+00> : vector<8x384xf32>
    %358 = tpu.matmul %345, %9, %cst_113 {dimension_numbers = #tpu.dot_dimension_numbers<[1], [0], [0], [1], [0, 0, 1, 1], [], []>} : vector<8x128xf32>, vector<128x384xf32>, vector<8x384xf32> -> vector<8x384xf32>
    %359 = vector.broadcast %10 : vector<1x384xf32> to vector<8x384xf32>
    %360 = arith.addf %358, %359 : vector<8x384xf32>
    %361 = vector.extract_strided_slice %357 {offsets = [0, 0], sizes = [8, 128], strides = [1, 1]} : vector<8x384xf32> to vector<8x128xf32>
    %362 = vector.extract_strided_slice %360 {offsets = [0, 0], sizes = [8, 128], strides = [1, 1]} : vector<8x384xf32> to vector<8x128xf32>
    %363 = arith.addf %361, %362 : vector<8x128xf32>
    %364 = arith.negf %363 : vector<8x128xf32>
    %365 = math.exp %364 : vector<8x128xf32>
    %cst_114 = arith.constant 1.000000e+00 : f32
    %366 = vector.broadcast %cst_114 : f32 to vector<8x128xf32>
    %367 = arith.addf %366, %365 : vector<8x128xf32>
    %368 = arith.divf %366, %367 : vector<8x128xf32>
    %369 = vector.extract_strided_slice %357 {offsets = [0, 128], sizes = [8, 128], strides = [1, 1]} : vector<8x384xf32> to vector<8x128xf32>
    %370 = vector.extract_strided_slice %360 {offsets = [0, 128], sizes = [8, 128], strides = [1, 1]} : vector<8x384xf32> to vector<8x128xf32>
    %371 = arith.addf %369, %370 : vector<8x128xf32>
    %372 = arith.negf %371 : vector<8x128xf32>
    %373 = math.exp %372 : vector<8x128xf32>
    %cst_115 = arith.constant 1.000000e+00 : f32
    %374 = vector.broadcast %cst_115 : f32 to vector<8x128xf32>
    %375 = arith.addf %374, %373 : vector<8x128xf32>
    %376 = arith.divf %374, %375 : vector<8x128xf32>
    %377 = vector.extract_strided_slice %357 {offsets = [0, 256], sizes = [8, 128], strides = [1, 1]} : vector<8x384xf32> to vector<8x128xf32>
    %378 = vector.extract_strided_slice %360 {offsets = [0, 256], sizes = [8, 128], strides = [1, 1]} : vector<8x384xf32> to vector<8x128xf32>
    %379 = arith.mulf %368, %378 : vector<8x128xf32>
    %380 = arith.addf %377, %379 : vector<8x128xf32>
    %381 = math.tanh %380 : vector<8x128xf32>
    %cst_116 = arith.constant 1.000000e+00 : f32
    %382 = vector.broadcast %cst_116 : f32 to vector<8x128xf32>
    %383 = arith.subf %382, %376 : vector<8x128xf32>
    %384 = arith.mulf %383, %381 : vector<8x128xf32>
    %385 = arith.mulf %376, %345 : vector<8x128xf32>
    %386 = arith.addf %384, %385 : vector<8x128xf32>
    %387 = arith.index_cast %c7_i32 : i32 to index
    %c0_117 = arith.constant 0 : index
    %c0_118 = arith.constant 0 : index
    %388 = vector.load %arg2[%387, %c0_117, %c0_118] : memref<10x8x128xf32, #tpu.memory_space<vmem>>, vector<1x8x128xf32>
    %389 = vector.shape_cast %388 : vector<1x8x128xf32> to vector<8x128xf32>
    %390 = arith.mulf %389, %386 : vector<8x128xf32>
    %cst_119 = arith.constant 1.000000e+00 : f32
    %391 = vector.broadcast %cst_119 : f32 to vector<8x128xf32>
    %392 = arith.subf %391, %389 : vector<8x128xf32>
    %393 = arith.mulf %392, %345 : vector<8x128xf32>
    %394 = arith.addf %390, %393 : vector<8x128xf32>
    %395 = arith.index_cast %c7_i32 : i32 to index
    %c0_120 = arith.constant 0 : index
    %c0_121 = arith.constant 0 : index
    %396 = vector.load %arg15[%395, %c0_120, %c0_121] : memref<10x8x128xf32, #tpu.memory_space<vmem>>, vector<1x8x128xf32>
    %397 = vector.shape_cast %396 : vector<1x8x128xf32> to vector<8x128xf32>
    %398 = vector.shape_cast %394 : vector<8x128xf32> to vector<1x8x128xf32>
    tpu.vector_store %arg15[%395, %c0_120, %c0_121], %398 {strides = array<i32>} : memref<10x8x128xf32, #tpu.memory_space<vmem>>, vector<1x8x128xf32>,
    %c9_i32_122 = arith.constant 9 : i32
    %399 = arith.subi %c9_i32_122, %c7_i32 : i32
    %400 = arith.index_cast %399 : i32 to index
    %c0_123 = arith.constant 0 : index
    %c0_124 = arith.constant 0 : index
    %401 = vector.load %arg16[%400, %c0_123, %c0_124] : memref<10x8x128xf32, #tpu.memory_space<vmem>>, vector<1x8x128xf32>
    %402 = vector.shape_cast %401 : vector<1x8x128xf32> to vector<8x128xf32>
    %403 = vector.shape_cast %394 : vector<8x128xf32> to vector<1x8x128xf32>
    tpu.vector_store %arg16[%400, %c0_123, %c0_124], %403 {strides = array<i32>} : memref<10x8x128xf32, #tpu.memory_space<vmem>>, vector<1x8x128xf32>,
    %c8_i32 = arith.constant 8 : i32
    %404 = arith.index_cast %c8_i32 : i32 to index
    %c0_125 = arith.constant 0 : index
    %c0_126 = arith.constant 0 : index
    %405 = vector.load %arg14[%404, %c0_125, %c0_126] : memref<10x8x384xf32, #tpu.memory_space<vmem>>, vector<1x8x384xf32>
    %406 = vector.shape_cast %405 : vector<1x8x384xf32> to vector<8x384xf32>
    %cst_127 = arith.constant dense<0.000000e+00> : vector<8x384xf32>
    %407 = tpu.matmul %394, %9, %cst_127 {dimension_numbers = #tpu.dot_dimension_numbers<[1], [0], [0], [1], [0, 0, 1, 1], [], []>} : vector<8x128xf32>, vector<128x384xf32>, vector<8x384xf32> -> vector<8x384xf32>
    %408 = vector.broadcast %10 : vector<1x384xf32> to vector<8x384xf32>
    %409 = arith.addf %407, %408 : vector<8x384xf32>
    %410 = vector.extract_strided_slice %406 {offsets = [0, 0], sizes = [8, 128], strides = [1, 1]} : vector<8x384xf32> to vector<8x128xf32>
    %411 = vector.extract_strided_slice %409 {offsets = [0, 0], sizes = [8, 128], strides = [1, 1]} : vector<8x384xf32> to vector<8x128xf32>
    %412 = arith.addf %410, %411 : vector<8x128xf32>
    %413 = arith.negf %412 : vector<8x128xf32>
    %414 = math.exp %413 : vector<8x128xf32>
    %cst_128 = arith.constant 1.000000e+00 : f32
    %415 = vector.broadcast %cst_128 : f32 to vector<8x128xf32>
    %416 = arith.addf %415, %414 : vector<8x128xf32>
    %417 = arith.divf %415, %416 : vector<8x128xf32>
    %418 = vector.extract_strided_slice %406 {offsets = [0, 128], sizes = [8, 128], strides = [1, 1]} : vector<8x384xf32> to vector<8x128xf32>
    %419 = vector.extract_strided_slice %409 {offsets = [0, 128], sizes = [8, 128], strides = [1, 1]} : vector<8x384xf32> to vector<8x128xf32>
    %420 = arith.addf %418, %419 : vector<8x128xf32>
    %421 = arith.negf %420 : vector<8x128xf32>
    %422 = math.exp %421 : vector<8x128xf32>
    %cst_129 = arith.constant 1.000000e+00 : f32
    %423 = vector.broadcast %cst_129 : f32 to vector<8x128xf32>
    %424 = arith.addf %423, %422 : vector<8x128xf32>
    %425 = arith.divf %423, %424 : vector<8x128xf32>
    %426 = vector.extract_strided_slice %406 {offsets = [0, 256], sizes = [8, 128], strides = [1, 1]} : vector<8x384xf32> to vector<8x128xf32>
    %427 = vector.extract_strided_slice %409 {offsets = [0, 256], sizes = [8, 128], strides = [1, 1]} : vector<8x384xf32> to vector<8x128xf32>
    %428 = arith.mulf %417, %427 : vector<8x128xf32>
    %429 = arith.addf %426, %428 : vector<8x128xf32>
    %430 = math.tanh %429 : vector<8x128xf32>
    %cst_130 = arith.constant 1.000000e+00 : f32
    %431 = vector.broadcast %cst_130 : f32 to vector<8x128xf32>
    %432 = arith.subf %431, %425 : vector<8x128xf32>
    %433 = arith.mulf %432, %430 : vector<8x128xf32>
    %434 = arith.mulf %425, %394 : vector<8x128xf32>
    %435 = arith.addf %433, %434 : vector<8x128xf32>
    %436 = arith.index_cast %c8_i32 : i32 to index
    %c0_131 = arith.constant 0 : index
    %c0_132 = arith.constant 0 : index
    %437 = vector.load %arg2[%436, %c0_131, %c0_132] : memref<10x8x128xf32, #tpu.memory_space<vmem>>, vector<1x8x128xf32>
    %438 = vector.shape_cast %437 : vector<1x8x128xf32> to vector<8x128xf32>
    %439 = arith.mulf %438, %435 : vector<8x128xf32>
    %cst_133 = arith.constant 1.000000e+00 : f32
    %440 = vector.broadcast %cst_133 : f32 to vector<8x128xf32>
    %441 = arith.subf %440, %438 : vector<8x128xf32>
    %442 = arith.mulf %441, %394 : vector<8x128xf32>
    %443 = arith.addf %439, %442 : vector<8x128xf32>
    %444 = arith.index_cast %c8_i32 : i32 to index
    %c0_134 = arith.constant 0 : index
    %c0_135 = arith.constant 0 : index
    %445 = vector.load %arg15[%444, %c0_134, %c0_135] : memref<10x8x128xf32, #tpu.memory_space<vmem>>, vector<1x8x128xf32>
    %446 = vector.shape_cast %445 : vector<1x8x128xf32> to vector<8x128xf32>
    %447 = vector.shape_cast %443 : vector<8x128xf32> to vector<1x8x128xf32>
    tpu.vector_store %arg15[%444, %c0_134, %c0_135], %447 {strides = array<i32>} : memref<10x8x128xf32, #tpu.memory_space<vmem>>, vector<1x8x128xf32>,
    %c9_i32_136 = arith.constant 9 : i32
    %448 = arith.subi %c9_i32_136, %c8_i32 : i32
    %449 = arith.index_cast %448 : i32 to index
    %c0_137 = arith.constant 0 : index
    %c0_138 = arith.constant 0 : index
    %450 = vector.load %arg16[%449, %c0_137, %c0_138] : memref<10x8x128xf32, #tpu.memory_space<vmem>>, vector<1x8x128xf32>
    %451 = vector.shape_cast %450 : vector<1x8x128xf32> to vector<8x128xf32>
    %452 = vector.shape_cast %443 : vector<8x128xf32> to vector<1x8x128xf32>
    tpu.vector_store %arg16[%449, %c0_137, %c0_138], %452 {strides = array<i32>} : memref<10x8x128xf32, #tpu.memory_space<vmem>>, vector<1x8x128xf32>,
    %c9_i32_139 = arith.constant 9 : i32
    %453 = arith.index_cast %c9_i32_139 : i32 to index
    %c0_140 = arith.constant 0 : index
    %c0_141 = arith.constant 0 : index
    %454 = vector.load %arg14[%453, %c0_140, %c0_141] : memref<10x8x384xf32, #tpu.memory_space<vmem>>, vector<1x8x384xf32>
    %455 = vector.shape_cast %454 : vector<1x8x384xf32> to vector<8x384xf32>
    %cst_142 = arith.constant dense<0.000000e+00> : vector<8x384xf32>
    %456 = tpu.matmul %443, %9, %cst_142 {dimension_numbers = #tpu.dot_dimension_numbers<[1], [0], [0], [1], [0, 0, 1, 1], [], []>} : vector<8x128xf32>, vector<128x384xf32>, vector<8x384xf32> -> vector<8x384xf32>
    %457 = vector.broadcast %10 : vector<1x384xf32> to vector<8x384xf32>
    %458 = arith.addf %456, %457 : vector<8x384xf32>
    %459 = vector.extract_strided_slice %455 {offsets = [0, 0], sizes = [8, 128], strides = [1, 1]} : vector<8x384xf32> to vector<8x128xf32>
    %460 = vector.extract_strided_slice %458 {offsets = [0, 0], sizes = [8, 128], strides = [1, 1]} : vector<8x384xf32> to vector<8x128xf32>
    %461 = arith.addf %459, %460 : vector<8x128xf32>
    %462 = arith.negf %461 : vector<8x128xf32>
    %463 = math.exp %462 : vector<8x128xf32>
    %cst_143 = arith.constant 1.000000e+00 : f32
    %464 = vector.broadcast %cst_143 : f32 to vector<8x128xf32>
    %465 = arith.addf %464, %463 : vector<8x128xf32>
    %466 = arith.divf %464, %465 : vector<8x128xf32>
    %467 = vector.extract_strided_slice %455 {offsets = [0, 128], sizes = [8, 128], strides = [1, 1]} : vector<8x384xf32> to vector<8x128xf32>
    %468 = vector.extract_strided_slice %458 {offsets = [0, 128], sizes = [8, 128], strides = [1, 1]} : vector<8x384xf32> to vector<8x128xf32>
    %469 = arith.addf %467, %468 : vector<8x128xf32>
    %470 = arith.negf %469 : vector<8x128xf32>
    %471 = math.exp %470 : vector<8x128xf32>
    %cst_144 = arith.constant 1.000000e+00 : f32
    %472 = vector.broadcast %cst_144 : f32 to vector<8x128xf32>
    %473 = arith.addf %472, %471 : vector<8x128xf32>
    %474 = arith.divf %472, %473 : vector<8x128xf32>
    %475 = vector.extract_strided_slice %455 {offsets = [0, 256], sizes = [8, 128], strides = [1, 1]} : vector<8x384xf32> to vector<8x128xf32>
    %476 = vector.extract_strided_slice %458 {offsets = [0, 256], sizes = [8, 128], strides = [1, 1]} : vector<8x384xf32> to vector<8x128xf32>
    %477 = arith.mulf %466, %476 : vector<8x128xf32>
    %478 = arith.addf %475, %477 : vector<8x128xf32>
    %479 = math.tanh %478 : vector<8x128xf32>
    %cst_145 = arith.constant 1.000000e+00 : f32
    %480 = vector.broadcast %cst_145 : f32 to vector<8x128xf32>
    %481 = arith.subf %480, %474 : vector<8x128xf32>
    %482 = arith.mulf %481, %479 : vector<8x128xf32>
    %483 = arith.mulf %474, %443 : vector<8x128xf32>
    %484 = arith.addf %482, %483 : vector<8x128xf32>
    %485 = arith.index_cast %c9_i32_139 : i32 to index
    %c0_146 = arith.constant 0 : index
    %c0_147 = arith.constant 0 : index
    %486 = vector.load %arg2[%485, %c0_146, %c0_147] : memref<10x8x128xf32, #tpu.memory_space<vmem>>, vector<1x8x128xf32>
    %487 = vector.shape_cast %486 : vector<1x8x128xf32> to vector<8x128xf32>
    %488 = arith.mulf %487, %484 : vector<8x128xf32>
    %cst_148 = arith.constant 1.000000e+00 : f32
    %489 = vector.broadcast %cst_148 : f32 to vector<8x128xf32>
    %490 = arith.subf %489, %487 : vector<8x128xf32>
    %491 = arith.mulf %490, %443 : vector<8x128xf32>
    %492 = arith.addf %488, %491 : vector<8x128xf32>
    %493 = arith.index_cast %c9_i32_139 : i32 to index
    %c0_149 = arith.constant 0 : index
    %c0_150 = arith.constant 0 : index
    %494 = vector.load %arg15[%493, %c0_149, %c0_150] : memref<10x8x128xf32, #tpu.memory_space<vmem>>, vector<1x8x128xf32>
    %495 = vector.shape_cast %494 : vector<1x8x128xf32> to vector<8x128xf32>
    %496 = vector.shape_cast %492 : vector<8x128xf32> to vector<1x8x128xf32>
    tpu.vector_store %arg15[%493, %c0_149, %c0_150], %496 {strides = array<i32>} : memref<10x8x128xf32, #tpu.memory_space<vmem>>, vector<1x8x128xf32>,
    %c9_i32_151 = arith.constant 9 : i32
    %497 = arith.subi %c9_i32_151, %c9_i32_139 : i32
    %498 = arith.index_cast %497 : i32 to index
    %c0_152 = arith.constant 0 : index
    %c0_153 = arith.constant 0 : index
    %499 = vector.load %arg16[%498, %c0_152, %c0_153] : memref<10x8x128xf32, #tpu.memory_space<vmem>>, vector<1x8x128xf32>
    %500 = vector.shape_cast %499 : vector<1x8x128xf32> to vector<8x128xf32>
    %501 = vector.shape_cast %492 : vector<8x128xf32> to vector<1x8x128xf32>
    tpu.vector_store %arg16[%498, %c0_152, %c0_153], %501 {strides = array<i32>} : memref<10x8x128xf32, #tpu.memory_space<vmem>>, vector<1x8x128xf32>,
    %c10_i32 = arith.constant 10 : i32
    %c0_154 = arith.constant 0 : index
    %c0_155 = arith.constant 0 : index
    %c0_156 = arith.constant 0 : index
    %502 = vector.load %arg15[%c0_154, %c0_155, %c0_156] : memref<10x8x128xf32, #tpu.memory_space<vmem>>, vector<10x8x128xf32>
    %c0_157 = arith.constant 0 : index
    %c0_158 = arith.constant 0 : index
    %c0_159 = arith.constant 0 : index
    %503 = vector.load %arg16[%c0_157, %c0_158, %c0_159] : memref<10x8x128xf32, #tpu.memory_space<vmem>>, vector<10x8x128xf32>
    %504 = tpu.iota {dimensions = array<i32: 2>} : vector<1x1x128xi32>
    %c16_i32 = arith.constant 16 : i32
    %505 = vector.broadcast %c16_i32 : i32 to vector<1x1x128xi32>
    %506 = arith.cmpi slt, %504, %505 : vector<1x1x128xi32>
    %507 = vector.shape_cast %506 : vector<1x1x128xi1> to vector<1x1x128xi1>
    %508 = vector.broadcast %507 : vector<1x1x128xi1> to vector<10x8x128xi1>
    %509 = arith.select %508, %502, %503 : vector<10x8x128xi1>, vector<10x8x128xf32>
    %510 = vector.shape_cast %509 : vector<10x8x128xf32> to vector<80x128xf32>
    %c0_160 = arith.constant 0 : index
    %c0_161 = arith.constant 0 : index
    %511 = vector.load %arg9[%c0_160, %c0_161] : memref<128x64xf32, #tpu.memory_space<vmem>>, vector<128x64xf32>
    %cst_162 = arith.constant dense<0.000000e+00> : vector<80x64xf32>
    %512 = tpu.matmul %510, %511, %cst_162 {dimension_numbers = #tpu.dot_dimension_numbers<[1], [0], [0], [1], [0, 0, 1, 1], [], []>} : vector<80x128xf32>, vector<128x64xf32>, vector<80x64xf32> -> vector<80x64xf32>
    %513 = vector.shape_cast %512 : vector<80x64xf32> to vector<10x8x64xf32>
    %c0_163 = arith.constant 0 : index
    %c0_164 = arith.constant 0 : index
    %514 = vector.load %arg4[%c0_163, %c0_164] : memref<8x32xf32, #tpu.memory_space<vmem>>, vector<8x32xf32>
    %c0_165 = arith.constant 0 : index
    %c0_166 = arith.constant 0 : index
    %515 = vector.load %arg10[%c0_165, %c0_166] : memref<32x64xf32, #tpu.memory_space<vmem>>, vector<32x64xf32>
    %cst_167 = arith.constant dense<0.000000e+00> : vector<8x64xf32>
    %516 = tpu.matmul %514, %515, %cst_167 {dimension_numbers = #tpu.dot_dimension_numbers<[1], [0], [0], [1], [0, 0, 1, 1], [], []>} : vector<8x32xf32>, vector<32x64xf32>, vector<8x64xf32> -> vector<8x64xf32>
    %c0_168 = arith.constant 0 : index
    %c0_169 = arith.constant 0 : index
    %517 = vector.load %arg11[%c0_168, %c0_169] : memref<1x64xf32, #tpu.memory_space<vmem>>, vector<1x64xf32>
    %518 = vector.broadcast %517 : vector<1x64xf32> to vector<8x64xf32>
    %519 = arith.addf %516, %518 : vector<8x64xf32>
    %520 = vector.shape_cast %519 : vector<8x64xf32> to vector<1x8x64xf32>
    %521 = vector.broadcast %520 : vector<1x8x64xf32> to vector<10x8x64xf32>
    %522 = arith.addf %513, %521 : vector<10x8x64xf32>
    %523 = math.tanh %522 : vector<10x8x64xf32>
    %c0_170 = arith.constant 0 : index
    %c0_171 = arith.constant 0 : index
    %524 = vector.load %arg12[%c0_170, %c0_171] : memref<1x64xf32, #tpu.memory_space<vmem>>, vector<1x64xf32>
    %525 = vector.shape_cast %524 : vector<1x64xf32> to vector<1x1x64xf32>
    %526 = vector.broadcast %525 : vector<1x1x64xf32> to vector<10x8x64xf32>
    %527 = arith.mulf %523, %526 : vector<10x8x64xf32>
    %cst_172 = arith.constant dense<0.000000e+00> : vector<10x8xf32>
    %528 = vector.multi_reduction <add>, %527, %cst_172 [2] : vector<10x8x64xf32> to vector<10x8xf32>
    %529 = vector.shape_cast %528 : vector<10x8xf32> to vector<10x8x1xf32>
    %530 = math.exp %529 : vector<10x8x1xf32>
    %c0_173 = arith.constant 0 : index
    %c0_174 = arith.constant 0 : index
    %c0_175 = arith.constant 0 : index
    %531 = vector.load %arg3[%c0_173, %c0_174, %c0_175] : memref<10x8x1xf32, #tpu.memory_space<vmem>>, vector<10x8x1xf32>
    %532 = arith.mulf %530, %531 : vector<10x8x1xf32>
    %cst_176 = arith.constant dense<0.000000e+00> : vector<8x1xf32>
    %533 = vector.multi_reduction <add>, %532, %cst_176 [0] : vector<10x8x1xf32> to vector<8x1xf32>
    %534 = vector.shape_cast %533 : vector<8x1xf32> to vector<1x8x1xf32>
    %cst_177 = arith.constant 9.99999974E-5 : f32
    %535 = vector.broadcast %cst_177 : f32 to vector<1x8x1xf32>
    %536 = arith.addf %534, %535 : vector<1x8x1xf32>
    %537 = tpu.reciprocal %536 {approx = true} : vector<1x8x1xf32> -> vector<1x8x1xf32>
    %538 = vector.broadcast %537 : vector<1x8x1xf32> to vector<10x8x1xf32>
    %539 = arith.mulf %532, %538 : vector<10x8x1xf32>
    %540 = vector.broadcast %539 : vector<10x8x1xf32> to vector<10x8x128xf32>
    %541 = arith.mulf %540, %509 : vector<10x8x128xf32>
    %cst_178 = arith.constant dense<0.000000e+00> : vector<8x128xf32>
    %542 = vector.multi_reduction <add>, %541, %cst_178 [0] : vector<10x8x128xf32> to vector<8x128xf32>
    %543 = vector.extract_strided_slice %542 {offsets = [0, 0], sizes = [8, 32], strides = [1, 1]} : vector<8x128xf32> to vector<8x32xf32>
    %c0_179 = arith.constant 0 : index
    %c0_180 = arith.constant 0 : index
    %544 = vector.load %arg13[%c0_179, %c0_180] : memref<8x32xf32, #tpu.memory_space<vmem>>, vector<8x32xf32>
    tpu.vector_store %arg13[%c0_179, %c0_180], %543 {strides = array<i32>} : memref<8x32xf32, #tpu.memory_space<vmem>>, vector<8x32xf32>,
    return
  }
  func.func @transform_0(%arg0: i32) -> (i32, i32, i32) {
    %c0_i32 = arith.constant 0 : i32
    %c0_i32_0 = arith.constant 0 : i32
    %c0_i32_1 = arith.constant 0 : i32
    %c0_i32_2 = arith.constant 0 : i32
    return %c0_i32, %c0_i32_0, %c0_i32_1 : i32, i32, i32
  }
  func.func @transform_1(%arg0: i32) -> (i32, i32, i32) {
    %c0_i32 = arith.constant 0 : i32
    %c0_i32_0 = arith.constant 0 : i32
    %c0_i32_1 = arith.constant 0 : i32
    %c0_i32_2 = arith.constant 0 : i32
    return %c0_i32, %c0_i32_0, %c0_i32_1 : i32, i32, i32
  }
  func.func @transform_2(%arg0: i32) -> (i32, i32, i32) {
    %c0_i32 = arith.constant 0 : i32
    %c0_i32_0 = arith.constant 0 : i32
    %c0_i32_1 = arith.constant 0 : i32
    %c0_i32_2 = arith.constant 0 : i32
    return %c0_i32, %c0_i32_0, %c0_i32_1 : i32, i32, i32
  }
  func.func @transform_3(%arg0: i32) -> (i32, i32) {
    %c0_i32 = arith.constant 0 : i32
    %c0_i32_0 = arith.constant 0 : i32
    %c0_i32_1 = arith.constant 0 : i32
    return %c0_i32, %c0_i32_0 : i32, i32
  }
  func.func @transform_4(%arg0: i32) -> (i32, i32) {
    %c0_i32 = arith.constant 0 : i32
    %c0_i32_0 = arith.constant 0 : i32
    %c0_i32_1 = arith.constant 0 : i32
    return %c0_i32, %c0_i32_0 : i32, i32
  }
  func.func @transform_5(%arg0: i32) -> (i32, i32) {
    %c0_i32 = arith.constant 0 : i32
    %c0_i32_0 = arith.constant 0 : i32
    %c0_i32_1 = arith.constant 0 : i32
    return %c0_i32, %c0_i32_0 : i32, i32
  }
  func.func @transform_6(%arg0: i32) -> (i32, i32) {
    %c0_i32 = arith.constant 0 : i32
    %c0_i32_0 = arith.constant 0 : i32
    %c0_i32_1 = arith.constant 0 : i32
    return %c0_i32, %c0_i32_0 : i32, i32
  }
  func.func @transform_7(%arg0: i32) -> (i32, i32) {
    %c0_i32 = arith.constant 0 : i32
    %c0_i32_0 = arith.constant 0 : i32
    %c0_i32_1 = arith.constant 0 : i32
    return %c0_i32, %c0_i32_0 : i32, i32
  }
  func.func @transform_8(%arg0: i32) -> (i32, i32) {
    %c0_i32 = arith.constant 0 : i32
    %c0_i32_0 = arith.constant 0 : i32
    %c0_i32_1 = arith.constant 0 : i32
    return %c0_i32, %c0_i32_0 : i32, i32
  }
  func.func @transform_9(%arg0: i32) -> (i32, i32) {
    %c0_i32 = arith.constant 0 : i32
    %c0_i32_0 = arith.constant 0 : i32
    %c0_i32_1 = arith.constant 0 : i32
    return %c0_i32, %c0_i32_0 : i32, i32
  }
  func.func @transform_10(%arg0: i32) -> (i32, i32) {
    %c0_i32 = arith.constant 0 : i32
    %c0_i32_0 = arith.constant 0 : i32
    %c0_i32_1 = arith.constant 0 : i32
    return %c0_i32, %c0_i32_0 : i32, i32
  }
  func.func @transform_11(%arg0: i32) -> (i32, i32) {
    %c0_i32 = arith.constant 0 : i32
    %c0_i32_0 = arith.constant 0 : i32
    %c0_i32_1 = arith.constant 0 : i32
    return %c0_i32, %c0_i32_0 : i32, i32
  }
  func.func @transform_12(%arg0: i32) -> (i32, i32) {
    %c0_i32 = arith.constant 0 : i32
    %c0_i32_0 = arith.constant 0 : i32
    %c0_i32_1 = arith.constant 0 : i32
    return %c0_i32, %c0_i32_0 : i32, i32
  }
}

</mosaic_0001>

<llo_original>
// kernel: tpu_custom_call.1
$region0: #{tpu_custom_call.1}
  #allocation0 [shape = 'u32[]', space=smem, size = 0x4, offset = 0x4, fixed_abs, tag = 'smem constant byte address 0x4 - core index']
  #allocation1 [shape = 'u32[144,128]{1,0:T(1,128)}', space=vmem, size = 0x12000, scoped, tag = 'internal scratch']
  #allocation2 [shape = 'f32[10,8,384]{2,1,0:T(8,128)}', space=vmem, size = 0x1e000, scoped, tag = 'scratch operand']
  #allocation3 [shape = 'f32[10,8,128]{2,1,0:T(8,128)}', space=vmem, size = 0xa000, scoped, tag = 'scratch operand']
  #allocation4 [shape = 'f32[10,8,128]{2,1,0:T(8,128)}', space=vmem, size = 0xa000, scoped, tag = 'scratch operand']
  %s0 = inlined_call_operand.vmem [shape: f32[10,8,32], index: 0, kind: input, shape index: {}]
  %s1 = inlined_call_operand.vmem [shape: f32[10,8,128], index: 1, kind: input, shape index: {}]
  %s2 = inlined_call_operand.vmem [shape: f32[10,8,1], index: 2, kind: input, shape index: {}]
  %s3 = inlined_call_operand.hbm [shape: f32[8,32], index: 3, kind: input, shape index: {}]
  %s4 = inlined_call_operand.vmem [shape: f32[32,384], index: 4, kind: input, shape index: {}]
  %s5 = inlined_call_operand.vmem [shape: f32[1,384], index: 5, kind: input, shape index: {}]
  %s6 = inlined_call_operand.hbm [shape: f32[128,384], index: 6, kind: input, shape index: {}]
  %s7 = inlined_call_operand.vmem [shape: f32[1,384], index: 7, kind: input, shape index: {}]
  %s8 = inlined_call_operand.vmem [shape: f32[128,64], index: 8, kind: input, shape index: {}]
  %s9 = inlined_call_operand.vmem [shape: f32[32,64], index: 9, kind: input, shape index: {}]
  %s10 = inlined_call_operand.vmem [shape: f32[1,64], index: 10, kind: input, shape index: {}]
  %s11 = inlined_call_operand.vmem [shape: f32[1,64], index: 11, kind: input, shape index: {}]
  %s12 = inlined_call_operand.hbm [shape: f32[8,32], index: 12, kind: output, shape index: {}]
  %s13 = sld [smem:[#allocation0]]
  $region66: #{tpu_custom_call.1} parent=0
    _
  %s15 = ssub.s32 1, %s13
  %s16 = scalar_select 0, %s15, %s13
  $region1: #{tpu_custom_call.1} parent=0
    #allocation5 [shape = 'u8[4096]{0}', space=vmem, size = 0x1000, scoped, tag = 'input window, operand 3, single buffered']
    #allocation6 [shape = 's32[1]{0}', space=sflag, size = 0x4, scoped, tag = 'scoped memory for tpu_custom_call.1']
    #allocation7 [shape = 's32[1]{0}', space=sflag, size = 0x4, scoped, tag = 'scoped memory for tpu_custom_call.1']
    #allocation8 [shape = 'u8[196608]{0}', space=vmem, size = 0x30000, scoped, tag = 'input window, operand 6, single buffered']
    #allocation9 [shape = 's32[1]{0}', space=sflag, size = 0x4, scoped, tag = 'scoped memory for tpu_custom_call.1']
    #allocation10 [shape = 'u8[4096]{0}', space=vmem, size = 0x1000, scoped, tag = 'output window, operand 0, single buffered']
    %17 = vsyncpa [#allocation6], 0
    %18 = vsyncpa [#allocation9], 0
    %19 = vsyncpa [#allocation7], 0
    // Predicated region
    $region2: #{tpu_custom_call.1} parent=1 // pred_check
      _
    $region3: #{tpu_custom_call.1} parent=1 // pred_check_branch
      %21 = sbr.rel (0) target = $region5
    $region4: #{tpu_custom_call.1} parent=1 // pred_region
      _
    $region5: #{tpu_custom_call.1} parent=1 // pred_fallthru
      _
    // Predicated region
    $region6: #{tpu_custom_call.1} parent=1 // pred_check
      _
    $region7: #{tpu_custom_call.1} parent=1 // pred_check_branch
      %23 = sbr.rel (0) target = $region9
    $region8: #{tpu_custom_call.1} parent=1 // pred_region
      _
    $region9: #{tpu_custom_call.1} parent=1 // pred_fallthru
      _
    // Predicated region
    $region10: #{tpu_custom_call.1} parent=1 // pred_check
      _
    $region11: #{tpu_custom_call.1} parent=1 // pred_check_branch
      %25 = sbr.rel (0) target = $region13
    $region12: #{tpu_custom_call.1} parent=1 // pred_region
      _
    $region13: #{tpu_custom_call.1} parent=1 // pred_fallthru
      _
    // Predicated region
    $region14: #{tpu_custom_call.1} parent=1 // pred_check
      _
    $region15: #{tpu_custom_call.1} parent=1 // pred_check_branch
      %27 = sbr.rel (0) target = $region17
    $region16: #{tpu_custom_call.1} parent=1 // pred_region
      %s29 = ssub.s32 128, 128
      %30 = vsyncadd [#allocation6], %s29
      %s32 = sshll.u32 [#allocation5], 4
      %s33 = int_to_ptr.vmem [resolvable:$true] %s32
      %35 = dma.hbm_to_vmem [thread:$0]  %s3, 128, %s33, [#allocation6]
    $region17: #{tpu_custom_call.1} parent=1 // pred_fallthru
      _
    // Predicated region
    $region18: #{tpu_custom_call.1} parent=1 // pred_check
      _
    $region19: #{tpu_custom_call.1} parent=1 // pred_check_branch
      %37 = sbr.rel (0) target = $region21
    $region20: #{tpu_custom_call.1} parent=1 // pred_region
      _
    $region21: #{tpu_custom_call.1} parent=1 // pred_fallthru
      _
    // Predicated region
    $region22: #{tpu_custom_call.1} parent=1 // pred_check
      _
    $region23: #{tpu_custom_call.1} parent=1 // pred_check_branch
      %39 = sbr.rel (0) target = $region25
    $region24: #{tpu_custom_call.1} parent=1 // pred_region
      _
    $region25: #{tpu_custom_call.1} parent=1 // pred_fallthru
      _
    // Predicated region
    $region26: #{tpu_custom_call.1} parent=1 // pred_check
      _
    $region27: #{tpu_custom_call.1} parent=1 // pred_check_branch
      %41 = sbr.rel (0) target = $region29
    $region28: #{tpu_custom_call.1} parent=1 // pred_region
      %s43 = ssub.s32 6144, 6144
      %44 = vsyncadd [#allocation9], %s43
      %s45 = sshll.u32 [#allocation8], 4
      %s46 = int_to_ptr.vmem [resolvable:$true] %s45
      %51 = dma.hbm_to_vmem [thread:$0]  %s6, 6144, %s46, [#allocation9], 384, 384, 24
    $region29: #{tpu_custom_call.1} parent=1 // pred_fallthru
      _
    // Predicated region
    $region30: #{tpu_custom_call.1} parent=1 // pred_check
      _
    $region31: #{tpu_custom_call.1} parent=1 // pred_check_branch
      %53 = sbr.rel (0) target = $region33
    $region32: #{tpu_custom_call.1} parent=1 // pred_region
      _
    $region33: #{tpu_custom_call.1} parent=1 // pred_fallthru
      _
    // Predicated region
    $region34: #{tpu_custom_call.1} parent=1 // pred_check
      _
    $region35: #{tpu_custom_call.1} parent=1 // pred_check_branch
      %55 = sbr.rel (0) target = $region37
    $region36: #{tpu_custom_call.1} parent=1 // pred_region
      _
    $region37: #{tpu_custom_call.1} parent=1 // pred_fallthru
      _
    // Predicated region
    $region38: #{tpu_custom_call.1} parent=1 // pred_check
      _
    $region39: #{tpu_custom_call.1} parent=1 // pred_check_branch
      %57 = sbr.rel (0) target = $region41
    $region40: #{tpu_custom_call.1} parent=1 // pred_region
      _
    $region41: #{tpu_custom_call.1} parent=1 // pred_fallthru
      _
    // Predicated region
    $region42: #{tpu_custom_call.1} parent=1 // pred_check
      _
    $region43: #{tpu_custom_call.1} parent=1 // pred_check_branch
      %59 = sbr.rel (0) target = $region45
    $region44: #{tpu_custom_call.1} parent=1 // pred_region
      _
    $region45: #{tpu_custom_call.1} parent=1 // pred_fallthru
      _
    // Predicated region
    $region46: #{tpu_custom_call.1} parent=1 // pred_check
      _
    $region47: #{tpu_custom_call.1} parent=1 // pred_check_branch
      %61 = sbr.rel (0) target = $region49
    $region48: #{tpu_custom_call.1} parent=1 // pred_region
      _
    $region49: #{tpu_custom_call.1} parent=1 // pred_fallthru
      _
    // Predicated region
    $region50: #{tpu_custom_call.1} parent=1 // pred_check
      _
    $region51: #{tpu_custom_call.1} parent=1 // pred_check_branch
      %63 = sbr.rel (0) target = $region53
    $region52: #{tpu_custom_call.1} parent=1 // pred_region
      %64 = dma.done [#allocation6], 128
    $region53: #{tpu_custom_call.1} parent=1 // pred_fallthru
      _
    // Predicated region
    $region54: #{tpu_custom_call.1} parent=1 // pred_check
      _
    $region55: #{tpu_custom_call.1} parent=1 // pred_check_branch
      %66 = sbr.rel (0) target = $region57
    $region56: #{tpu_custom_call.1} parent=1 // pred_region
      %67 = dma.done [#allocation9], 6144
    $region57: #{tpu_custom_call.1} parent=1 // pred_fallthru
      _
    %v68 = vld [vmem:[%s0] sm:$0xff]
    %v69 = vld [vmem:[%s0 + $0x8] sm:$0xff]
    %v70 = vld [vmem:[%s0 + $0x10] sm:$0xff]
    %v71 = vld [vmem:[%s0 + $0x18] sm:$0xff]
    %v72 = vld [vmem:[%s0 + $0x20] sm:$0xff]
    %v73 = vld [vmem:[%s0 + $0x28] sm:$0xff]
    %v74 = vld [vmem:[%s0 + $0x30] sm:$0xff]
    %v75 = vld [vmem:[%s0 + $0x38] sm:$0xff]
    %v76 = vld [vmem:[%s0 + $0x40] sm:$0xff]
    %v77 = vld [vmem:[%s0 + $0x48] sm:$0xff]
    %v78 = vld [vmem:[%s4] sm:$0xff]
    %v79 = vld [vmem:[%s4 + $0x8] sm:$0xff]
    %v80 = vld [vmem:[%s4 + $0x10] sm:$0xff]
    %v81 = vld [vmem:[%s4 + $0x18] sm:$0xff]
    %v82 = vld [vmem:[%s4 + $0x20] sm:$0xff]
    %v83 = vld [vmem:[%s4 + $0x28] sm:$0xff]
    %v84 = vld [vmem:[%s4 + $0x30] sm:$0xff]
    %v85 = vld [vmem:[%s4 + $0x38] sm:$0xff]
    %v86 = vld [vmem:[%s4 + $0x40] sm:$0xff]
    %v87 = vld [vmem:[%s4 + $0x48] sm:$0xff]
    %v88 = vld [vmem:[%s4 + $0x50] sm:$0xff]
    %v89 = vld [vmem:[%s4 + $0x58] sm:$0xff]
    %v90 = vld [vmem:[%s5] sm:$0x7]
    %v92 = vlaneseq
    %v93 = vshrl.u32 %v92, 7
    %v94 = vsub.s32 0, %v93
    %v95 = vrot.slane %v90, %v94
    %v96 = vlaneseq
    %v97 = vshrl.u32 %v96, 7
    %v98 = vsub.s32 1, %v97
    %v99 = vrot.slane %v90, %v98
    %v100 = vlaneseq
    %v101 = vshrl.u32 %v100, 7
    %v102 = vsub.s32 2, %v101
    %v103 = vrot.slane %v90, %v102
    %vm107 = vcmask 261120
    %v109 = vsel %vm107, %v68, 0
    %v112 = vsel %vm107, %v69, 0
    %v115 = vsel %vm107, %v70, 0
    %v118 = vsel %vm107, %v71, 0
    %v121 = vsel %vm107, %v72, 0
    %v124 = vsel %vm107, %v73, 0
    %v127 = vsel %vm107, %v74, 0
    %v130 = vsel %vm107, %v75, 0
    %v133 = vsel %vm107, %v76, 0
    %v136 = vsel %vm107, %v77, 0
    %138 = vmatprep.subr.mxu0 %v79
    %139 = vmatpush1.msra.mxu0 %v78
    %140 = vmatprep.subr.mxu0 %v82
    %141 = vmatpush1.msra.mxu0 %v81
    %142 = vmatprep.subr.mxu0 %v85
    %143 = vmatpush1.msra.mxu0 %v84
    %144 = vmatprep.subr.mxu0 %v88
    %145 = vmatpush1.msra.mxu0 %v87
    %146 = vmatprep.subr.mxu0 0.0
    %147 = vmatpush1.msra.mxu0 0.0
    %148 = vmatprep.subr.mxu0 0.0
    %149 = vmatpush1.msra.mxu0 0.0
    %150 = vmatprep.subr.mxu0 0.0
    %151 = vmatpush1.msra.mxu0 0.0
    %152 = vmatprep.subr.mxu0 0.0
    %153 = vmatpush1.msra.mxu0 0.0
    %154 = vmatprep.subr.mxu0 0.0
    %155 = vmatpush1.msra.mxu0 0.0
    %156 = vmatprep.subr.mxu0 0.0
    %157 = vmatpush1.msra.mxu0 0.0
    %158 = vmatprep.subr.mxu0 0.0
    %159 = vmatpush1.msra.mxu0 0.0
    %160 = vmatprep.subr.mxu0 0.0
    %161 = vmatpush1.msra.mxu0 0.0
    %162 = vmatprep.subr.mxu0 0.0
    %163 = vmatpush1.msra.mxu0 0.0
    %164 = vmatprep.subr.mxu0 0.0
    %165 = vmatpush1.msra.mxu0 0.0
    %166 = vmatprep.subr.mxu0 0.0
    %167 = vmatpush1.msra.mxu0 0.0
    %168 = vmatprep.subr.mxu0 0.0
    %169 = vmatpush1.msra.mxu0 0.0
    %170 = vmatprep.subr.mxu0 0.0
    %171 = vmatpush1.msra.mxu0 0.0
    %172 = vmatprep.subr.mxu0 0.0
    %173 = vmatpush1.msra.mxu0 0.0
    %174 = vmatprep.subr.mxu0 0.0
    %175 = vmatpush1.msra.mxu0 0.0
    %176 = vmatprep.subr.mxu0 0.0
    %177 = vmatpush1.msra.mxu0 0.0
    %178 = vmatprep.subr.mxu0 0.0
    %179 = vmatpush1.msra.mxu0 0.0
    %180 = vmatprep.subr.mxu0 0.0
    %181 = vmatpush1.msra.mxu0 0.0
    %182 = vmatprep.subr.mxu0 0.0
    %183 = vmatpush1.msra.mxu0 0.0
    %184 = vmatprep.subr.mxu0 0.0
    %185 = vmatpush1.msra.mxu0 0.0
    %186 = vmatprep.subr.mxu0 0.0
    %187 = vmatpush1.msra.mxu0 0.0
    %188 = vmatprep.subr.mxu0 0.0
    %189 = vmatpush1.msra.mxu0 0.0
    %190 = vmatprep.subr.mxu0 0.0
    %191 = vmatpush1.msra.mxu0 0.0
    %192 = vmatprep.subr.mxu0 0.0
    %193 = vmatpush1.msra.mxu0 0.0
    %194 = vmatprep.subr.mxu0 0.0
    %195 = vmatpush1.msra.mxu0 0.0
    %196 = vmatprep.subr.mxu0 0.0
    %197 = vmatpush1.msra.mxu0 0.0
    %198 = vmatprep.subr.mxu0 0.0
    %199 = vmatpush1.msra.mxu0 0.0
    %200 = vmatprep.subr.mxu0 0.0
    %201 = vmatpush1.msra.mxu0 0.0
    %202 = vmatprep.mubr.f32.mxu0 0.0
    %203 = vmatmul.mubr.f32.gmra.mrb[0].mxu0 %v109
    %v204 = vpop.f32.mrb[0].mxu0
    %v205 = vadd.f32 %v95, %v204
    %v206 = vpop.f32.mrb[0].mxu0
    %v207 = vadd.f32 %v99, %v206
    %208 = vmatprep.mubr.f32.mxu0 0.0
    %209 = vmatmul.mubr.f32.gmra.mrb[0].mxu0 %v112
    %v210 = vpop.f32.mrb[0].mxu0
    %v211 = vadd.f32 %v95, %v210
    %v212 = vpop.f32.mrb[0].mxu0
    %v213 = vadd.f32 %v99, %v212
    %214 = vmatprep.mubr.f32.mxu0 0.0
    %215 = vmatmul.mubr.f32.gmra.mrb[0].mxu0 %v115
    %v216 = vpop.f32.mrb[0].mxu0
    %v217 = vadd.f32 %v95, %v216
    %v218 = vpop.f32.mrb[0].mxu0
    %v219 = vadd.f32 %v99, %v218
    %220 = vmatprep.mubr.f32.mxu0 0.0
    %221 = vmatmul.mubr.f32.gmra.mrb[0].mxu0 %v118
    %v222 = vpop.f32.mrb[0].mxu0
    %v223 = vadd.f32 %v95, %v222
    %v224 = vpop.f32.mrb[0].mxu0
    %v225 = vadd.f32 %v99, %v224
    %226 = vmatprep.mubr.f32.mxu0 0.0
    %227 = vmatmul.mubr.f32.gmra.mrb[0].mxu0 %v121
    %v228 = vpop.f32.mrb[0].mxu0
    %v229 = vadd.f32 %v95, %v228
    %v230 = vpop.f32.mrb[0].mxu0
    %v231 = vadd.f32 %v99, %v230
    %232 = vmatprep.mubr.f32.mxu0 0.0
    %233 = vmatmul.mubr.f32.gmra.mrb[0].mxu0 %v124
    %v234 = vpop.f32.mrb[0].mxu0
    %v235 = vadd.f32 %v95, %v234
    %v236 = vpop.f32.mrb[0].mxu0
    %v237 = vadd.f32 %v99, %v236
    %238 = vmatprep.mubr.f32.mxu0 0.0
    %239 = vmatmul.mubr.f32.gmra.mrb[0].mxu0 %v127
    %v240 = vpop.f32.mrb[0].mxu0
    %v241 = vadd.f32 %v95, %v240
    %v242 = vpop.f32.mrb[0].mxu0
    %v243 = vadd.f32 %v99, %v242
    %244 = vmatprep.mubr.f32.mxu0 0.0
    %245 = vmatmul.mubr.f32.gmra.mrb[0].mxu0 %v130
    %v246 = vpop.f32.mrb[0].mxu0
    %v247 = vadd.f32 %v95, %v246
    %v248 = vpop.f32.mrb[0].mxu0
    %v249 = vadd.f32 %v99, %v248
    %250 = vmatprep.mubr.f32.mxu0 0.0
    %251 = vmatmul.mubr.f32.gmra.mrb[0].mxu0 %v133
    %v252 = vpop.f32.mrb[0].mxu0
    %v253 = vadd.f32 %v95, %v252
    %v254 = vpop.f32.mrb[0].mxu0
    %v255 = vadd.f32 %v99, %v254
    %256 = vmatprep.mubr.f32.mxu0 0.0
    %257 = vmatmul.mubr.f32.gmra.mrb[0].mxu0 %v136
    %v258 = vpop.f32.mrb[0].mxu0
    %v259 = vadd.f32 %v95, %v258
    %v260 = vpop.f32.mrb[0].mxu0
    %v261 = vadd.f32 %v99, %v260
    %262 = vdwg.mxu0
    %263 = vmatprep.subr.mxu0 0.0
    %264 = vmatpush1.msra.mxu0 %v80
    %265 = vmatprep.subr.mxu0 0.0
    %266 = vmatpush1.msra.mxu0 %v83
    %267 = vmatprep.subr.mxu0 0.0
    %268 = vmatpush1.msra.mxu0 %v86
    %269 = vmatprep.subr.mxu0 0.0
    %270 = vmatpush1.msra.mxu0 %v89
    %271 = vmatprep.subr.mxu0 0.0
    %272 = vmatpush1.msra.mxu0 0.0
    %273 = vmatprep.subr.mxu0 0.0
    %274 = vmatpush1.msra.mxu0 0.0
    %275 = vmatprep.subr.mxu0 0.0
    %276 = vmatpush1.msra.mxu0 0.0
    %277 = vmatprep.subr.mxu0 0.0
    %278 = vmatpush1.msra.mxu0 0.0
    %279 = vmatprep.subr.mxu0 0.0
    %280 = vmatpush1.msra.mxu0 0.0
    %281 = vmatprep.subr.mxu0 0.0
    %282 = vmatpush1.msra.mxu0 0.0
    %283 = vmatprep.subr.mxu0 0.0
    %284 = vmatpush1.msra.mxu0 0.0
    %285 = vmatprep.subr.mxu0 0.0
    %286 = vmatpush1.msra.mxu0 0.0
    %287 = vmatprep.subr.mxu0 0.0
    %288 = vmatpush1.msra.mxu0 0.0
    %289 = vmatprep.subr.mxu0 0.0
    %290 = vmatpush1.msra.mxu0 0.0
    %291 = vmatprep.subr.mxu0 0.0
    %292 = vmatpush1.msra.mxu0 0.0
    %293 = vmatprep.subr.mxu0 0.0
    %294 = vmatpush1.msra.mxu0 0.0
    %295 = vmatprep.subr.mxu0 0.0
    %296 = vmatpush1.msra.mxu0 0.0
    %297 = vmatprep.subr.mxu0 0.0
    %298 = vmatpush1.msra.mxu0 0.0
    %299 = vmatprep.subr.mxu0 0.0
    %300 = vmatpush1.msra.mxu0 0.0
    %301 = vmatprep.subr.mxu0 0.0
    %302 = vmatpush1.msra.mxu0 0.0
    %303 = vmatprep.subr.mxu0 0.0
    %304 = vmatpush1.msra.mxu0 0.0
    %305 = vmatprep.subr.mxu0 0.0
    %306 = vmatpush1.msra.mxu0 0.0
    %307 = vmatprep.subr.mxu0 0.0
    %308 = vmatpush1.msra.mxu0 0.0
    %309 = vmatprep.subr.mxu0 0.0
    %310 = vmatpush1.msra.mxu0 0.0
    %311 = vmatprep.subr.mxu0 0.0
    %312 = vmatpush1.msra.mxu0 0.0
    %313 = vmatprep.subr.mxu0 0.0
    %314 = vmatpush1.msra.mxu0 0.0
    %315 = vmatprep.subr.mxu0 0.0
    %316 = vmatpush1.msra.mxu0 0.0
    %317 = vmatprep.subr.mxu0 0.0
    %318 = vmatpush1.msra.mxu0 0.0
    %319 = vmatprep.subr.mxu0 0.0
    %320 = vmatpush1.msra.mxu0 0.0
    %321 = vmatprep.subr.mxu0 0.0
    %322 = vmatpush1.msra.mxu0 0.0
    %323 = vmatprep.subr.mxu0 0.0
    %324 = vmatpush1.msra.mxu0 0.0
    %325 = vmatprep.subr.mxu0 0.0
    %326 = vmatpush1.msra.mxu0 0.0
    %327 = vmatprep.mubr.f32.mxu0 0.0
    %328 = vmatmul.mubr.f32.gmra.mrb[0].mxu0 %v109
    %v329 = vpop.f32.mrb[0].mxu0
    %v330 = vadd.f32 %v103, %v329
    %v331 = vpop.f32.mrb[0].mxu0
    %332 = vmatprep.mubr.f32.mxu0 0.0
    %333 = vmatmul.mubr.f32.gmra.mrb[0].mxu0 %v112
    %v334 = vpop.f32.mrb[0].mxu0
    %v335 = vadd.f32 %v103, %v334
    %v336 = vpop.f32.mrb[0].mxu0
    %337 = vmatprep.mubr.f32.mxu0 0.0
    %338 = vmatmul.mubr.f32.gmra.mrb[0].mxu0 %v115
    %v339 = vpop.f32.mrb[0].mxu0
    %v340 = vadd.f32 %v103, %v339
    %v341 = vpop.f32.mrb[0].mxu0
    %342 = vmatprep.mubr.f32.mxu0 0.0
    %343 = vmatmul.mubr.f32.gmra.mrb[0].mxu0 %v118
    %v344 = vpop.f32.mrb[0].mxu0
    %v345 = vadd.f32 %v103, %v344
    %v346 = vpop.f32.mrb[0].mxu0
    %347 = vmatprep.mubr.f32.mxu0 0.0
    %348 = vmatmul.mubr.f32.gmra.mrb[0].mxu0 %v121
    %v349 = vpop.f32.mrb[0].mxu0
    %v350 = vadd.f32 %v103, %v349
    %v351 = vpop.f32.mrb[0].mxu0
    %352 = vmatprep.mubr.f32.mxu0 0.0
    %353 = vmatmul.mubr.f32.gmra.mrb[0].mxu0 %v124
    %v354 = vpop.f32.mrb[0].mxu0
    %v355 = vadd.f32 %v103, %v354
    %v356 = vpop.f32.mrb[0].mxu0
    %357 = vmatprep.mubr.f32.mxu0 0.0
    %358 = vmatmul.mubr.f32.gmra.mrb[0].mxu0 %v127
    %v359 = vpop.f32.mrb[0].mxu0
    %v360 = vadd.f32 %v103, %v359
    %v361 = vpop.f32.mrb[0].mxu0
    %362 = vmatprep.mubr.f32.mxu0 0.0
    %363 = vmatmul.mubr.f32.gmra.mrb[0].mxu0 %v130
    %v364 = vpop.f32.mrb[0].mxu0
    %v365 = vadd.f32 %v103, %v364
    %v366 = vpop.f32.mrb[0].mxu0
    %367 = vmatprep.mubr.f32.mxu0 0.0
    %368 = vmatmul.mubr.f32.gmra.mrb[0].mxu0 %v133
    %v369 = vpop.f32.mrb[0].mxu0
    %v370 = vadd.f32 %v103, %v369
    %v371 = vpop.f32.mrb[0].mxu0
    %372 = vmatprep.mubr.f32.mxu0 0.0
    %373 = vmatmul.mubr.f32.gmra.mrb[0].mxu0 %v136
    %v374 = vpop.f32.mrb[0].mxu0
    %v375 = vadd.f32 %v103, %v374
    %v376 = vpop.f32.mrb[0].mxu0
    %377 = vdwg.mxu0
    %378 = vst [vmem:[#allocation2] sm:$0xff] %v205
    %379 = vst [vmem:[#allocation2 + $0x8] sm:$0xff] %v207
    %380 = vst [vmem:[#allocation2 + $0x10] sm:$0xff] %v330
    %381 = vst [vmem:[#allocation2 + $0x18] sm:$0xff] %v211
    %382 = vst [vmem:[#allocation2 + $0x20] sm:$0xff] %v213
    %383 = vst [vmem:[#allocation2 + $0x28] sm:$0xff] %v335
    %384 = vst [vmem:[#allocation2 + $0x30] sm:$0xff] %v217
    %385 = vst [vmem:[#allocation2 + $0x38] sm:$0xff] %v219
    %386 = vst [vmem:[#allocation2 + $0x40] sm:$0xff] %v340
    %387 = vst [vmem:[#allocation2 + $0x48] sm:$0xff] %v223
    %388 = vst [vmem:[#allocation2 + $0x50] sm:$0xff] %v225
    %389 = vst [vmem:[#allocation2 + $0x58] sm:$0xff] %v345
    %390 = vst [vmem:[#allocation2 + $0x60] sm:$0xff] %v229
    %391 = vst [vmem:[#allocation2 + $0x68] sm:$0xff] %v231
    %392 = vst [vmem:[#allocation2 + $0x70] sm:$0xff] %v350
    %393 = vst [vmem:[#allocation2 + $0x78] sm:$0xff] %v235
    %394 = vst [vmem:[#allocation2 + $0x80] sm:$0xff] %v237
    %395 = vst [vmem:[#allocation2 + $0x88] sm:$0xff] %v355
    %396 = vst [vmem:[#allocation2 + $0x90] sm:$0xff] %v241
    %397 = vst [vmem:[#allocation2 + $0x98] sm:$0xff] %v243
    %398 = vst [vmem:[#allocation2 + $0xa0] sm:$0xff] %v360
    %399 = vst [vmem:[#allocation2 + $0xa8] sm:$0xff] %v247
    %400 = vst [vmem:[#allocation2 + $0xb0] sm:$0xff] %v249
    %401 = vst [vmem:[#allocation2 + $0xb8] sm:$0xff] %v365
    %402 = vst [vmem:[#allocation2 + $0xc0] sm:$0xff] %v253
    %403 = vst [vmem:[#allocation2 + $0xc8] sm:$0xff] %v255
    %404 = vst [vmem:[#allocation2 + $0xd0] sm:$0xff] %v370
    %405 = vst [vmem:[#allocation2 + $0xd8] sm:$0xff] %v259
    %406 = vst [vmem:[#allocation2 + $0xe0] sm:$0xff] %v261
    %407 = vst [vmem:[#allocation2 + $0xe8] sm:$0xff] %v375
    %v408 = vld [vmem:[#allocation8] sm:$0xff]
    %v409 = vld [vmem:[#allocation8 + $0x8] sm:$0xff]
    %v410 = vld [vmem:[#allocation8 + $0x10] sm:$0xff]
    %v411 = vld [vmem:[#allocation8 + $0x18] sm:$0xff]
    %v412 = vld [vmem:[#allocation8 + $0x20] sm:$0xff]
    %v413 = vld [vmem:[#allocation8 + $0x28] sm:$0xff]
    %v414 = vld [vmem:[#allocation8 + $0x30] sm:$0xff]
    %v415 = vld [vmem:[#allocation8 + $0x38] sm:$0xff]
    %v416 = vld [vmem:[#allocation8 + $0x40] sm:$0xff]
    %v417 = vld [vmem:[#allocation8 + $0x48] sm:$0xff]
    %v418 = vld [vmem:[#allocation8 + $0x50] sm:$0xff]
    %v419 = vld [vmem:[#allocation8 + $0x58] sm:$0xff]
    %v420 = vld [vmem:[#allocation8 + $0x60] sm:$0xff]
    %v421 = vld [vmem:[#allocation8 + $0x68] sm:$0xff]
    %v422 = vld [vmem:[#allocation8 + $0x70] sm:$0xff]
    %v423 = vld [vmem:[#allocation8 + $0x78] sm:$0xff]
    %v424 = vld [vmem:[#allocation8 + $0x80] sm:$0xff]
    %v425 = vld [vmem:[#allocation8 + $0x88] sm:$0xff]
    %v426 = vld [vmem:[#allocation8 + $0x90] sm:$0xff]
    %v427 = vld [vmem:[#allocation8 + $0x98] sm:$0xff]
    %v428 = vld [vmem:[#allocation8 + $0xa0] sm:$0xff]
    %v429 = vld [vmem:[#allocation8 + $0xa8] sm:$0xff]
    %v430 = vld [vmem:[#allocation8 + $0xb0] sm:$0xff]
    %v431 = vld [vmem:[#allocation8 + $0xb8] sm:$0xff]
    %v432 = vld [vmem:[#allocation8 + $0xc0] sm:$0xff]
    %v433 = vld [vmem:[#allocation8 + $0xc8] sm:$0xff]
    %v434 = vld [vmem:[#allocation8 + $0xd0] sm:$0xff]
    %v435 = vld [vmem:[#allocation8 + $0xd8] sm:$0xff]
    %v436 = vld [vmem:[#allocation8 + $0xe0] sm:$0xff]
    %v437 = vld [vmem:[#allocation8 + $0xe8] sm:$0xff]
    %v438 = vld [vmem:[#allocation8 + $0xf0] sm:$0xff]
    %v439 = vld [vmem:[#allocation8 + $0xf8] sm:$0xff]
    %v440 = vld [vmem:[#allocation8 + $0x100] sm:$0xff]
    %v441 = vld [vmem:[#allocation8 + $0x108] sm:$0xff]
    %v442 = vld [vmem:[#allocation8 + $0x110] sm:$0xff]
    %v443 = vld [vmem:[#allocation8 + $0x118] sm:$0xff]
    %v444 = vld [vmem:[#allocation8 + $0x120] sm:$0xff]
    %v445 = vld [vmem:[#allocation8 + $0x128] sm:$0xff]
    %v446 = vld [vmem:[#allocation8 + $0x130] sm:$0xff]
    %v447 = vld [vmem:[#allocation8 + $0x138] sm:$0xff]
    %v448 = vld [vmem:[#allocation8 + $0x140] sm:$0xff]
    %v449 = vld [vmem:[#allocation8 + $0x148] sm:$0xff]
    %v450 = vld [vmem:[#allocation8 + $0x150] sm:$0xff]
    %v451 = vld [vmem:[#allocation8 + $0x158] sm:$0xff]
    %v452 = vld [vmem:[#allocation8 + $0x160] sm:$0xff]
    %v453 = vld [vmem:[#allocation8 + $0x168] sm:$0xff]
    %v454 = vld [vmem:[#allocation8 + $0x170] sm:$0xff]
    %v455 = vld [vmem:[#allocation8 + $0x178] sm:$0xff]
    %v456 = vld [vmem:[%s7] sm:$0x7]
    %v457 = vld [vmem:[#allocation2] sm:$0xff]
    %v458 = vld [vmem:[#allocation2 + $0x8] sm:$0xff]
    %v459 = vld [vmem:[#allocation2 + $0x10] sm:$0xff]
    %v461 = vlaneseq
    %v462 = vshrl.u32 %v461, 7
    %v463 = vsub.s32 0, %v462
    %v464 = vrot.slane %v456, %v463
    %v465 = vlaneseq
    %v466 = vshrl.u32 %v465, 7
    %v467 = vsub.s32 1, %v466
    %v468 = vrot.slane %v456, %v467
    %v469 = vlaneseq
    %v470 = vshrl.u32 %v469, 7
    %v471 = vsub.s32 2, %v470
    %v472 = vrot.slane %v456, %v471
    %476 = vmatprep.subr.mxu0 %v409
    %477 = vmatpush1.msra.mxu0 %v408
    %478 = vmatprep.subr.mxu0 %v412
    %479 = vmatpush1.msra.mxu0 %v411
    %480 = vmatprep.subr.mxu0 %v415
    %481 = vmatpush1.msra.mxu0 %v414
    %482 = vmatprep.subr.mxu0 %v418
    %483 = vmatpush1.msra.mxu0 %v417
    %484 = vmatprep.subr.mxu0 %v421
    %485 = vmatpush1.msra.mxu0 %v420
    %486 = vmatprep.subr.mxu0 %v424
    %487 = vmatpush1.msra.mxu0 %v423
    %488 = vmatprep.subr.mxu0 %v427
    %489 = vmatpush1.msra.mxu0 %v426
    %490 = vmatprep.subr.mxu0 %v430
    %491 = vmatpush1.msra.mxu0 %v429
    %492 = vmatprep.subr.mxu0 %v433
    %493 = vmatpush1.msra.mxu0 %v432
    %494 = vmatprep.subr.mxu0 %v436
    %495 = vmatpush1.msra.mxu0 %v435
    %496 = vmatprep.subr.mxu0 %v439
    %497 = vmatpush1.msra.mxu0 %v438
    %498 = vmatprep.subr.mxu0 %v442
    %499 = vmatpush1.msra.mxu0 %v441
    %500 = vmatprep.subr.mxu0 %v445
    %501 = vmatpush1.msra.mxu0 %v444
    %502 = vmatprep.subr.mxu0 %v448
    %503 = vmatpush1.msra.mxu0 %v447
    %504 = vmatprep.subr.mxu0 %v451
    %505 = vmatpush1.msra.mxu0 %v450
    %506 = vmatprep.subr.mxu0 %v454
    %507 = vmatpush1.msra.mxu0 %v453
    %508 = vmatprep.subr.mxu0 0.0
    %509 = vmatpush1.msra.mxu0 0.0
    %510 = vmatprep.subr.mxu0 0.0
    %511 = vmatpush1.msra.mxu0 0.0
    %512 = vmatprep.subr.mxu0 0.0
    %513 = vmatpush1.msra.mxu0 0.0
    %514 = vmatprep.subr.mxu0 0.0
    %515 = vmatpush1.msra.mxu0 0.0
    %516 = vmatprep.subr.mxu0 0.0
    %517 = vmatpush1.msra.mxu0 0.0
    %518 = vmatprep.subr.mxu0 0.0
    %519 = vmatpush1.msra.mxu0 0.0
    %520 = vmatprep.subr.mxu0 0.0
    %521 = vmatpush1.msra.mxu0 0.0
    %522 = vmatprep.subr.mxu0 0.0
    %523 = vmatpush1.msra.mxu0 0.0
    %524 = vmatprep.subr.mxu0 0.0
    %525 = vmatpush1.msra.mxu0 0.0
    %526 = vmatprep.subr.mxu0 0.0
    %527 = vmatpush1.msra.mxu0 0.0
    %528 = vmatprep.subr.mxu0 0.0
    %529 = vmatpush1.msra.mxu0 0.0
    %530 = vmatprep.subr.mxu0 0.0
    %531 = vmatpush1.msra.mxu0 0.0
    %532 = vmatprep.subr.mxu0 0.0
    %533 = vmatpush1.msra.mxu0 0.0
    %534 = vmatprep.subr.mxu0 0.0
    %535 = vmatpush1.msra.mxu0 0.0
    %536 = vmatprep.subr.mxu0 0.0
    %537 = vmatpush1.msra.mxu0 0.0
    %538 = vmatprep.subr.mxu0 0.0
    %539 = vmatpush1.msra.mxu0 0.0
    %540 = vmatprep.mubr.f32.mxu0 0.0
    %541 = vmatmul.mubr.f32.gmra.mrb[0].mxu0 0.0
    %v542 = vpop.f32.mrb[0].mxu0
    %v543 = vadd.f32 %v464, %v542
    %v544 = vpop.f32.mrb[0].mxu0
    %v545 = vadd.f32 %v468, %v544
    %546 = vdwg.mxu0
    %547 = vmatprep.subr.mxu0 0.0
    %548 = vmatpush1.msra.mxu0 %v410
    %549 = vmatprep.subr.mxu0 0.0
    %550 = vmatpush1.msra.mxu0 %v413
    %551 = vmatprep.subr.mxu0 0.0
    %552 = vmatpush1.msra.mxu0 %v416
    %553 = vmatprep.subr.mxu0 0.0
    %554 = vmatpush1.msra.mxu0 %v419
    %555 = vmatprep.subr.mxu0 0.0
    %556 = vmatpush1.msra.mxu0 %v422
    %557 = vmatprep.subr.mxu0 0.0
    %558 = vmatpush1.msra.mxu0 %v425
    %559 = vmatprep.subr.mxu0 0.0
    %560 = vmatpush1.msra.mxu0 %v428
    %561 = vmatprep.subr.mxu0 0.0
    %562 = vmatpush1.msra.mxu0 %v431
    %563 = vmatprep.subr.mxu0 0.0
    %564 = vmatpush1.msra.mxu0 %v434
    %565 = vmatprep.subr.mxu0 0.0
    %566 = vmatpush1.msra.mxu0 %v437
    %567 = vmatprep.subr.mxu0 0.0
    %568 = vmatpush1.msra.mxu0 %v440
    %569 = vmatprep.subr.mxu0 0.0
    %570 = vmatpush1.msra.mxu0 %v443
    %571 = vmatprep.subr.mxu0 0.0
    %572 = vmatpush1.msra.mxu0 %v446
    %573 = vmatprep.subr.mxu0 0.0
    %574 = vmatpush1.msra.mxu0 %v449
    %575 = vmatprep.subr.mxu0 0.0
    %576 = vmatpush1.msra.mxu0 %v452
    %577 = vmatprep.subr.mxu0 0.0
    %578 = vmatpush1.msra.mxu0 %v455
    %579 = vmatprep.subr.mxu0 0.0
    %580 = vmatpush1.msra.mxu0 0.0
    %581 = vmatprep.subr.mxu0 0.0
    %582 = vmatpush1.msra.mxu0 0.0
    %583 = vmatprep.subr.mxu0 0.0
    %584 = vmatpush1.msra.mxu0 0.0
    %585 = vmatprep.subr.mxu0 0.0
    %586 = vmatpush1.msra.mxu0 0.0
    %587 = vmatprep.subr.mxu0 0.0
    %588 = vmatpush1.msra.mxu0 0.0
    %589 = vmatprep.subr.mxu0 0.0
    %590 = vmatpush1.msra.mxu0 0.0
    %591 = vmatprep.subr.mxu0 0.0
    %592 = vmatpush1.msra.mxu0 0.0
    %593 = vmatprep.subr.mxu0 0.0
    %594 = vmatpush1.msra.mxu0 0.0
    %595 = vmatprep.subr.mxu0 0.0
    %596 = vmatpush1.msra.mxu0 0.0
    %597 = vmatprep.subr.mxu0 0.0
    %598 = vmatpush1.msra.mxu0 0.0
    %599 = vmatprep.subr.mxu0 0.0
    %600 = vmatpush1.msra.mxu0 0.0
    %601 = vmatprep.subr.mxu0 0.0
    %602 = vmatpush1.msra.mxu0 0.0
    %603 = vmatprep.subr.mxu0 0.0
    %604 = vmatpush1.msra.mxu0 0.0
    %605 = vmatprep.subr.mxu0 0.0
    %606 = vmatpush1.msra.mxu0 0.0
    %607 = vmatprep.subr.mxu0 0.0
    %608 = vmatpush1.msra.mxu0 0.0
    %609 = vmatprep.subr.mxu0 0.0
    %610 = vmatpush1.msra.mxu0 0.0
    %611 = vmatprep.mubr.f32.mxu0 0.0
    %612 = vmatmul.mubr.f32.gmra.mrb[0].mxu0 0.0
    %v613 = vpop.f32.mrb[0].mxu0
    %v614 = vadd.f32 %v472, %v613
    %v615 = vpop.f32.mrb[0].mxu0
    %616 = vdwg.mxu0
    %v617 = vadd.f32 %v457, %v543
    %v618 = vxor.u32 %v617, 2147483648
    %v619 = vmul.f32 %v618, 1.442695
    %v620 = vpow.pop %v619
    %v621 = vadd.f32 %v620, 1.0
    %v622 = vrcp.pop %v621
    %v623 = vmul.f32 1.0, %v622
    %v624 = vadd.f32 %v458, %v545
    %v625 = vxor.u32 %v624, 2147483648
    %v626 = vmul.f32 %v625, 1.442695
    %v627 = vpow.pop %v626
    %v628 = vadd.f32 %v627, 1.0
    %v629 = vrcp.pop %v628
    %v630 = vmul.f32 1.0, %v629
    %v631 = vmul.f32 %v623, %v614
    %v632 = vadd.f32 %v459, %v631
    %v633 = vtanh.pop %v632
    %v634 = vsub.f32 1.0, %v630
    %v635 = vmul.f32 %v634, %v633
    %v636 = vmul.f32 %v630, 0.0
    %v637 = vadd.f32 %v635, %v636
    %v638 = vld [vmem:[%s1] sm:$0xff]
    %v639 = vmul.f32 %v638, %v637
    %v640 = vsub.f32 1.0, %v638
    %v641 = vmul.f32 %v640, 0.0
    %v642 = vadd.f32 %v639, %v641
    %643 = vst [vmem:[#allocation3] sm:$0xff] %v642
    %s644 = scalar_lea.vmem [#allocation4], 72
    %645 = vst [vmem:[%s644] sm:$0xff] %v642
    %s646 = scalar_lea.vmem [#allocation2], 24
    %v647 = vld [vmem:[%s646] sm:$0xff]
    %v648 = vld [vmem:[%s646 + $0x8] sm:$0xff]
    %v649 = vld [vmem:[%s646 + $0x10] sm:$0xff]
    %650 = vmatprep.subr.mxu0 %v409
    %651 = vmatpush1.msra.mxu0 %v408
    %652 = vmatprep.subr.mxu0 %v412
    %653 = vmatpush1.msra.mxu0 %v411
    %654 = vmatprep.subr.mxu0 %v415
    %655 = vmatpush1.msra.mxu0 %v414
    %656 = vmatprep.subr.mxu0 %v418
    %657 = vmatpush1.msra.mxu0 %v417
    %658 = vmatprep.subr.mxu0 %v421
    %659 = vmatpush1.msra.mxu0 %v420
    %660 = vmatprep.subr.mxu0 %v424
    %661 = vmatpush1.msra.mxu0 %v423
    %662 = vmatprep.subr.mxu0 %v427
    %663 = vmatpush1.msra.mxu0 %v426
    %664 = vmatprep.subr.mxu0 %v430
    %665 = vmatpush1.msra.mxu0 %v429
    %666 = vmatprep.subr.mxu0 %v433
    %667 = vmatpush1.msra.mxu0 %v432
    %668 = vmatprep.subr.mxu0 %v436
    %669 = vmatpush1.msra.mxu0 %v435
    %670 = vmatprep.subr.mxu0 %v439
    %671 = vmatpush1.msra.mxu0 %v438
    %672 = vmatprep.subr.mxu0 %v442
    %673 = vmatpush1.msra.mxu0 %v441
    %674 = vmatprep.subr.mxu0 %v445
    %675 = vmatpush1.msra.mxu0 %v444
    %676 = vmatprep.subr.mxu0 %v448
    %677 = vmatpush1.msra.mxu0 %v447
    %678 = vmatprep.subr.mxu0 %v451
    %679 = vmatpush1.msra.mxu0 %v450
    %680 = vmatprep.subr.mxu0 %v454
    %681 = vmatpush1.msra.mxu0 %v453
    %682 = vmatprep.subr.mxu0 0.0
    %683 = vmatpush1.msra.mxu0 0.0
    %684 = vmatprep.subr.mxu0 0.0
    %685 = vmatpush1.msra.mxu0 0.0
    %686 = vmatprep.subr.mxu0 0.0
    %687 = vmatpush1.msra.mxu0 0.0
    %688 = vmatprep.subr.mxu0 0.0
    %689 = vmatpush1.msra.mxu0 0.0
    %690 = vmatprep.subr.mxu0 0.0
    %691 = vmatpush1.msra.mxu0 0.0
    %692 = vmatprep.subr.mxu0 0.0
    %693 = vmatpush1.msra.mxu0 0.0
    %694 = vmatprep.subr.mxu0 0.0
    %695 = vmatpush1.msra.mxu0 0.0
    %696 = vmatprep.subr.mxu0 0.0
    %697 = vmatpush1.msra.mxu0 0.0
    %698 = vmatprep.subr.mxu0 0.0
    %699 = vmatpush1.msra.mxu0 0.0
    %700 = vmatprep.subr.mxu0 0.0
    %701 = vmatpush1.msra.mxu0 0.0
    %702 = vmatprep.subr.mxu0 0.0
    %703 = vmatpush1.msra.mxu0 0.0
    %704 = vmatprep.subr.mxu0 0.0
    %705 = vmatpush1.msra.mxu0 0.0
    %706 = vmatprep.subr.mxu0 0.0
    %707 = vmatpush1.msra.mxu0 0.0
    %708 = vmatprep.subr.mxu0 0.0
    %709 = vmatpush1.msra.mxu0 0.0
    %710 = vmatprep.subr.mxu0 0.0
    %711 = vmatpush1.msra.mxu0 0.0
    %712 = vmatprep.subr.mxu0 0.0
    %713 = vmatpush1.msra.mxu0 0.0
    %714 = vmatprep.mubr.f32.mxu0 0.0
    %715 = vmatmul.mubr.f32.gmra.mrb[0].mxu0 %v642
    %v716 = vpop.f32.mrb[0].mxu0
    %v717 = vadd.f32 %v464, %v716
    %v718 = vpop.f32.mrb[0].mxu0
    %v719 = vadd.f32 %v468, %v718
    %720 = vdwg.mxu0
    %721 = vmatprep.subr.mxu0 0.0
    %722 = vmatpush1.msra.mxu0 %v410
    %723 = vmatprep.subr.mxu0 0.0
    %724 = vmatpush1.msra.mxu0 %v413
    %725 = vmatprep.subr.mxu0 0.0
    %726 = vmatpush1.msra.mxu0 %v416
    %727 = vmatprep.subr.mxu0 0.0
    %728 = vmatpush1.msra.mxu0 %v419
    %729 = vmatprep.subr.mxu0 0.0
    %730 = vmatpush1.msra.mxu0 %v422
    %731 = vmatprep.subr.mxu0 0.0
    %732 = vmatpush1.msra.mxu0 %v425
    %733 = vmatprep.subr.mxu0 0.0
    %734 = vmatpush1.msra.mxu0 %v428
    %735 = vmatprep.subr.mxu0 0.0
    %736 = vmatpush1.msra.mxu0 %v431
    %737 = vmatprep.subr.mxu0 0.0
    %738 = vmatpush1.msra.mxu0 %v434
    %739 = vmatprep.subr.mxu0 0.0
    %740 = vmatpush1.msra.mxu0 %v437
    %741 = vmatprep.subr.mxu0 0.0
    %742 = vmatpush1.msra.mxu0 %v440
    %743 = vmatprep.subr.mxu0 0.0
    %744 = vmatpush1.msra.mxu0 %v443
    %745 = vmatprep.subr.mxu0 0.0
    %746 = vmatpush1.msra.mxu0 %v446
    %747 = vmatprep.subr.mxu0 0.0
    %748 = vmatpush1.msra.mxu0 %v449
    %749 = vmatprep.subr.mxu0 0.0
    %750 = vmatpush1.msra.mxu0 %v452
    %751 = vmatprep.subr.mxu0 0.0
    %752 = vmatpush1.msra.mxu0 %v455
    %753 = vmatprep.subr.mxu0 0.0
    %754 = vmatpush1.msra.mxu0 0.0
    %755 = vmatprep.subr.mxu0 0.0
    %756 = vmatpush1.msra.mxu0 0.0
    %757 = vmatprep.subr.mxu0 0.0
    %758 = vmatpush1.msra.mxu0 0.0
    %759 = vmatprep.subr.mxu0 0.0
    %760 = vmatpush1.msra.mxu0 0.0
    %761 = vmatprep.subr.mxu0 0.0
    %762 = vmatpush1.msra.mxu0 0.0
    %763 = vmatprep.subr.mxu0 0.0
    %764 = vmatpush1.msra.mxu0 0.0
    %765 = vmatprep.subr.mxu0 0.0
    %766 = vmatpush1.msra.mxu0 0.0
    %767 = vmatprep.subr.mxu0 0.0
    %768 = vmatpush1.msra.mxu0 0.0
    %769 = vmatprep.subr.mxu0 0.0
    %770 = vmatpush1.msra.mxu0 0.0
    %771 = vmatprep.subr.mxu0 0.0
    %772 = vmatpush1.msra.mxu0 0.0
    %773 = vmatprep.subr.mxu0 0.0
    %774 = vmatpush1.msra.mxu0 0.0
    %775 = vmatprep.subr.mxu0 0.0
    %776 = vmatpush1.msra.mxu0 0.0
    %777 = vmatprep.subr.mxu0 0.0
    %778 = vmatpush1.msra.mxu0 0.0
    %779 = vmatprep.subr.mxu0 0.0
    %780 = vmatpush1.msra.mxu0 0.0
    %781 = vmatprep.subr.mxu0 0.0
    %782 = vmatpush1.msra.mxu0 0.0
    %783 = vmatprep.subr.mxu0 0.0
    %784 = vmatpush1.msra.mxu0 0.0
    %785 = vmatprep.mubr.f32.mxu0 0.0
    %786 = vmatmul.mubr.f32.gmra.mrb[0].mxu0 %v642
    %v787 = vpop.f32.mrb[0].mxu0
    %v788 = vadd.f32 %v472, %v787
    %v789 = vpop.f32.mrb[0].mxu0
    %790 = vdwg.mxu0
    %v791 = vadd.f32 %v647, %v717
    %v792 = vxor.u32 %v791, 2147483648
    %v793 = vmul.f32 %v792, 1.442695
    %v794 = vpow.pop %v793
    %v795 = vadd.f32 %v794, 1.0
    %v796 = vrcp.pop %v795
    %v797 = vmul.f32 1.0, %v796
    %v798 = vadd.f32 %v648, %v719
    %v799 = vxor.u32 %v798, 2147483648
    %v800 = vmul.f32 %v799, 1.442695
    %v801 = vpow.pop %v800
    %v802 = vadd.f32 %v801, 1.0
    %v803 = vrcp.pop %v802
    %v804 = vmul.f32 1.0, %v803
    %v805 = vmul.f32 %v797, %v788
    %v806 = vadd.f32 %v649, %v805
    %v807 = vtanh.pop %v806
    %v808 = vsub.f32 1.0, %v804
    %v809 = vmul.f32 %v808, %v807
    %v810 = vmul.f32 %v804, %v642
    %v811 = vadd.f32 %v809, %v810
    %s812 = scalar_lea.vmem %s1, 8
    %v813 = vld [vmem:[%s812] sm:$0xff]
    %v814 = vmul.f32 %v813, %v811
    %v815 = vsub.f32 1.0, %v813
    %v816 = vmul.f32 %v815, %v642
    %v817 = vadd.f32 %v814, %v816
    %s818 = scalar_lea.vmem [#allocation3], 8
    %819 = vst [vmem:[%s818] sm:$0xff] %v817
    %s820 = scalar_lea.vmem [#allocation4], 64
    %821 = vst [vmem:[%s820] sm:$0xff] %v817
    %s822 = scalar_lea.vmem [#allocation2], 48
    %v823 = vld [vmem:[%s822] sm:$0xff]
    %v824 = vld [vmem:[%s822 + $0x8] sm:$0xff]
    %v825 = vld [vmem:[%s822 + $0x10] sm:$0xff]
    %826 = vmatprep.subr.mxu0 %v409
    %827 = vmatpush1.msra.mxu0 %v408
    %828 = vmatprep.subr.mxu0 %v412
    %829 = vmatpush1.msra.mxu0 %v411
    %830 = vmatprep.subr.mxu0 %v415
    %831 = vmatpush1.msra.mxu0 %v414
    %832 = vmatprep.subr.mxu0 %v418
    %833 = vmatpush1.msra.mxu0 %v417
    %834 = vmatprep.subr.mxu0 %v421
    %835 = vmatpush1.msra.mxu0 %v420
    %836 = vmatprep.subr.mxu0 %v424
    %837 = vmatpush1.msra.mxu0 %v423
    %838 = vmatprep.subr.mxu0 %v427
    %839 = vmatpush1.msra.mxu0 %v426
    %840 = vmatprep.subr.mxu0 %v430
    %841 = vmatpush1.msra.mxu0 %v429
    %842 = vmatprep.subr.mxu0 %v433
    %843 = vmatpush1.msra.mxu0 %v432
    %844 = vmatprep.subr.mxu0 %v436
    %845 = vmatpush1.msra.mxu0 %v435
    %846 = vmatprep.subr.mxu0 %v439
    %847 = vmatpush1.msra.mxu0 %v438
    %848 = vmatprep.subr.mxu0 %v442
    %849 = vmatpush1.msra.mxu0 %v441
    %850 = vmatprep.subr.mxu0 %v445
    %851 = vmatpush1.msra.mxu0 %v444
    %852 = vmatprep.subr.mxu0 %v448
    %853 = vmatpush1.msra.mxu0 %v447
    %854 = vmatprep.subr.mxu0 %v451
    %855 = vmatpush1.msra.mxu0 %v450
    %856 = vmatprep.subr.mxu0 %v454
    %857 = vmatpush1.msra.mxu0 %v453
    %858 = vmatprep.subr.mxu0 0.0
    %859 = vmatpush1.msra.mxu0 0.0
    %860 = vmatprep.subr.mxu0 0.0
    %861 = vmatpush1.msra.mxu0 0.0
    %862 = vmatprep.subr.mxu0 0.0
    %863 = vmatpush1.msra.mxu0 0.0
    %864 = vmatprep.subr.mxu0 0.0
    %865 = vmatpush1.msra.mxu0 0.0
    %866 = vmatprep.subr.mxu0 0.0
    %867 = vmatpush1.msra.mxu0 0.0
    %868 = vmatprep.subr.mxu0 0.0
    %869 = vmatpush1.msra.mxu0 0.0
    %870 = vmatprep.subr.mxu0 0.0
    %871 = vmatpush1.msra.mxu0 0.0
    %872 = vmatprep.subr.mxu0 0.0
    %873 = vmatpush1.msra.mxu0 0.0
    %874 = vmatprep.subr.mxu0 0.0
    %875 = vmatpush1.msra.mxu0 0.0
    %876 = vmatprep.subr.mxu0 0.0
    %877 = vmatpush1.msra.mxu0 0.0
    %878 = vmatprep.subr.mxu0 0.0
    %879 = vmatpush1.msra.mxu0 0.0
    %880 = vmatprep.subr.mxu0 0.0
    %881 = vmatpush1.msra.mxu0 0.0
    %882 = vmatprep.subr.mxu0 0.0
    %883 = vmatpush1.msra.mxu0 0.0
    %884 = vmatprep.subr.mxu0 0.0
    %885 = vmatpush1.msra.mxu0 0.0
    %886 = vmatprep.subr.mxu0 0.0
    %887 = vmatpush1.msra.mxu0 0.0
    %888 = vmatprep.subr.mxu0 0.0
    %889 = vmatpush1.msra.mxu0 0.0
    %890 = vmatprep.mubr.f32.mxu0 0.0
    %891 = vmatmul.mubr.f32.gmra.mrb[0].mxu0 %v817
    %v892 = vpop.f32.mrb[0].mxu0
    %v893 = vadd.f32 %v464, %v892
    %v894 = vpop.f32.mrb[0].mxu0
    %v895 = vadd.f32 %v468, %v894
    %896 = vdwg.mxu0
    %897 = vmatprep.subr.mxu0 0.0
    %898 = vmatpush1.msra.mxu0 %v410
    %899 = vmatprep.subr.mxu0 0.0
    %900 = vmatpush1.msra.mxu0 %v413
    %901 = vmatprep.subr.mxu0 0.0
    %902 = vmatpush1.msra.mxu0 %v416
    %903 = vmatprep.subr.mxu0 0.0
    %904 = vmatpush1.msra.mxu0 %v419
    %905 = vmatprep.subr.mxu0 0.0
    %906 = vmatpush1.msra.mxu0 %v422
    %907 = vmatprep.subr.mxu0 0.0
    %908 = vmatpush1.msra.mxu0 %v425
    %909 = vmatprep.subr.mxu0 0.0
    %910 = vmatpush1.msra.mxu0 %v428
    %911 = vmatprep.subr.mxu0 0.0
    %912 = vmatpush1.msra.mxu0 %v431
    %913 = vmatprep.subr.mxu0 0.0
    %914 = vmatpush1.msra.mxu0 %v434
    %915 = vmatprep.subr.mxu0 0.0
    %916 = vmatpush1.msra.mxu0 %v437
    %917 = vmatprep.subr.mxu0 0.0
    %918 = vmatpush1.msra.mxu0 %v440
    %919 = vmatprep.subr.mxu0 0.0
    %920 = vmatpush1.msra.mxu0 %v443
    %921 = vmatprep.subr.mxu0 0.0
    %922 = vmatpush1.msra.mxu0 %v446
    %923 = vmatprep.subr.mxu0 0.0
    %924 = vmatpush1.msra.mxu0 %v449
    %925 = vmatprep.subr.mxu0 0.0
    %926 = vmatpush1.msra.mxu0 %v452
    %927 = vmatprep.subr.mxu0 0.0
    %928 = vmatpush1.msra.mxu0 %v455
    %929 = vmatprep.subr.mxu0 0.0
    %930 = vmatpush1.msra.mxu0 0.0
    %931 = vmatprep.subr.mxu0 0.0
    %932 = vmatpush1.msra.mxu0 0.0
    %933 = vmatprep.subr.mxu0 0.0
    %934 = vmatpush1.msra.mxu0 0.0
    %935 = vmatprep.subr.mxu0 0.0
    %936 = vmatpush1.msra.mxu0 0.0
    %937 = vmatprep.subr.mxu0 0.0
    %938 = vmatpush1.msra.mxu0 0.0
    %939 = vmatprep.subr.mxu0 0.0
    %940 = vmatpush1.msra.mxu0 0.0
    %941 = vmatprep.subr.mxu0 0.0
    %942 = vmatpush1.msra.mxu0 0.0
    %943 = vmatprep.subr.mxu0 0.0
    %944 = vmatpush1.msra.mxu0 0.0
    %945 = vmatprep.subr.mxu0 0.0
    %946 = vmatpush1.msra.mxu0 0.0
    %947 = vmatprep.subr.mxu0 0.0
    %948 = vmatpush1.msra.mxu0 0.0
    %949 = vmatprep.subr.mxu0 0.0
    %950 = vmatpush1.msra.mxu0 0.0
    %951 = vmatprep.subr.mxu0 0.0
    %952 = vmatpush1.msra.mxu0 0.0
    %953 = vmatprep.subr.mxu0 0.0
    %954 = vmatpush1.msra.mxu0 0.0
    %955 = vmatprep.subr.mxu0 0.0
    %956 = vmatpush1.msra.mxu0 0.0
    %957 = vmatprep.subr.mxu0 0.0
    %958 = vmatpush1.msra.mxu0 0.0
    %959 = vmatprep.subr.mxu0 0.0
    %960 = vmatpush1.msra.mxu0 0.0
    %961 = vmatprep.mubr.f32.mxu0 0.0
    %962 = vmatmul.mubr.f32.gmra.mrb[0].mxu0 %v817
    %v963 = vpop.f32.mrb[0].mxu0
    %v964 = vadd.f32 %v472, %v963
    %v965 = vpop.f32.mrb[0].mxu0
    %966 = vdwg.mxu0
    %v967 = vadd.f32 %v823, %v893
    %v968 = vxor.u32 %v967, 2147483648
    %v969 = vmul.f32 %v968, 1.442695
    %v970 = vpow.pop %v969
    %v971 = vadd.f32 %v970, 1.0
    %v972 = vrcp.pop %v971
    %v973 = vmul.f32 1.0, %v972
    %v974 = vadd.f32 %v824, %v895
    %v975 = vxor.u32 %v974, 2147483648
    %v976 = vmul.f32 %v975, 1.442695
    %v977 = vpow.pop %v976
    %v978 = vadd.f32 %v977, 1.0
    %v979 = vrcp.pop %v978
    %v980 = vmul.f32 1.0, %v979
    %v981 = vmul.f32 %v973, %v964
    %v982 = vadd.f32 %v825, %v981
    %v983 = vtanh.pop %v982
    %v984 = vsub.f32 1.0, %v980
    %v985 = vmul.f32 %v984, %v983
    %v986 = vmul.f32 %v980, %v817
    %v987 = vadd.f32 %v985, %v986
    %s988 = scalar_lea.vmem %s1, 16
    %v989 = vld [vmem:[%s988] sm:$0xff]
    %v990 = vmul.f32 %v989, %v987
    %v991 = vsub.f32 1.0, %v989
    %v992 = vmul.f32 %v991, %v817
    %v993 = vadd.f32 %v990, %v992
    %s994 = scalar_lea.vmem [#allocation3], 16
    %995 = vst [vmem:[%s994] sm:$0xff] %v993
    %s996 = scalar_lea.vmem [#allocation4], 56
    %997 = vst [vmem:[%s996] sm:$0xff] %v993
    %s998 = scalar_lea.vmem [#allocation2], 72
    %v999 = vld [vmem:[%s998] sm:$0xff]
    %v1000 = vld [vmem:[%s998 + $0x8] sm:$0xff]
    %v1001 = vld [vmem:[%s998 + $0x10] sm:$0xff]
    %1002 = vmatprep.subr.mxu0 %v409
    %1003 = vmatpush1.msra.mxu0 %v408
    %1004 = vmatprep.subr.mxu0 %v412
    %1005 = vmatpush1.msra.mxu0 %v411
    %1006 = vmatprep.subr.mxu0 %v415
    %1007 = vmatpush1.msra.mxu0 %v414
    %1008 = vmatprep.subr.mxu0 %v418
    %1009 = vmatpush1.msra.mxu0 %v417
    %1010 = vmatprep.subr.mxu0 %v421
    %1011 = vmatpush1.msra.mxu0 %v420
    %1012 = vmatprep.subr.mxu0 %v424
    %1013 = vmatpush1.msra.mxu0 %v423
    %1014 = vmatprep.subr.mxu0 %v427
    %1015 = vmatpush1.msra.mxu0 %v426
    %1016 = vmatprep.subr.mxu0 %v430
    %1017 = vmatpush1.msra.mxu0 %v429
    %1018 = vmatprep.subr.mxu0 %v433
    %1019 = vmatpush1.msra.mxu0 %v432
    %1020 = vmatprep.subr.mxu0 %v436
    %1021 = vmatpush1.msra.mxu0 %v435
    %1022 = vmatprep.subr.mxu0 %v439
    %1023 = vmatpush1.msra.mxu0 %v438
    %1024 = vmatprep.subr.mxu0 %v442
    %1025 = vmatpush1.msra.mxu0 %v441
    %1026 = vmatprep.subr.mxu0 %v445
    %1027 = vmatpush1.msra.mxu0 %v444
    %1028 = vmatprep.subr.mxu0 %v448
    %1029 = vmatpush1.msra.mxu0 %v447
    %1030 = vmatprep.subr.mxu0 %v451
    %1031 = vmatpush1.msra.mxu0 %v450
    %1032 = vmatprep.subr.mxu0 %v454
    %1033 = vmatpush1.msra.mxu0 %v453
    %1034 = vmatprep.subr.mxu0 0.0
    %1035 = vmatpush1.msra.mxu0 0.0
    %1036 = vmatprep.subr.mxu0 0.0
    %1037 = vmatpush1.msra.mxu0 0.0
    %1038 = vmatprep.subr.mxu0 0.0
    %1039 = vmatpush1.msra.mxu0 0.0
    %1040 = vmatprep.subr.mxu0 0.0
    %1041 = vmatpush1.msra.mxu0 0.0
    %1042 = vmatprep.subr.mxu0 0.0
    %1043 = vmatpush1.msra.mxu0 0.0
    %1044 = vmatprep.subr.mxu0 0.0
    %1045 = vmatpush1.msra.mxu0 0.0
    %1046 = vmatprep.subr.mxu0 0.0
    %1047 = vmatpush1.msra.mxu0 0.0
    %1048 = vmatprep.subr.mxu0 0.0
    %1049 = vmatpush1.msra.mxu0 0.0
    %1050 = vmatprep.subr.mxu0 0.0
    %1051 = vmatpush1.msra.mxu0 0.0
    %1052 = vmatprep.subr.mxu0 0.0
    %1053 = vmatpush1.msra.mxu0 0.0
    %1054 = vmatprep.subr.mxu0 0.0
    %1055 = vmatpush1.msra.mxu0 0.0
    %1056 = vmatprep.subr.mxu0 0.0
    %1057 = vmatpush1.msra.mxu0 0.0
    %1058 = vmatprep.subr.mxu0 0.0
    %1059 = vmatpush1.msra.mxu0 0.0
    %1060 = vmatprep.subr.mxu0 0.0
    %1061 = vmatpush1.msra.mxu0 0.0
    %1062 = vmatprep.subr.mxu0 0.0
    %1063 = vmatpush1.msra.mxu0 0.0
    %1064 = vmatprep.subr.mxu0 0.0
    %1065 = vmatpush1.msra.mxu0 0.0
    %1066 = vmatprep.mubr.f32.mxu0 0.0
    %1067 = vmatmul.mubr.f32.gmra.mrb[0].mxu0 %v993
    %v1068 = vpop.f32.mrb[0].mxu0
    %v1069 = vadd.f32 %v464, %v1068
    %v1070 = vpop.f32.mrb[0].mxu0
    %v1071 = vadd.f32 %v468, %v1070
    %1072 = vdwg.mxu0
    %1073 = vmatprep.subr.mxu0 0.0
    %1074 = vmatpush1.msra.mxu0 %v410
    %1075 = vmatprep.subr.mxu0 0.0
    %1076 = vmatpush1.msra.mxu0 %v413
    %1077 = vmatprep.subr.mxu0 0.0
    %1078 = vmatpush1.msra.mxu0 %v416
    %1079 = vmatprep.subr.mxu0 0.0
    %1080 = vmatpush1.msra.mxu0 %v419
    %1081 = vmatprep.subr.mxu0 0.0
    %1082 = vmatpush1.msra.mxu0 %v422
    %1083 = vmatprep.subr.mxu0 0.0
    %1084 = vmatpush1.msra.mxu0 %v425
    %1085 = vmatprep.subr.mxu0 0.0
    %1086 = vmatpush1.msra.mxu0 %v428
    %1087 = vmatprep.subr.mxu0 0.0
    %1088 = vmatpush1.msra.mxu0 %v431
    %1089 = vmatprep.subr.mxu0 0.0
    %1090 = vmatpush1.msra.mxu0 %v434
    %1091 = vmatprep.subr.mxu0 0.0
    %1092 = vmatpush1.msra.mxu0 %v437
    %1093 = vmatprep.subr.mxu0 0.0
    %1094 = vmatpush1.msra.mxu0 %v440
    %1095 = vmatprep.subr.mxu0 0.0
    %1096 = vmatpush1.msra.mxu0 %v443
    %1097 = vmatprep.subr.mxu0 0.0
    %1098 = vmatpush1.msra.mxu0 %v446
    %1099 = vmatprep.subr.mxu0 0.0
    %1100 = vmatpush1.msra.mxu0 %v449
    %1101 = vmatprep.subr.mxu0 0.0
    %1102 = vmatpush1.msra.mxu0 %v452
    %1103 = vmatprep.subr.mxu0 0.0
    %1104 = vmatpush1.msra.mxu0 %v455
    %1105 = vmatprep.subr.mxu0 0.0
    %1106 = vmatpush1.msra.mxu0 0.0
    %1107 = vmatprep.subr.mxu0 0.0
    %1108 = vmatpush1.msra.mxu0 0.0
    %1109 = vmatprep.subr.mxu0 0.0
    %1110 = vmatpush1.msra.mxu0 0.0
    %1111 = vmatprep.subr.mxu0 0.0
    %1112 = vmatpush1.msra.mxu0 0.0
    %1113 = vmatprep.subr.mxu0 0.0
    %1114 = vmatpush1.msra.mxu0 0.0
    %1115 = vmatprep.subr.mxu0 0.0
    %1116 = vmatpush1.msra.mxu0 0.0
    %1117 = vmatprep.subr.mxu0 0.0
    %1118 = vmatpush1.msra.mxu0 0.0
    %1119 = vmatprep.subr.mxu0 0.0
    %1120 = vmatpush1.msra.mxu0 0.0
    %1121 = vmatprep.subr.mxu0 0.0
    %1122 = vmatpush1.msra.mxu0 0.0
    %1123 = vmatprep.subr.mxu0 0.0
    %1124 = vmatpush1.msra.mxu0 0.0
    %1125 = vmatprep.subr.mxu0 0.0
    %1126 = vmatpush1.msra.mxu0 0.0
    %1127 = vmatprep.subr.mxu0 0.0
    %1128 = vmatpush1.msra.mxu0 0.0
    %1129 = vmatprep.subr.mxu0 0.0
    %1130 = vmatpush1.msra.mxu0 0.0
    %1131 = vmatprep.subr.mxu0 0.0
    %1132 = vmatpush1.msra.mxu0 0.0
    %1133 = vmatprep.subr.mxu0 0.0
    %1134 = vmatpush1.msra.mxu0 0.0
    %1135 = vmatprep.subr.mxu0 0.0
    %1136 = vmatpush1.msra.mxu0 0.0
    %1137 = vmatprep.mubr.f32.mxu0 0.0
    %1138 = vmatmul.mubr.f32.gmra.mrb[0].mxu0 %v993
    %v1139 = vpop.f32.mrb[0].mxu0
    %v1140 = vadd.f32 %v472, %v1139
    %v1141 = vpop.f32.mrb[0].mxu0
    %1142 = vdwg.mxu0
    %v1143 = vadd.f32 %v999, %v1069
    %v1144 = vxor.u32 %v1143, 2147483648
    %v1145 = vmul.f32 %v1144, 1.442695
    %v1146 = vpow.pop %v1145
    %v1147 = vadd.f32 %v1146, 1.0
    %v1148 = vrcp.pop %v1147
    %v1149 = vmul.f32 1.0, %v1148
    %v1150 = vadd.f32 %v1000, %v1071
    %v1151 = vxor.u32 %v1150, 2147483648
    %v1152 = vmul.f32 %v1151, 1.442695
    %v1153 = vpow.pop %v1152
    %v1154 = vadd.f32 %v1153, 1.0
    %v1155 = vrcp.pop %v1154
    %v1156 = vmul.f32 1.0, %v1155
    %v1157 = vmul.f32 %v1149, %v1140
    %v1158 = vadd.f32 %v1001, %v1157
    %v1159 = vtanh.pop %v1158
    %v1160 = vsub.f32 1.0, %v1156
    %v1161 = vmul.f32 %v1160, %v1159
    %v1162 = vmul.f32 %v1156, %v993
    %v1163 = vadd.f32 %v1161, %v1162
    %s1164 = scalar_lea.vmem %s1, 24
    %v1165 = vld [vmem:[%s1164] sm:$0xff]
    %v1166 = vmul.f32 %v1165, %v1163
    %v1167 = vsub.f32 1.0, %v1165
    %v1168 = vmul.f32 %v1167, %v993
    %v1169 = vadd.f32 %v1166, %v1168
    %s1170 = scalar_lea.vmem [#allocation3], 24
    %1171 = vst [vmem:[%s1170] sm:$0xff] %v1169
    %s1172 = scalar_lea.vmem [#allocation4], 48
    %1173 = vst [vmem:[%s1172] sm:$0xff] %v1169
    %s1174 = scalar_lea.vmem [#allocation2], 96
    %v1175 = vld [vmem:[%s1174] sm:$0xff]
    %v1176 = vld [vmem:[%s1174 + $0x8] sm:$0xff]
    %v1177 = vld [vmem:[%s1174 + $0x10] sm:$0xff]
    %1178 = vmatprep.subr.mxu0 %v409
    %1179 = vmatpush1.msra.mxu0 %v408
    %1180 = vmatprep.subr.mxu0 %v412
    %1181 = vmatpush1.msra.mxu0 %v411
    %1182 = vmatprep.subr.mxu0 %v415
    %1183 = vmatpush1.msra.mxu0 %v414
    %1184 = vmatprep.subr.mxu0 %v418
    %1185 = vmatpush1.msra.mxu0 %v417
    %1186 = vmatprep.subr.mxu0 %v421
    %1187 = vmatpush1.msra.mxu0 %v420
    %1188 = vmatprep.subr.mxu0 %v424
    %1189 = vmatpush1.msra.mxu0 %v423
    %1190 = vmatprep.subr.mxu0 %v427
    %1191 = vmatpush1.msra.mxu0 %v426
    %1192 = vmatprep.subr.mxu0 %v430
    %1193 = vmatpush1.msra.mxu0 %v429
    %1194 = vmatprep.subr.mxu0 %v433
    %1195 = vmatpush1.msra.mxu0 %v432
    %1196 = vmatprep.subr.mxu0 %v436
    %1197 = vmatpush1.msra.mxu0 %v435
    %1198 = vmatprep.subr.mxu0 %v439
    %1199 = vmatpush1.msra.mxu0 %v438
    %1200 = vmatprep.subr.mxu0 %v442
    %1201 = vmatpush1.msra.mxu0 %v441
    %1202 = vmatprep.subr.mxu0 %v445
    %1203 = vmatpush1.msra.mxu0 %v444
    %1204 = vmatprep.subr.mxu0 %v448
    %1205 = vmatpush1.msra.mxu0 %v447
    %1206 = vmatprep.subr.mxu0 %v451
    %1207 = vmatpush1.msra.mxu0 %v450
    %1208 = vmatprep.subr.mxu0 %v454
    %1209 = vmatpush1.msra.mxu0 %v453
    %1210 = vmatprep.subr.mxu0 0.0
    %1211 = vmatpush1.msra.mxu0 0.0
    %1212 = vmatprep.subr.mxu0 0.0
    %1213 = vmatpush1.msra.mxu0 0.0
    %1214 = vmatprep.subr.mxu0 0.0
    %1215 = vmatpush1.msra.mxu0 0.0
    %1216 = vmatprep.subr.mxu0 0.0
    %1217 = vmatpush1.msra.mxu0 0.0
    %1218 = vmatprep.subr.mxu0 0.0
    %1219 = vmatpush1.msra.mxu0 0.0
    %1220 = vmatprep.subr.mxu0 0.0
    %1221 = vmatpush1.msra.mxu0 0.0
    %1222 = vmatprep.subr.mxu0 0.0
    %1223 = vmatpush1.msra.mxu0 0.0
    %1224 = vmatprep.subr.mxu0 0.0
    %1225 = vmatpush1.msra.mxu0 0.0
    %1226 = vmatprep.subr.mxu0 0.0
    %1227 = vmatpush1.msra.mxu0 0.0
    %1228 = vmatprep.subr.mxu0 0.0
    %1229 = vmatpush1.msra.mxu0 0.0
    %1230 = vmatprep.subr.mxu0 0.0
    %1231 = vmatpush1.msra.mxu0 0.0
    %1232 = vmatprep.subr.mxu0 0.0
    %1233 = vmatpush1.msra.mxu0 0.0
    %1234 = vmatprep.subr.mxu0 0.0
    %1235 = vmatpush1.msra.mxu0 0.0
    %1236 = vmatprep.subr.mxu0 0.0
    %1237 = vmatpush1.msra.mxu0 0.0
    %1238 = vmatprep.subr.mxu0 0.0
    %1239 = vmatpush1.msra.mxu0 0.0
    %1240 = vmatprep.subr.mxu0 0.0
    %1241 = vmatpush1.msra.mxu0 0.0
    %1242 = vmatprep.mubr.f32.mxu0 0.0
    %1243 = vmatmul.mubr.f32.gmra.mrb[0].mxu0 %v1169
    %v1244 = vpop.f32.mrb[0].mxu0
    %v1245 = vadd.f32 %v464, %v1244
    %v1246 = vpop.f32.mrb[0].mxu0
    %v1247 = vadd.f32 %v468, %v1246
    %1248 = vdwg.mxu0
    %1249 = vmatprep.subr.mxu0 0.0
    %1250 = vmatpush1.msra.mxu0 %v410
    %1251 = vmatprep.subr.mxu0 0.0
    %1252 = vmatpush1.msra.mxu0 %v413
    %1253 = vmatprep.subr.mxu0 0.0
    %1254 = vmatpush1.msra.mxu0 %v416
    %1255 = vmatprep.subr.mxu0 0.0
    %1256 = vmatpush1.msra.mxu0 %v419
    %1257 = vmatprep.subr.mxu0 0.0
    %1258 = vmatpush1.msra.mxu0 %v422
    %1259 = vmatprep.subr.mxu0 0.0
    %1260 = vmatpush1.msra.mxu0 %v425
    %1261 = vmatprep.subr.mxu0 0.0
    %1262 = vmatpush1.msra.mxu0 %v428
    %1263 = vmatprep.subr.mxu0 0.0
    %1264 = vmatpush1.msra.mxu0 %v431
    %1265 = vmatprep.subr.mxu0 0.0
    %1266 = vmatpush1.msra.mxu0 %v434
    %1267 = vmatprep.subr.mxu0 0.0
    %1268 = vmatpush1.msra.mxu0 %v437
    %1269 = vmatprep.subr.mxu0 0.0
    %1270 = vmatpush1.msra.mxu0 %v440
    %1271 = vmatprep.subr.mxu0 0.0
    %1272 = vmatpush1.msra.mxu0 %v443
    %1273 = vmatprep.subr.mxu0 0.0
    %1274 = vmatpush1.msra.mxu0 %v446
    %1275 = vmatprep.subr.mxu0 0.0
    %1276 = vmatpush1.msra.mxu0 %v449
    %1277 = vmatprep.subr.mxu0 0.0
    %1278 = vmatpush1.msra.mxu0 %v452
    %1279 = vmatprep.subr.mxu0 0.0
    %1280 = vmatpush1.msra.mxu0 %v455
    %1281 = vmatprep.subr.mxu0 0.0
    %1282 = vmatpush1.msra.mxu0 0.0
    %1283 = vmatprep.subr.mxu0 0.0
    %1284 = vmatpush1.msra.mxu0 0.0
    %1285 = vmatprep.subr.mxu0 0.0
    %1286 = vmatpush1.msra.mxu0 0.0
    %1287 = vmatprep.subr.mxu0 0.0
    %1288 = vmatpush1.msra.mxu0 0.0
    %1289 = vmatprep.subr.mxu0 0.0
    %1290 = vmatpush1.msra.mxu0 0.0
    %1291 = vmatprep.subr.mxu0 0.0
    %1292 = vmatpush1.msra.mxu0 0.0
    %1293 = vmatprep.subr.mxu0 0.0
    %1294 = vmatpush1.msra.mxu0 0.0
    %1295 = vmatprep.subr.mxu0 0.0
    %1296 = vmatpush1.msra.mxu0 0.0
    %1297 = vmatprep.subr.mxu0 0.0
    %1298 = vmatpush1.msra.mxu0 0.0
    %1299 = vmatprep.subr.mxu0 0.0
    %1300 = vmatpush1.msra.mxu0 0.0
    %1301 = vmatprep.subr.mxu0 0.0
    %1302 = vmatpush1.msra.mxu0 0.0
    %1303 = vmatprep.subr.mxu0 0.0
    %1304 = vmatpush1.msra.mxu0 0.0
    %1305 = vmatprep.subr.mxu0 0.0
    %1306 = vmatpush1.msra.mxu0 0.0
    %1307 = vmatprep.subr.mxu0 0.0
    %1308 = vmatpush1.msra.mxu0 0.0
    %1309 = vmatprep.subr.mxu0 0.0
    %1310 = vmatpush1.msra.mxu0 0.0
    %1311 = vmatprep.subr.mxu0 0.0
    %1312 = vmatpush1.msra.mxu0 0.0
    %1313 = vmatprep.mubr.f32.mxu0 0.0
    %1314 = vmatmul.mubr.f32.gmra.mrb[0].mxu0 %v1169
    %v1315 = vpop.f32.mrb[0].mxu0
    %v1316 = vadd.f32 %v472, %v1315
    %v1317 = vpop.f32.mrb[0].mxu0
    %1318 = vdwg.mxu0
    %v1319 = vadd.f32 %v1175, %v1245
    %v1320 = vxor.u32 %v1319, 2147483648
    %v1321 = vmul.f32 %v1320, 1.442695
    %v1322 = vpow.pop %v1321
    %v1323 = vadd.f32 %v1322, 1.0
    %v1324 = vrcp.pop %v1323
    %v1325 = vmul.f32 1.0, %v1324
    %v1326 = vadd.f32 %v1176, %v1247
    %v1327 = vxor.u32 %v1326, 2147483648
    %v1328 = vmul.f32 %v1327, 1.442695
    %v1329 = vpow.pop %v1328
    %v1330 = vadd.f32 %v1329, 1.0
    %v1331 = vrcp.pop %v1330
    %v1332 = vmul.f32 1.0, %v1331
    %v1333 = vmul.f32 %v1325, %v1316
    %v1334 = vadd.f32 %v1177, %v1333
    %v1335 = vtanh.pop %v1334
    %v1336 = vsub.f32 1.0, %v1332
    %v1337 = vmul.f32 %v1336, %v1335
    %v1338 = vmul.f32 %v1332, %v1169
    %v1339 = vadd.f32 %v1337, %v1338
    %s1340 = scalar_lea.vmem %s1, 32
    %v1341 = vld [vmem:[%s1340] sm:$0xff]
    %v1342 = vmul.f32 %v1341, %v1339
    %v1343 = vsub.f32 1.0, %v1341
    %v1344 = vmul.f32 %v1343, %v1169
    %v1345 = vadd.f32 %v1342, %v1344
    %s1346 = scalar_lea.vmem [#allocation3], 32
    %1347 = vst [vmem:[%s1346] sm:$0xff] %v1345
    %s1348 = scalar_lea.vmem [#allocation4], 40
    %1349 = vst [vmem:[%s1348] sm:$0xff] %v1345
    %s1350 = scalar_lea.vmem [#allocation2], 120
    %v1351 = vld [vmem:[%s1350] sm:$0xff]
    %v1352 = vld [vmem:[%s1350 + $0x8] sm:$0xff]
    %v1353 = vld [vmem:[%s1350 + $0x10] sm:$0xff]
    %1354 = vmatprep.subr.mxu0 %v409
    %1355 = vmatpush1.msra.mxu0 %v408
    %1356 = vmatprep.subr.mxu0 %v412
    %1357 = vmatpush1.msra.mxu0 %v411
    %1358 = vmatprep.subr.mxu0 %v415
    %1359 = vmatpush1.msra.mxu0 %v414
    %1360 = vmatprep.subr.mxu0 %v418
    %1361 = vmatpush1.msra.mxu0 %v417
    %1362 = vmatprep.subr.mxu0 %v421
    %1363 = vmatpush1.msra.mxu0 %v420
    %1364 = vmatprep.subr.mxu0 %v424
    %1365 = vmatpush1.msra.mxu0 %v423
    %1366 = vmatprep.subr.mxu0 %v427
    %1367 = vmatpush1.msra.mxu0 %v426
    %1368 = vmatprep.subr.mxu0 %v430
    %1369 = vmatpush1.msra.mxu0 %v429
    %1370 = vmatprep.subr.mxu0 %v433
    %1371 = vmatpush1.msra.mxu0 %v432
    %1372 = vmatprep.subr.mxu0 %v436
    %1373 = vmatpush1.msra.mxu0 %v435
    %1374 = vmatprep.subr.mxu0 %v439
    %1375 = vmatpush1.msra.mxu0 %v438
    %1376 = vmatprep.subr.mxu0 %v442
    %1377 = vmatpush1.msra.mxu0 %v441
    %1378 = vmatprep.subr.mxu0 %v445
    %1379 = vmatpush1.msra.mxu0 %v444
    %1380 = vmatprep.subr.mxu0 %v448
    %1381 = vmatpush1.msra.mxu0 %v447
    %1382 = vmatprep.subr.mxu0 %v451
    %1383 = vmatpush1.msra.mxu0 %v450
    %1384 = vmatprep.subr.mxu0 %v454
    %1385 = vmatpush1.msra.mxu0 %v453
    %1386 = vmatprep.subr.mxu0 0.0
    %1387 = vmatpush1.msra.mxu0 0.0
    %1388 = vmatprep.subr.mxu0 0.0
    %1389 = vmatpush1.msra.mxu0 0.0
    %1390 = vmatprep.subr.mxu0 0.0
    %1391 = vmatpush1.msra.mxu0 0.0
    %1392 = vmatprep.subr.mxu0 0.0
    %1393 = vmatpush1.msra.mxu0 0.0
    %1394 = vmatprep.subr.mxu0 0.0
    %1395 = vmatpush1.msra.mxu0 0.0
    %1396 = vmatprep.subr.mxu0 0.0
    %1397 = vmatpush1.msra.mxu0 0.0
    %1398 = vmatprep.subr.mxu0 0.0
    %1399 = vmatpush1.msra.mxu0 0.0
    %1400 = vmatprep.subr.mxu0 0.0
    %1401 = vmatpush1.msra.mxu0 0.0
    %1402 = vmatprep.subr.mxu0 0.0
    %1403 = vmatpush1.msra.mxu0 0.0
    %1404 = vmatprep.subr.mxu0 0.0
    %1405 = vmatpush1.msra.mxu0 0.0
    %1406 = vmatprep.subr.mxu0 0.0
    %1407 = vmatpush1.msra.mxu0 0.0
    %1408 = vmatprep.subr.mxu0 0.0
    %1409 = vmatpush1.msra.mxu0 0.0
    %1410 = vmatprep.subr.mxu0 0.0
    %1411 = vmatpush1.msra.mxu0 0.0
    %1412 = vmatprep.subr.mxu0 0.0
    %1413 = vmatpush1.msra.mxu0 0.0
    %1414 = vmatprep.subr.mxu0 0.0
    %1415 = vmatpush1.msra.mxu0 0.0
    %1416 = vmatprep.subr.mxu0 0.0
    %1417 = vmatpush1.msra.mxu0 0.0
    %1418 = vmatprep.mubr.f32.mxu0 0.0
    %1419 = vmatmul.mubr.f32.gmra.mrb[0].mxu0 %v1345
    %v1420 = vpop.f32.mrb[0].mxu0
    %v1421 = vadd.f32 %v464, %v1420
    %v1422 = vpop.f32.mrb[0].mxu0
    %v1423 = vadd.f32 %v468, %v1422
    %1424 = vdwg.mxu0
    %1425 = vmatprep.subr.mxu0 0.0
    %1426 = vmatpush1.msra.mxu0 %v410
    %1427 = vmatprep.subr.mxu0 0.0
    %1428 = vmatpush1.msra.mxu0 %v413
    %1429 = vmatprep.subr.mxu0 0.0
    %1430 = vmatpush1.msra.mxu0 %v416
    %1431 = vmatprep.subr.mxu0 0.0
    %1432 = vmatpush1.msra.mxu0 %v419
    %1433 = vmatprep.subr.mxu0 0.0
    %1434 = vmatpush1.msra.mxu0 %v422
    %1435 = vmatprep.subr.mxu0 0.0
    %1436 = vmatpush1.msra.mxu0 %v425
    %1437 = vmatprep.subr.mxu0 0.0
    %1438 = vmatpush1.msra.mxu0 %v428
    %1439 = vmatprep.subr.mxu0 0.0
    %1440 = vmatpush1.msra.mxu0 %v431
    %1441 = vmatprep.subr.mxu0 0.0
    %1442 = vmatpush1.msra.mxu0 %v434
    %1443 = vmatprep.subr.mxu0 0.0
    %1444 = vmatpush1.msra.mxu0 %v437
    %1445 = vmatprep.subr.mxu0 0.0
    %1446 = vmatpush1.msra.mxu0 %v440
    %1447 = vmatprep.subr.mxu0 0.0
    %1448 = vmatpush1.msra.mxu0 %v443
    %1449 = vmatprep.subr.mxu0 0.0
    %1450 = vmatpush1.msra.mxu0 %v446
    %1451 = vmatprep.subr.mxu0 0.0
    %1452 = vmatpush1.msra.mxu0 %v449
    %1453 = vmatprep.subr.mxu0 0.0
    %1454 = vmatpush1.msra.mxu0 %v452
    %1455 = vmatprep.subr.mxu0 0.0
    %1456 = vmatpush1.msra.mxu0 %v455
    %1457 = vmatprep.subr.mxu0 0.0
    %1458 = vmatpush1.msra.mxu0 0.0
    %1459 = vmatprep.subr.mxu0 0.0
    %1460 = vmatpush1.msra.mxu0 0.0
    %1461 = vmatprep.subr.mxu0 0.0
    %1462 = vmatpush1.msra.mxu0 0.0
    %1463 = vmatprep.subr.mxu0 0.0
    %1464 = vmatpush1.msra.mxu0 0.0
    %1465 = vmatprep.subr.mxu0 0.0
    %1466 = vmatpush1.msra.mxu0 0.0
    %1467 = vmatprep.subr.mxu0 0.0
    %1468 = vmatpush1.msra.mxu0 0.0
    %1469 = vmatprep.subr.mxu0 0.0
    %1470 = vmatpush1.msra.mxu0 0.0
    %1471 = vmatprep.subr.mxu0 0.0
    %1472 = vmatpush1.msra.mxu0 0.0
    %1473 = vmatprep.subr.mxu0 0.0
    %1474 = vmatpush1.msra.mxu0 0.0
    %1475 = vmatprep.subr.mxu0 0.0
    %1476 = vmatpush1.msra.mxu0 0.0
    %1477 = vmatprep.subr.mxu0 0.0
    %1478 = vmatpush1.msra.mxu0 0.0
    %1479 = vmatprep.subr.mxu0 0.0
    %1480 = vmatpush1.msra.mxu0 0.0
    %1481 = vmatprep.subr.mxu0 0.0
    %1482 = vmatpush1.msra.mxu0 0.0
    %1483 = vmatprep.subr.mxu0 0.0
    %1484 = vmatpush1.msra.mxu0 0.0
    %1485 = vmatprep.subr.mxu0 0.0
    %1486 = vmatpush1.msra.mxu0 0.0
    %1487 = vmatprep.subr.mxu0 0.0
    %1488 = vmatpush1.msra.mxu0 0.0
    %1489 = vmatprep.mubr.f32.mxu0 0.0
    %1490 = vmatmul.mubr.f32.gmra.mrb[0].mxu0 %v1345
    %v1491 = vpop.f32.mrb[0].mxu0
    %v1492 = vadd.f32 %v472, %v1491
    %v1493 = vpop.f32.mrb[0].mxu0
    %1494 = vdwg.mxu0
    %v1495 = vadd.f32 %v1351, %v1421
    %v1496 = vxor.u32 %v1495, 2147483648
    %v1497 = vmul.f32 %v1496, 1.442695
    %v1498 = vpow.pop %v1497
    %v1499 = vadd.f32 %v1498, 1.0
    %v1500 = vrcp.pop %v1499
    %v1501 = vmul.f32 1.0, %v1500
    %v1502 = vadd.f32 %v1352, %v1423
    %v1503 = vxor.u32 %v1502, 2147483648
    %v1504 = vmul.f32 %v1503, 1.442695
    %v1505 = vpow.pop %v1504
    %v1506 = vadd.f32 %v1505, 1.0
    %v1507 = vrcp.pop %v1506
    %v1508 = vmul.f32 1.0, %v1507
    %v1509 = vmul.f32 %v1501, %v1492
    %v1510 = vadd.f32 %v1353, %v1509
    %v1511 = vtanh.pop %v1510
    %v1512 = vsub.f32 1.0, %v1508
    %v1513 = vmul.f32 %v1512, %v1511
    %v1514 = vmul.f32 %v1508, %v1345
    %v1515 = vadd.f32 %v1513, %v1514
    %s1516 = scalar_lea.vmem %s1, 40
    %v1517 = vld [vmem:[%s1516] sm:$0xff]
    %v1518 = vmul.f32 %v1517, %v1515
    %v1519 = vsub.f32 1.0, %v1517
    %v1520 = vmul.f32 %v1519, %v1345
    %v1521 = vadd.f32 %v1518, %v1520
    %s1522 = scalar_lea.vmem [#allocation3], 40
    %1523 = vst [vmem:[%s1522] sm:$0xff] %v1521
    %s1524 = scalar_lea.vmem [#allocation4], 32
    %1525 = vst [vmem:[%s1524] sm:$0xff] %v1521
    %s1526 = scalar_lea.vmem [#allocation2], 144
    %v1527 = vld [vmem:[%s1526] sm:$0xff]
    %v1528 = vld [vmem:[%s1526 + $0x8] sm:$0xff]
    %v1529 = vld [vmem:[%s1526 + $0x10] sm:$0xff]
    %1530 = vmatprep.subr.mxu0 %v409
    %1531 = vmatpush1.msra.mxu0 %v408
    %1532 = vmatprep.subr.mxu0 %v412
    %1533 = vmatpush1.msra.mxu0 %v411
    %1534 = vmatprep.subr.mxu0 %v415
    %1535 = vmatpush1.msra.mxu0 %v414
    %1536 = vmatprep.subr.mxu0 %v418
    %1537 = vmatpush1.msra.mxu0 %v417
    %1538 = vmatprep.subr.mxu0 %v421
    %1539 = vmatpush1.msra.mxu0 %v420
    %1540 = vmatprep.subr.mxu0 %v424
    %1541 = vmatpush1.msra.mxu0 %v423
    %1542 = vmatprep.subr.mxu0 %v427
    %1543 = vmatpush1.msra.mxu0 %v426
    %1544 = vmatprep.subr.mxu0 %v430
    %1545 = vmatpush1.msra.mxu0 %v429
    %1546 = vmatprep.subr.mxu0 %v433
    %1547 = vmatpush1.msra.mxu0 %v432
    %1548 = vmatprep.subr.mxu0 %v436
    %1549 = vmatpush1.msra.mxu0 %v435
    %1550 = vmatprep.subr.mxu0 %v439
    %1551 = vmatpush1.msra.mxu0 %v438
    %1552 = vmatprep.subr.mxu0 %v442
    %1553 = vmatpush1.msra.mxu0 %v441
    %1554 = vmatprep.subr.mxu0 %v445
    %1555 = vmatpush1.msra.mxu0 %v444
    %1556 = vmatprep.subr.mxu0 %v448
    %1557 = vmatpush1.msra.mxu0 %v447
    %1558 = vmatprep.subr.mxu0 %v451
    %1559 = vmatpush1.msra.mxu0 %v450
    %1560 = vmatprep.subr.mxu0 %v454
    %1561 = vmatpush1.msra.mxu0 %v453
    %1562 = vmatprep.subr.mxu0 0.0
    %1563 = vmatpush1.msra.mxu0 0.0
    %1564 = vmatprep.subr.mxu0 0.0
    %1565 = vmatpush1.msra.mxu0 0.0
    %1566 = vmatprep.subr.mxu0 0.0
    %1567 = vmatpush1.msra.mxu0 0.0
    %1568 = vmatprep.subr.mxu0 0.0
    %1569 = vmatpush1.msra.mxu0 0.0
    %1570 = vmatprep.subr.mxu0 0.0
    %1571 = vmatpush1.msra.mxu0 0.0
    %1572 = vmatprep.subr.mxu0 0.0
    %1573 = vmatpush1.msra.mxu0 0.0
    %1574 = vmatprep.subr.mxu0 0.0
    %1575 = vmatpush1.msra.mxu0 0.0
    %1576 = vmatprep.subr.mxu0 0.0
    %1577 = vmatpush1.msra.mxu0 0.0
    %1578 = vmatprep.subr.mxu0 0.0
    %1579 = vmatpush1.msra.mxu0 0.0
    %1580 = vmatprep.subr.mxu0 0.0
    %1581 = vmatpush1.msra.mxu0 0.0
    %1582 = vmatprep.subr.mxu0 0.0
    %1583 = vmatpush1.msra.mxu0 0.0
    %1584 = vmatprep.subr.mxu0 0.0
    %1585 = vmatpush1.msra.mxu0 0.0
    %1586 = vmatprep.subr.mxu0 0.0
    %1587 = vmatpush1.msra.mxu0 0.0
    %1588 = vmatprep.subr.mxu0 0.0
    %1589 = vmatpush1.msra.mxu0 0.0
    %1590 = vmatprep.subr.mxu0 0.0
    %1591 = vmatpush1.msra.mxu0 0.0
    %1592 = vmatprep.subr.mxu0 0.0
    %1593 = vmatpush1.msra.mxu0 0.0
    %1594 = vmatprep.mubr.f32.mxu0 0.0
    %1595 = vmatmul.mubr.f32.gmra.mrb[0].mxu0 %v1521
    %v1596 = vpop.f32.mrb[0].mxu0
    %v1597 = vadd.f32 %v464, %v1596
    %v1598 = vpop.f32.mrb[0].mxu0
    %v1599 = vadd.f32 %v468, %v1598
    %1600 = vdwg.mxu0
    %1601 = vmatprep.subr.mxu0 0.0
    %1602 = vmatpush1.msra.mxu0 %v410
    %1603 = vmatprep.subr.mxu0 0.0
    %1604 = vmatpush1.msra.mxu0 %v413
    %1605 = vmatprep.subr.mxu0 0.0
    %1606 = vmatpush1.msra.mxu0 %v416
    %1607 = vmatprep.subr.mxu0 0.0
    %1608 = vmatpush1.msra.mxu0 %v419
    %1609 = vmatprep.subr.mxu0 0.0
    %1610 = vmatpush1.msra.mxu0 %v422
    %1611 = vmatprep.subr.mxu0 0.0
    %1612 = vmatpush1.msra.mxu0 %v425
    %1613 = vmatprep.subr.mxu0 0.0
    %1614 = vmatpush1.msra.mxu0 %v428
    %1615 = vmatprep.subr.mxu0 0.0
    %1616 = vmatpush1.msra.mxu0 %v431
    %1617 = vmatprep.subr.mxu0 0.0
    %1618 = vmatpush1.msra.mxu0 %v434
    %1619 = vmatprep.subr.mxu0 0.0
    %1620 = vmatpush1.msra.mxu0 %v437
    %1621 = vmatprep.subr.mxu0 0.0
    %1622 = vmatpush1.msra.mxu0 %v440
    %1623 = vmatprep.subr.mxu0 0.0
    %1624 = vmatpush1.msra.mxu0 %v443
    %1625 = vmatprep.subr.mxu0 0.0
    %1626 = vmatpush1.msra.mxu0 %v446
    %1627 = vmatprep.subr.mxu0 0.0
    %1628 = vmatpush1.msra.mxu0 %v449
    %1629 = vmatprep.subr.mxu0 0.0
    %1630 = vmatpush1.msra.mxu0 %v452
    %1631 = vmatprep.subr.mxu0 0.0
    %1632 = vmatpush1.msra.mxu0 %v455
    %1633 = vmatprep.subr.mxu0 0.0
    %1634 = vmatpush1.msra.mxu0 0.0
    %1635 = vmatprep.subr.mxu0 0.0
    %1636 = vmatpush1.msra.mxu0 0.0
    %1637 = vmatprep.subr.mxu0 0.0
    %1638 = vmatpush1.msra.mxu0 0.0
    %1639 = vmatprep.subr.mxu0 0.0
    %1640 = vmatpush1.msra.mxu0 0.0
    %1641 = vmatprep.subr.mxu0 0.0
    %1642 = vmatpush1.msra.mxu0 0.0
    %1643 = vmatprep.subr.mxu0 0.0
    %1644 = vmatpush1.msra.mxu0 0.0
    %1645 = vmatprep.subr.mxu0 0.0
    %1646 = vmatpush1.msra.mxu0 0.0
    %1647 = vmatprep.subr.mxu0 0.0
    %1648 = vmatpush1.msra.mxu0 0.0
    %1649 = vmatprep.subr.mxu0 0.0
    %1650 = vmatpush1.msra.mxu0 0.0
    %1651 = vmatprep.subr.mxu0 0.0
    %1652 = vmatpush1.msra.mxu0 0.0
    %1653 = vmatprep.subr.mxu0 0.0
    %1654 = vmatpush1.msra.mxu0 0.0
    %1655 = vmatprep.subr.mxu0 0.0
    %1656 = vmatpush1.msra.mxu0 0.0
    %1657 = vmatprep.subr.mxu0 0.0
    %1658 = vmatpush1.msra.mxu0 0.0
    %1659 = vmatprep.subr.mxu0 0.0
    %1660 = vmatpush1.msra.mxu0 0.0
    %1661 = vmatprep.subr.mxu0 0.0
    %1662 = vmatpush1.msra.mxu0 0.0
    %1663 = vmatprep.subr.mxu0 0.0
    %1664 = vmatpush1.msra.mxu0 0.0
    %1665 = vmatprep.mubr.f32.mxu0 0.0
    %1666 = vmatmul.mubr.f32.gmra.mrb[0].mxu0 %v1521
    %v1667 = vpop.f32.mrb[0].mxu0
    %v1668 = vadd.f32 %v472, %v1667
    %v1669 = vpop.f32.mrb[0].mxu0
    %1670 = vdwg.mxu0
    %v1671 = vadd.f32 %v1527, %v1597
    %v1672 = vxor.u32 %v1671, 2147483648
    %v1673 = vmul.f32 %v1672, 1.442695
    %v1674 = vpow.pop %v1673
    %v1675 = vadd.f32 %v1674, 1.0
    %v1676 = vrcp.pop %v1675
    %v1677 = vmul.f32 1.0, %v1676
    %v1678 = vadd.f32 %v1528, %v1599
    %v1679 = vxor.u32 %v1678, 2147483648
    %v1680 = vmul.f32 %v1679, 1.442695
    %v1681 = vpow.pop %v1680
    %v1682 = vadd.f32 %v1681, 1.0
    %v1683 = vrcp.pop %v1682
    %v1684 = vmul.f32 1.0, %v1683
    %v1685 = vmul.f32 %v1677, %v1668
    %v1686 = vadd.f32 %v1529, %v1685
    %v1687 = vtanh.pop %v1686
    %v1688 = vsub.f32 1.0, %v1684
    %v1689 = vmul.f32 %v1688, %v1687
    %v1690 = vmul.f32 %v1684, %v1521
    %v1691 = vadd.f32 %v1689, %v1690
    %s1692 = scalar_lea.vmem %s1, 48
    %v1693 = vld [vmem:[%s1692] sm:$0xff]
    %v1694 = vmul.f32 %v1693, %v1691
    %v1695 = vsub.f32 1.0, %v1693
    %v1696 = vmul.f32 %v1695, %v1521
    %v1697 = vadd.f32 %v1694, %v1696
    %s1698 = scalar_lea.vmem [#allocation3], 48
    %1699 = vst [vmem:[%s1698] sm:$0xff] %v1697
    %s1700 = scalar_lea.vmem [#allocation4], 24
    %1701 = vst [vmem:[%s1700] sm:$0xff] %v1697
    %s1702 = scalar_lea.vmem [#allocation2], 168
    %v1703 = vld [vmem:[%s1702] sm:$0xff]
    %v1704 = vld [vmem:[%s1702 + $0x8] sm:$0xff]
    %v1705 = vld [vmem:[%s1702 + $0x10] sm:$0xff]
    %1706 = vmatprep.subr.mxu0 %v409
    %1707 = vmatpush1.msra.mxu0 %v408
    %1708 = vmatprep.subr.mxu0 %v412
    %1709 = vmatpush1.msra.mxu0 %v411
    %1710 = vmatprep.subr.mxu0 %v415
    %1711 = vmatpush1.msra.mxu0 %v414
    %1712 = vmatprep.subr.mxu0 %v418
    %1713 = vmatpush1.msra.mxu0 %v417
    %1714 = vmatprep.subr.mxu0 %v421
    %1715 = vmatpush1.msra.mxu0 %v420
    %1716 = vmatprep.subr.mxu0 %v424
    %1717 = vmatpush1.msra.mxu0 %v423
    %1718 = vmatprep.subr.mxu0 %v427
    %1719 = vmatpush1.msra.mxu0 %v426
    %1720 = vmatprep.subr.mxu0 %v430
    %1721 = vmatpush1.msra.mxu0 %v429
    %1722 = vmatprep.subr.mxu0 %v433
    %1723 = vmatpush1.msra.mxu0 %v432
    %1724 = vmatprep.subr.mxu0 %v436
    %1725 = vmatpush1.msra.mxu0 %v435
    %1726 = vmatprep.subr.mxu0 %v439
    %1727 = vmatpush1.msra.mxu0 %v438
    %1728 = vmatprep.subr.mxu0 %v442
    %1729 = vmatpush1.msra.mxu0 %v441
    %1730 = vmatprep.subr.mxu0 %v445
    %1731 = vmatpush1.msra.mxu0 %v444
    %1732 = vmatprep.subr.mxu0 %v448
    %1733 = vmatpush1.msra.mxu0 %v447
    %1734 = vmatprep.subr.mxu0 %v451
    %1735 = vmatpush1.msra.mxu0 %v450
    %1736 = vmatprep.subr.mxu0 %v454
    %1737 = vmatpush1.msra.mxu0 %v453
    %1738 = vmatprep.subr.mxu0 0.0
    %1739 = vmatpush1.msra.mxu0 0.0
    %1740 = vmatprep.subr.mxu0 0.0
    %1741 = vmatpush1.msra.mxu0 0.0
    %1742 = vmatprep.subr.mxu0 0.0
    %1743 = vmatpush1.msra.mxu0 0.0
    %1744 = vmatprep.subr.mxu0 0.0
    %1745 = vmatpush1.msra.mxu0 0.0
    %1746 = vmatprep.subr.mxu0 0.0
    %1747 = vmatpush1.msra.mxu0 0.0
    %1748 = vmatprep.subr.mxu0 0.0
    %1749 = vmatpush1.msra.mxu0 0.0
    %1750 = vmatprep.subr.mxu0 0.0
    %1751 = vmatpush1.msra.mxu0 0.0
    %1752 = vmatprep.subr.mxu0 0.0
    %1753 = vmatpush1.msra.mxu0 0.0
    %1754 = vmatprep.subr.mxu0 0.0
    %1755 = vmatpush1.msra.mxu0 0.0
    %1756 = vmatprep.subr.mxu0 0.0
    %1757 = vmatpush1.msra.mxu0 0.0
    %1758 = vmatprep.subr.mxu0 0.0
    %1759 = vmatpush1.msra.mxu0 0.0
    %1760 = vmatprep.subr.mxu0 0.0
    %1761 = vmatpush1.msra.mxu0 0.0
    %1762 = vmatprep.subr.mxu0 0.0
    %1763 = vmatpush1.msra.mxu0 0.0
    %1764 = vmatprep.subr.mxu0 0.0
    %1765 = vmatpush1.msra.mxu0 0.0
    %1766 = vmatprep.subr.mxu0 0.0
    %1767 = vmatpush1.msra.mxu0 0.0
    %1768 = vmatprep.subr.mxu0 0.0
    %1769 = vmatpush1.msra.mxu0 0.0
    %1770 = vmatprep.mubr.f32.mxu0 0.0
    %1771 = vmatmul.mubr.f32.gmra.mrb[0].mxu0 %v1697
    %v1772 = vpop.f32.mrb[0].mxu0
    %v1773 = vadd.f32 %v464, %v1772
    %v1774 = vpop.f32.mrb[0].mxu0
    %v1775 = vadd.f32 %v468, %v1774
    %1776 = vdwg.mxu0
    %1777 = vmatprep.subr.mxu0 0.0
    %1778 = vmatpush1.msra.mxu0 %v410
    %1779 = vmatprep.subr.mxu0 0.0
    %1780 = vmatpush1.msra.mxu0 %v413
    %1781 = vmatprep.subr.mxu0 0.0
    %1782 = vmatpush1.msra.mxu0 %v416
    %1783 = vmatprep.subr.mxu0 0.0
    %1784 = vmatpush1.msra.mxu0 %v419
    %1785 = vmatprep.subr.mxu0 0.0
    %1786 = vmatpush1.msra.mxu0 %v422
    %1787 = vmatprep.subr.mxu0 0.0
    %1788 = vmatpush1.msra.mxu0 %v425
    %1789 = vmatprep.subr.mxu0 0.0
    %1790 = vmatpush1.msra.mxu0 %v428
    %1791 = vmatprep.subr.mxu0 0.0
    %1792 = vmatpush1.msra.mxu0 %v431
    %1793 = vmatprep.subr.mxu0 0.0
    %1794 = vmatpush1.msra.mxu0 %v434
    %1795 = vmatprep.subr.mxu0 0.0
    %1796 = vmatpush1.msra.mxu0 %v437
    %1797 = vmatprep.subr.mxu0 0.0
    %1798 = vmatpush1.msra.mxu0 %v440
    %1799 = vmatprep.subr.mxu0 0.0
    %1800 = vmatpush1.msra.mxu0 %v443
    %1801 = vmatprep.subr.mxu0 0.0
    %1802 = vmatpush1.msra.mxu0 %v446
    %1803 = vmatprep.subr.mxu0 0.0
    %1804 = vmatpush1.msra.mxu0 %v449
    %1805 = vmatprep.subr.mxu0 0.0
    %1806 = vmatpush1.msra.mxu0 %v452
    %1807 = vmatprep.subr.mxu0 0.0
    %1808 = vmatpush1.msra.mxu0 %v455
    %1809 = vmatprep.subr.mxu0 0.0
    %1810 = vmatpush1.msra.mxu0 0.0
    %1811 = vmatprep.subr.mxu0 0.0
    %1812 = vmatpush1.msra.mxu0 0.0
    %1813 = vmatprep.subr.mxu0 0.0
    %1814 = vmatpush1.msra.mxu0 0.0
    %1815 = vmatprep.subr.mxu0 0.0
    %1816 = vmatpush1.msra.mxu0 0.0
    %1817 = vmatprep.subr.mxu0 0.0
    %1818 = vmatpush1.msra.mxu0 0.0
    %1819 = vmatprep.subr.mxu0 0.0
    %1820 = vmatpush1.msra.mxu0 0.0
    %1821 = vmatprep.subr.mxu0 0.0
    %1822 = vmatpush1.msra.mxu0 0.0
    %1823 = vmatprep.subr.mxu0 0.0
    %1824 = vmatpush1.msra.mxu0 0.0
    %1825 = vmatprep.subr.mxu0 0.0
    %1826 = vmatpush1.msra.mxu0 0.0
    %1827 = vmatprep.subr.mxu0 0.0
    %1828 = vmatpush1.msra.mxu0 0.0
    %1829 = vmatprep.subr.mxu0 0.0
    %1830 = vmatpush1.msra.mxu0 0.0
    %1831 = vmatprep.subr.mxu0 0.0
    %1832 = vmatpush1.msra.mxu0 0.0
    %1833 = vmatprep.subr.mxu0 0.0
    %1834 = vmatpush1.msra.mxu0 0.0
    %1835 = vmatprep.subr.mxu0 0.0
    %1836 = vmatpush1.msra.mxu0 0.0
    %1837 = vmatprep.subr.mxu0 0.0
    %1838 = vmatpush1.msra.mxu0 0.0
    %1839 = vmatprep.subr.mxu0 0.0
    %1840 = vmatpush1.msra.mxu0 0.0
    %1841 = vmatprep.mubr.f32.mxu0 0.0
    %1842 = vmatmul.mubr.f32.gmra.mrb[0].mxu0 %v1697
    %v1843 = vpop.f32.mrb[0].mxu0
    %v1844 = vadd.f32 %v472, %v1843
    %v1845 = vpop.f32.mrb[0].mxu0
    %1846 = vdwg.mxu0
    %v1847 = vadd.f32 %v1703, %v1773
    %v1848 = vxor.u32 %v1847, 2147483648
    %v1849 = vmul.f32 %v1848, 1.442695
    %v1850 = vpow.pop %v1849
    %v1851 = vadd.f32 %v1850, 1.0
    %v1852 = vrcp.pop %v1851
    %v1853 = vmul.f32 1.0, %v1852
    %v1854 = vadd.f32 %v1704, %v1775
    %v1855 = vxor.u32 %v1854, 2147483648
    %v1856 = vmul.f32 %v1855, 1.442695
    %v1857 = vpow.pop %v1856
    %v1858 = vadd.f32 %v1857, 1.0
    %v1859 = vrcp.pop %v1858
    %v1860 = vmul.f32 1.0, %v1859
    %v1861 = vmul.f32 %v1853, %v1844
    %v1862 = vadd.f32 %v1705, %v1861
    %v1863 = vtanh.pop %v1862
    %v1864 = vsub.f32 1.0, %v1860
    %v1865 = vmul.f32 %v1864, %v1863
    %v1866 = vmul.f32 %v1860, %v1697
    %v1867 = vadd.f32 %v1865, %v1866
    %s1868 = scalar_lea.vmem %s1, 56
    %v1869 = vld [vmem:[%s1868] sm:$0xff]
    %v1870 = vmul.f32 %v1869, %v1867
    %v1871 = vsub.f32 1.0, %v1869
    %v1872 = vmul.f32 %v1871, %v1697
    %v1873 = vadd.f32 %v1870, %v1872
    %s1874 = scalar_lea.vmem [#allocation3], 56
    %1875 = vst [vmem:[%s1874] sm:$0xff] %v1873
    %s1876 = scalar_lea.vmem [#allocation4], 16
    %1877 = vst [vmem:[%s1876] sm:$0xff] %v1873
    %s1878 = scalar_lea.vmem [#allocation2], 192
    %v1879 = vld [vmem:[%s1878] sm:$0xff]
    %v1880 = vld [vmem:[%s1878 + $0x8] sm:$0xff]
    %v1881 = vld [vmem:[%s1878 + $0x10] sm:$0xff]
    %1882 = vmatprep.subr.mxu0 %v409
    %1883 = vmatpush1.msra.mxu0 %v408
    %1884 = vmatprep.subr.mxu0 %v412
    %1885 = vmatpush1.msra.mxu0 %v411
    %1886 = vmatprep.subr.mxu0 %v415
    %1887 = vmatpush1.msra.mxu0 %v414
    %1888 = vmatprep.subr.mxu0 %v418
    %1889 = vmatpush1.msra.mxu0 %v417
    %1890 = vmatprep.subr.mxu0 %v421
    %1891 = vmatpush1.msra.mxu0 %v420
    %1892 = vmatprep.subr.mxu0 %v424
    %1893 = vmatpush1.msra.mxu0 %v423
    %1894 = vmatprep.subr.mxu0 %v427
    %1895 = vmatpush1.msra.mxu0 %v426
    %1896 = vmatprep.subr.mxu0 %v430
    %1897 = vmatpush1.msra.mxu0 %v429
    %1898 = vmatprep.subr.mxu0 %v433
    %1899 = vmatpush1.msra.mxu0 %v432
    %1900 = vmatprep.subr.mxu0 %v436
    %1901 = vmatpush1.msra.mxu0 %v435
    %1902 = vmatprep.subr.mxu0 %v439
    %1903 = vmatpush1.msra.mxu0 %v438
    %1904 = vmatprep.subr.mxu0 %v442
    %1905 = vmatpush1.msra.mxu0 %v441
    %1906 = vmatprep.subr.mxu0 %v445
    %1907 = vmatpush1.msra.mxu0 %v444
    %1908 = vmatprep.subr.mxu0 %v448
    %1909 = vmatpush1.msra.mxu0 %v447
    %1910 = vmatprep.subr.mxu0 %v451
    %1911 = vmatpush1.msra.mxu0 %v450
    %1912 = vmatprep.subr.mxu0 %v454
    %1913 = vmatpush1.msra.mxu0 %v453
    %1914 = vmatprep.subr.mxu0 0.0
    %1915 = vmatpush1.msra.mxu0 0.0
    %1916 = vmatprep.subr.mxu0 0.0
    %1917 = vmatpush1.msra.mxu0 0.0
    %1918 = vmatprep.subr.mxu0 0.0
    %1919 = vmatpush1.msra.mxu0 0.0
    %1920 = vmatprep.subr.mxu0 0.0
    %1921 = vmatpush1.msra.mxu0 0.0
    %1922 = vmatprep.subr.mxu0 0.0
    %1923 = vmatpush1.msra.mxu0 0.0
    %1924 = vmatprep.subr.mxu0 0.0
    %1925 = vmatpush1.msra.mxu0 0.0
    %1926 = vmatprep.subr.mxu0 0.0
    %1927 = vmatpush1.msra.mxu0 0.0
    %1928 = vmatprep.subr.mxu0 0.0
    %1929 = vmatpush1.msra.mxu0 0.0
    %1930 = vmatprep.subr.mxu0 0.0
    %1931 = vmatpush1.msra.mxu0 0.0
    %1932 = vmatprep.subr.mxu0 0.0
    %1933 = vmatpush1.msra.mxu0 0.0
    %1934 = vmatprep.subr.mxu0 0.0
    %1935 = vmatpush1.msra.mxu0 0.0
    %1936 = vmatprep.subr.mxu0 0.0
    %1937 = vmatpush1.msra.mxu0 0.0
    %1938 = vmatprep.subr.mxu0 0.0
    %1939 = vmatpush1.msra.mxu0 0.0
    %1940 = vmatprep.subr.mxu0 0.0
    %1941 = vmatpush1.msra.mxu0 0.0
    %1942 = vmatprep.subr.mxu0 0.0
    %1943 = vmatpush1.msra.mxu0 0.0
    %1944 = vmatprep.subr.mxu0 0.0
    %1945 = vmatpush1.msra.mxu0 0.0
    %1946 = vmatprep.mubr.f32.mxu0 0.0
    %1947 = vmatmul.mubr.f32.gmra.mrb[0].mxu0 %v1873
    %v1948 = vpop.f32.mrb[0].mxu0
    %v1949 = vadd.f32 %v464, %v1948
    %v1950 = vpop.f32.mrb[0].mxu0
    %v1951 = vadd.f32 %v468, %v1950
    %1952 = vdwg.mxu0
    %1953 = vmatprep.subr.mxu0 0.0
    %1954 = vmatpush1.msra.mxu0 %v410
    %1955 = vmatprep.subr.mxu0 0.0
    %1956 = vmatpush1.msra.mxu0 %v413
    %1957 = vmatprep.subr.mxu0 0.0
    %1958 = vmatpush1.msra.mxu0 %v416
    %1959 = vmatprep.subr.mxu0 0.0
    %1960 = vmatpush1.msra.mxu0 %v419
    %1961 = vmatprep.subr.mxu0 0.0
    %1962 = vmatpush1.msra.mxu0 %v422
    %1963 = vmatprep.subr.mxu0 0.0
    %1964 = vmatpush1.msra.mxu0 %v425
    %1965 = vmatprep.subr.mxu0 0.0
    %1966 = vmatpush1.msra.mxu0 %v428
    %1967 = vmatprep.subr.mxu0 0.0
    %1968 = vmatpush1.msra.mxu0 %v431
    %1969 = vmatprep.subr.mxu0 0.0
    %1970 = vmatpush1.msra.mxu0 %v434
    %1971 = vmatprep.subr.mxu0 0.0
    %1972 = vmatpush1.msra.mxu0 %v437
    %1973 = vmatprep.subr.mxu0 0.0
    %1974 = vmatpush1.msra.mxu0 %v440
    %1975 = vmatprep.subr.mxu0 0.0
    %1976 = vmatpush1.msra.mxu0 %v443
    %1977 = vmatprep.subr.mxu0 0.0
    %1978 = vmatpush1.msra.mxu0 %v446
    %1979 = vmatprep.subr.mxu0 0.0
    %1980 = vmatpush1.msra.mxu0 %v449
    %1981 = vmatprep.subr.mxu0 0.0
    %1982 = vmatpush1.msra.mxu0 %v452
    %1983 = vmatprep.subr.mxu0 0.0
    %1984 = vmatpush1.msra.mxu0 %v455
    %1985 = vmatprep.subr.mxu0 0.0
    %1986 = vmatpush1.msra.mxu0 0.0
    %1987 = vmatprep.subr.mxu0 0.0
    %1988 = vmatpush1.msra.mxu0 0.0
    %1989 = vmatprep.subr.mxu0 0.0
    %1990 = vmatpush1.msra.mxu0 0.0
    %1991 = vmatprep.subr.mxu0 0.0
    %1992 = vmatpush1.msra.mxu0 0.0
    %1993 = vmatprep.subr.mxu0 0.0
    %1994 = vmatpush1.msra.mxu0 0.0
    %1995 = vmatprep.subr.mxu0 0.0
    %1996 = vmatpush1.msra.mxu0 0.0
    %1997 = vmatprep.subr.mxu0 0.0
    %1998 = vmatpush1.msra.mxu0 0.0
    %1999 = vmatprep.subr.mxu0 0.0
    %2000 = vmatpush1.msra.mxu0 0.0
    %2001 = vmatprep.subr.mxu0 0.0
    %2002 = vmatpush1.msra.mxu0 0.0
    %2003 = vmatprep.subr.mxu0 0.0
    %2004 = vmatpush1.msra.mxu0 0.0
    %2005 = vmatprep.subr.mxu0 0.0
    %2006 = vmatpush1.msra.mxu0 0.0
    %2007 = vmatprep.subr.mxu0 0.0
    %2008 = vmatpush1.msra.mxu0 0.0
    %2009 = vmatprep.subr.mxu0 0.0
    %2010 = vmatpush1.msra.mxu0 0.0
    %2011 = vmatprep.subr.mxu0 0.0
    %2012 = vmatpush1.msra.mxu0 0.0
    %2013 = vmatprep.subr.mxu0 0.0
    %2014 = vmatpush1.msra.mxu0 0.0
    %2015 = vmatprep.subr.mxu0 0.0
    %2016 = vmatpush1.msra.mxu0 0.0
    %2017 = vmatprep.mubr.f32.mxu0 0.0
    %2018 = vmatmul.mubr.f32.gmra.mrb[0].mxu0 %v1873
    %v2019 = vpop.f32.mrb[0].mxu0
    %v2020 = vadd.f32 %v472, %v2019
    %v2021 = vpop.f32.mrb[0].mxu0
    %2022 = vdwg.mxu0
    %v2023 = vadd.f32 %v1879, %v1949
    %v2024 = vxor.u32 %v2023, 2147483648
    %v2025 = vmul.f32 %v2024, 1.442695
    %v2026 = vpow.pop %v2025
    %v2027 = vadd.f32 %v2026, 1.0
    %v2028 = vrcp.pop %v2027
    %v2029 = vmul.f32 1.0, %v2028
    %v2030 = vadd.f32 %v1880, %v1951
    %v2031 = vxor.u32 %v2030, 2147483648
    %v2032 = vmul.f32 %v2031, 1.442695
    %v2033 = vpow.pop %v2032
    %v2034 = vadd.f32 %v2033, 1.0
    %v2035 = vrcp.pop %v2034
    %v2036 = vmul.f32 1.0, %v2035
    %v2037 = vmul.f32 %v2029, %v2020
    %v2038 = vadd.f32 %v1881, %v2037
    %v2039 = vtanh.pop %v2038
    %v2040 = vsub.f32 1.0, %v2036
    %v2041 = vmul.f32 %v2040, %v2039
    %v2042 = vmul.f32 %v2036, %v1873
    %v2043 = vadd.f32 %v2041, %v2042
    %s2044 = scalar_lea.vmem %s1, 64
    %v2045 = vld [vmem:[%s2044] sm:$0xff]
    %v2046 = vmul.f32 %v2045, %v2043
    %v2047 = vsub.f32 1.0, %v2045
    %v2048 = vmul.f32 %v2047, %v1873
    %v2049 = vadd.f32 %v2046, %v2048
    %s2050 = scalar_lea.vmem [#allocation3], 64
    %2051 = vst [vmem:[%s2050] sm:$0xff] %v2049
    %s2052 = scalar_lea.vmem [#allocation4], 8
    %2053 = vst [vmem:[%s2052] sm:$0xff] %v2049
    %s2054 = scalar_lea.vmem [#allocation2], 216
    %v2055 = vld [vmem:[%s2054] sm:$0xff]
    %v2056 = vld [vmem:[%s2054 + $0x8] sm:$0xff]
    %v2057 = vld [vmem:[%s2054 + $0x10] sm:$0xff]
    %2058 = vmatprep.subr.mxu0 %v409
    %2059 = vmatpush1.msra.mxu0 %v408
    %2060 = vmatprep.subr.mxu0 %v412
    %2061 = vmatpush1.msra.mxu0 %v411
    %2062 = vmatprep.subr.mxu0 %v415
    %2063 = vmatpush1.msra.mxu0 %v414
    %2064 = vmatprep.subr.mxu0 %v418
    %2065 = vmatpush1.msra.mxu0 %v417
    %2066 = vmatprep.subr.mxu0 %v421
    %2067 = vmatpush1.msra.mxu0 %v420
    %2068 = vmatprep.subr.mxu0 %v424
    %2069 = vmatpush1.msra.mxu0 %v423
    %2070 = vmatprep.subr.mxu0 %v427
    %2071 = vmatpush1.msra.mxu0 %v426
    %2072 = vmatprep.subr.mxu0 %v430
    %2073 = vmatpush1.msra.mxu0 %v429
    %2074 = vmatprep.subr.mxu0 %v433
    %2075 = vmatpush1.msra.mxu0 %v432
    %2076 = vmatprep.subr.mxu0 %v436
    %2077 = vmatpush1.msra.mxu0 %v435
    %2078 = vmatprep.subr.mxu0 %v439
    %2079 = vmatpush1.msra.mxu0 %v438
    %2080 = vmatprep.subr.mxu0 %v442
    %2081 = vmatpush1.msra.mxu0 %v441
    %2082 = vmatprep.subr.mxu0 %v445
    %2083 = vmatpush1.msra.mxu0 %v444
    %2084 = vmatprep.subr.mxu0 %v448
    %2085 = vmatpush1.msra.mxu0 %v447
    %2086 = vmatprep.subr.mxu0 %v451
    %2087 = vmatpush1.msra.mxu0 %v450
    %2088 = vmatprep.subr.mxu0 %v454
    %2089 = vmatpush1.msra.mxu0 %v453
    %2090 = vmatprep.subr.mxu0 0.0
    %2091 = vmatpush1.msra.mxu0 0.0
    %2092 = vmatprep.subr.mxu0 0.0
    %2093 = vmatpush1.msra.mxu0 0.0
    %2094 = vmatprep.subr.mxu0 0.0
    %2095 = vmatpush1.msra.mxu0 0.0
    %2096 = vmatprep.subr.mxu0 0.0
    %2097 = vmatpush1.msra.mxu0 0.0
    %2098 = vmatprep.subr.mxu0 0.0
    %2099 = vmatpush1.msra.mxu0 0.0
    %2100 = vmatprep.subr.mxu0 0.0
    %2101 = vmatpush1.msra.mxu0 0.0
    %2102 = vmatprep.subr.mxu0 0.0
    %2103 = vmatpush1.msra.mxu0 0.0
    %2104 = vmatprep.subr.mxu0 0.0
    %2105 = vmatpush1.msra.mxu0 0.0
    %2106 = vmatprep.subr.mxu0 0.0
    %2107 = vmatpush1.msra.mxu0 0.0
    %2108 = vmatprep.subr.mxu0 0.0
    %2109 = vmatpush1.msra.mxu0 0.0
    %2110 = vmatprep.subr.mxu0 0.0
    %2111 = vmatpush1.msra.mxu0 0.0
    %2112 = vmatprep.subr.mxu0 0.0
    %2113 = vmatpush1.msra.mxu0 0.0
    %2114 = vmatprep.subr.mxu0 0.0
    %2115 = vmatpush1.msra.mxu0 0.0
    %2116 = vmatprep.subr.mxu0 0.0
    %2117 = vmatpush1.msra.mxu0 0.0
    %2118 = vmatprep.subr.mxu0 0.0
    %2119 = vmatpush1.msra.mxu0 0.0
    %2120 = vmatprep.subr.mxu0 0.0
    %2121 = vmatpush1.msra.mxu0 0.0
    %2122 = vmatprep.mubr.f32.mxu0 0.0
    %2123 = vmatmul.mubr.f32.gmra.mrb[0].mxu0 %v2049
    %v2124 = vpop.f32.mrb[0].mxu0
    %v2125 = vadd.f32 %v464, %v2124
    %v2126 = vpop.f32.mrb[0].mxu0
    %v2127 = vadd.f32 %v468, %v2126
    %2128 = vdwg.mxu0
    %2129 = vmatprep.subr.mxu0 0.0
    %2130 = vmatpush1.msra.mxu0 %v410
    %2131 = vmatprep.subr.mxu0 0.0
    %2132 = vmatpush1.msra.mxu0 %v413
    %2133 = vmatprep.subr.mxu0 0.0
    %2134 = vmatpush1.msra.mxu0 %v416
    %2135 = vmatprep.subr.mxu0 0.0
    %2136 = vmatpush1.msra.mxu0 %v419
    %2137 = vmatprep.subr.mxu0 0.0
    %2138 = vmatpush1.msra.mxu0 %v422
    %2139 = vmatprep.subr.mxu0 0.0
    %2140 = vmatpush1.msra.mxu0 %v425
    %2141 = vmatprep.subr.mxu0 0.0
    %2142 = vmatpush1.msra.mxu0 %v428
    %2143 = vmatprep.subr.mxu0 0.0
    %2144 = vmatpush1.msra.mxu0 %v431
    %2145 = vmatprep.subr.mxu0 0.0
    %2146 = vmatpush1.msra.mxu0 %v434
    %2147 = vmatprep.subr.mxu0 0.0
    %2148 = vmatpush1.msra.mxu0 %v437
    %2149 = vmatprep.subr.mxu0 0.0
    %2150 = vmatpush1.msra.mxu0 %v440
    %2151 = vmatprep.subr.mxu0 0.0
    %2152 = vmatpush1.msra.mxu0 %v443
    %2153 = vmatprep.subr.mxu0 0.0
    %2154 = vmatpush1.msra.mxu0 %v446
    %2155 = vmatprep.subr.mxu0 0.0
    %2156 = vmatpush1.msra.mxu0 %v449
    %2157 = vmatprep.subr.mxu0 0.0
    %2158 = vmatpush1.msra.mxu0 %v452
    %2159 = vmatprep.subr.mxu0 0.0
    %2160 = vmatpush1.msra.mxu0 %v455
    %2161 = vmatprep.subr.mxu0 0.0
    %2162 = vmatpush1.msra.mxu0 0.0
    %2163 = vmatprep.subr.mxu0 0.0
    %2164 = vmatpush1.msra.mxu0 0.0
    %2165 = vmatprep.subr.mxu0 0.0
    %2166 = vmatpush1.msra.mxu0 0.0
    %2167 = vmatprep.subr.mxu0 0.0
    %2168 = vmatpush1.msra.mxu0 0.0
    %2169 = vmatprep.subr.mxu0 0.0
    %2170 = vmatpush1.msra.mxu0 0.0
    %2171 = vmatprep.subr.mxu0 0.0
    %2172 = vmatpush1.msra.mxu0 0.0
    %2173 = vmatprep.subr.mxu0 0.0
    %2174 = vmatpush1.msra.mxu0 0.0
    %2175 = vmatprep.subr.mxu0 0.0
    %2176 = vmatpush1.msra.mxu0 0.0
    %2177 = vmatprep.subr.mxu0 0.0
    %2178 = vmatpush1.msra.mxu0 0.0
    %2179 = vmatprep.subr.mxu0 0.0
    %2180 = vmatpush1.msra.mxu0 0.0
    %2181 = vmatprep.subr.mxu0 0.0
    %2182 = vmatpush1.msra.mxu0 0.0
    %2183 = vmatprep.subr.mxu0 0.0
    %2184 = vmatpush1.msra.mxu0 0.0
    %2185 = vmatprep.subr.mxu0 0.0
    %2186 = vmatpush1.msra.mxu0 0.0
    %2187 = vmatprep.subr.mxu0 0.0
    %2188 = vmatpush1.msra.mxu0 0.0
    %2189 = vmatprep.subr.mxu0 0.0
    %2190 = vmatpush1.msra.mxu0 0.0
    %2191 = vmatprep.subr.mxu0 0.0
    %2192 = vmatpush1.msra.mxu0 0.0
    %2193 = vmatprep.mubr.f32.mxu0 0.0
    %2194 = vmatmul.mubr.f32.gmra.mrb[0].mxu0 %v2049
    %v2195 = vpop.f32.mrb[0].mxu0
    %v2196 = vadd.f32 %v472, %v2195
    %v2197 = vpop.f32.mrb[0].mxu0
    %2198 = vdwg.mxu0
    %v2199 = vadd.f32 %v2055, %v2125
    %v2200 = vxor.u32 %v2199, 2147483648
    %v2201 = vmul.f32 %v2200, 1.442695
    %v2202 = vpow.pop %v2201
    %v2203 = vadd.f32 %v2202, 1.0
    %v2204 = vrcp.pop %v2203
    %v2205 = vmul.f32 1.0, %v2204
    %v2206 = vadd.f32 %v2056, %v2127
    %v2207 = vxor.u32 %v2206, 2147483648
    %v2208 = vmul.f32 %v2207, 1.442695
    %v2209 = vpow.pop %v2208
    %v2210 = vadd.f32 %v2209, 1.0
    %v2211 = vrcp.pop %v2210
    %v2212 = vmul.f32 1.0, %v2211
    %v2213 = vmul.f32 %v2205, %v2196
    %v2214 = vadd.f32 %v2057, %v2213
    %v2215 = vtanh.pop %v2214
    %v2216 = vsub.f32 1.0, %v2212
    %v2217 = vmul.f32 %v2216, %v2215
    %v2218 = vmul.f32 %v2212, %v2049
    %v2219 = vadd.f32 %v2217, %v2218
    %s2220 = scalar_lea.vmem %s1, 72
    %v2221 = vld [vmem:[%s2220] sm:$0xff]
    %v2222 = vmul.f32 %v2221, %v2219
    %v2223 = vsub.f32 1.0, %v2221
    %v2224 = vmul.f32 %v2223, %v2049
    %v2225 = vadd.f32 %v2222, %v2224
    %s2226 = scalar_lea.vmem [#allocation3], 72
    %2227 = vst [vmem:[%s2226] sm:$0xff] %v2225
    %2228 = vst [vmem:[#allocation4] sm:$0xff] %v2225
    %v2229 = vld [vmem:[#allocation3] sm:$0xff]
    %v2230 = vld [vmem:[#allocation3 + $0x8] sm:$0xff]
    %v2231 = vld [vmem:[#allocation3 + $0x10] sm:$0xff]
    %v2232 = vld [vmem:[#allocation3 + $0x18] sm:$0xff]
    %v2233 = vld [vmem:[#allocation3 + $0x20] sm:$0xff]
    %v2234 = vld [vmem:[#allocation3 + $0x28] sm:$0xff]
    %v2235 = vld [vmem:[#allocation3 + $0x30] sm:$0xff]
    %v2236 = vld [vmem:[#allocation3 + $0x38] sm:$0xff]
    %v2237 = vld [vmem:[#allocation3 + $0x40] sm:$0xff]
    %v2238 = vld [vmem:[#allocation3 + $0x48] sm:$0xff]
    %v2239 = vld [vmem:[#allocation4] sm:$0xff]
    %v2240 = vld [vmem:[#allocation4 + $0x8] sm:$0xff]
    %v2241 = vld [vmem:[#allocation4 + $0x10] sm:$0xff]
    %v2242 = vld [vmem:[#allocation4 + $0x18] sm:$0xff]
    %v2243 = vld [vmem:[#allocation4 + $0x20] sm:$0xff]
    %v2244 = vld [vmem:[#allocation4 + $0x28] sm:$0xff]
    %v2245 = vld [vmem:[#allocation4 + $0x30] sm:$0xff]
    %v2246 = vld [vmem:[#allocation4 + $0x38] sm:$0xff]
    %v2247 = vld [vmem:[#allocation4 + $0x40] sm:$0xff]
    %v2248 = vld [vmem:[#allocation4 + $0x48] sm:$0xff]
    %v2249 = vlaneseq
    %v2250 = vand.u32 %v2249, 127
    %vm2251 = vcmp.lt.s32.totalorder %v2250, 16
    %v2252 = vsel %vm2251, 1, 0
    %vm2253 = vcmp.eq.s32.totalorder %v2252, 1
    %v2254 = vsel %vm2253, %v2229, %v2239
    %v2255 = vsel %vm2253, %v2230, %v2240
    %v2256 = vsel %vm2253, %v2231, %v2241
    %v2257 = vsel %vm2253, %v2232, %v2242
    %v2258 = vsel %vm2253, %v2233, %v2243
    %v2259 = vsel %vm2253, %v2234, %v2244
    %v2260 = vsel %vm2253, %v2235, %v2245
    %v2261 = vsel %vm2253, %v2236, %v2246
    %v2262 = vsel %vm2253, %v2237, %v2247
    %v2263 = vsel %vm2253, %v2238, %v2248
    %v2264 = vld [vmem:[%s8] sm:$0xff]
    %v2265 = vld [vmem:[%s8 + $0x8] sm:$0xff]
    %v2266 = vld [vmem:[%s8 + $0x10] sm:$0xff]
    %v2267 = vld [vmem:[%s8 + $0x18] sm:$0xff]
    %v2268 = vld [vmem:[%s8 + $0x20] sm:$0xff]
    %v2269 = vld [vmem:[%s8 + $0x28] sm:$0xff]
    %v2270 = vld [vmem:[%s8 + $0x30] sm:$0xff]
    %v2271 = vld [vmem:[%s8 + $0x38] sm:$0xff]
    %v2272 = vld [vmem:[%s8 + $0x40] sm:$0xff]
    %v2273 = vld [vmem:[%s8 + $0x48] sm:$0xff]
    %v2274 = vld [vmem:[%s8 + $0x50] sm:$0xff]
    %v2275 = vld [vmem:[%s8 + $0x58] sm:$0xff]
    %v2276 = vld [vmem:[%s8 + $0x60] sm:$0xff]
    %v2277 = vld [vmem:[%s8 + $0x68] sm:$0xff]
    %v2278 = vld [vmem:[%s8 + $0x70] sm:$0xff]
    %v2279 = vld [vmem:[%s8 + $0x78] sm:$0xff]
    %2280 = vmatprep.subr.mxu0 0.0
    %2281 = vmatpush1.msra.mxu0 %v2264
    %2282 = vmatprep.subr.mxu0 0.0
    %2283 = vmatpush1.msra.mxu0 %v2265
    %2284 = vmatprep.subr.mxu0 0.0
    %2285 = vmatpush1.msra.mxu0 %v2266
    %2286 = vmatprep.subr.mxu0 0.0
    %2287 = vmatpush1.msra.mxu0 %v2267
    %2288 = vmatprep.subr.mxu0 0.0
    %2289 = vmatpush1.msra.mxu0 %v2268
    %2290 = vmatprep.subr.mxu0 0.0
    %2291 = vmatpush1.msra.mxu0 %v2269
    %2292 = vmatprep.subr.mxu0 0.0
    %2293 = vmatpush1.msra.mxu0 %v2270
    %2294 = vmatprep.subr.mxu0 0.0
    %2295 = vmatpush1.msra.mxu0 %v2271
    %2296 = vmatprep.subr.mxu0 0.0
    %2297 = vmatpush1.msra.mxu0 %v2272
    %2298 = vmatprep.subr.mxu0 0.0
    %2299 = vmatpush1.msra.mxu0 %v2273
    %2300 = vmatprep.subr.mxu0 0.0
    %2301 = vmatpush1.msra.mxu0 %v2274
    %2302 = vmatprep.subr.mxu0 0.0
    %2303 = vmatpush1.msra.mxu0 %v2275
    %2304 = vmatprep.subr.mxu0 0.0
    %2305 = vmatpush1.msra.mxu0 %v2276
    %2306 = vmatprep.subr.mxu0 0.0
    %2307 = vmatpush1.msra.mxu0 %v2277
    %2308 = vmatprep.subr.mxu0 0.0
    %2309 = vmatpush1.msra.mxu0 %v2278
    %2310 = vmatprep.subr.mxu0 0.0
    %2311 = vmatpush1.msra.mxu0 %v2279
    %2312 = vmatprep.subr.mxu0 0.0
    %2313 = vmatpush1.msra.mxu0 0.0
    %2314 = vmatprep.subr.mxu0 0.0
    %2315 = vmatpush1.msra.mxu0 0.0
    %2316 = vmatprep.subr.mxu0 0.0
    %2317 = vmatpush1.msra.mxu0 0.0
    %2318 = vmatprep.subr.mxu0 0.0
    %2319 = vmatpush1.msra.mxu0 0.0
    %2320 = vmatprep.subr.mxu0 0.0
    %2321 = vmatpush1.msra.mxu0 0.0
    %2322 = vmatprep.subr.mxu0 0.0
    %2323 = vmatpush1.msra.mxu0 0.0
    %2324 = vmatprep.subr.mxu0 0.0
    %2325 = vmatpush1.msra.mxu0 0.0
    %2326 = vmatprep.subr.mxu0 0.0
    %2327 = vmatpush1.msra.mxu0 0.0
    %2328 = vmatprep.subr.mxu0 0.0
    %2329 = vmatpush1.msra.mxu0 0.0
    %2330 = vmatprep.subr.mxu0 0.0
    %2331 = vmatpush1.msra.mxu0 0.0
    %2332 = vmatprep.subr.mxu0 0.0
    %2333 = vmatpush1.msra.mxu0 0.0
    %2334 = vmatprep.subr.mxu0 0.0
    %2335 = vmatpush1.msra.mxu0 0.0
    %2336 = vmatprep.subr.mxu0 0.0
    %2337 = vmatpush1.msra.mxu0 0.0
    %2338 = vmatprep.subr.mxu0 0.0
    %2339 = vmatpush1.msra.mxu0 0.0
    %2340 = vmatprep.subr.mxu0 0.0
    %2341 = vmatpush1.msra.mxu0 0.0
    %2342 = vmatprep.subr.mxu0 0.0
    %2343 = vmatpush1.msra.mxu0 0.0
    %2344 = vmatprep.mubr.f32.mxu0 0.0
    %2345 = vmatmul.mubr.f32.gmra.mrb[0].mxu0 %v2254
    %v2346 = vpop.f32.mrb[0].mxu0
    %v2347 = vadd.f32 0.0, %v2346
    %v2348 = vpop.f32.mrb[0].mxu0
    %2349 = vmatprep.mubr.f32.mxu0 0.0
    %2350 = vmatmul.mubr.f32.gmra.mrb[0].mxu0 %v2255
    %v2351 = vpop.f32.mrb[0].mxu0
    %v2352 = vadd.f32 0.0, %v2351
    %v2353 = vpop.f32.mrb[0].mxu0
    %2354 = vmatprep.mubr.f32.mxu0 0.0
    %2355 = vmatmul.mubr.f32.gmra.mrb[0].mxu0 %v2256
    %v2356 = vpop.f32.mrb[0].mxu0
    %v2357 = vadd.f32 0.0, %v2356
    %v2358 = vpop.f32.mrb[0].mxu0
    %2359 = vmatprep.mubr.f32.mxu0 0.0
    %2360 = vmatmul.mubr.f32.gmra.mrb[0].mxu0 %v2257
    %v2361 = vpop.f32.mrb[0].mxu0
    %v2362 = vadd.f32 0.0, %v2361
    %v2363 = vpop.f32.mrb[0].mxu0
    %2364 = vmatprep.mubr.f32.mxu0 0.0
    %2365 = vmatmul.mubr.f32.gmra.mrb[0].mxu0 %v2258
    %v2366 = vpop.f32.mrb[0].mxu0
    %v2367 = vadd.f32 0.0, %v2366
    %v2368 = vpop.f32.mrb[0].mxu0
    %2369 = vmatprep.mubr.f32.mxu0 0.0
    %2370 = vmatmul.mubr.f32.gmra.mrb[0].mxu0 %v2259
    %v2371 = vpop.f32.mrb[0].mxu0
    %v2372 = vadd.f32 0.0, %v2371
    %v2373 = vpop.f32.mrb[0].mxu0
    %2374 = vmatprep.mubr.f32.mxu0 0.0
    %2375 = vmatmul.mubr.f32.gmra.mrb[0].mxu0 %v2260
    %v2376 = vpop.f32.mrb[0].mxu0
    %v2377 = vadd.f32 0.0, %v2376
    %v2378 = vpop.f32.mrb[0].mxu0
    %2379 = vmatprep.mubr.f32.mxu0 0.0
    %2380 = vmatmul.mubr.f32.gmra.mrb[0].mxu0 %v2261
    %v2381 = vpop.f32.mrb[0].mxu0
    %v2382 = vadd.f32 0.0, %v2381
    %v2383 = vpop.f32.mrb[0].mxu0
    %2384 = vmatprep.mubr.f32.mxu0 0.0
    %2385 = vmatmul.mubr.f32.gmra.mrb[0].mxu0 %v2262
    %v2386 = vpop.f32.mrb[0].mxu0
    %v2387 = vadd.f32 0.0, %v2386
    %v2388 = vpop.f32.mrb[0].mxu0
    %2389 = vmatprep.mubr.f32.mxu0 0.0
    %2390 = vmatmul.mubr.f32.gmra.mrb[0].mxu0 %v2263
    %v2391 = vpop.f32.mrb[0].mxu0
    %v2392 = vadd.f32 0.0, %v2391
    %v2393 = vpop.f32.mrb[0].mxu0
    %2394 = vdwg.mxu0
    %v2395 = vld [vmem:[#allocation5] sm:$0xff]
    %v2396 = vld [vmem:[%s9] sm:$0xff]
    %v2397 = vld [vmem:[%s9 + $0x8] sm:$0xff]
    %v2398 = vld [vmem:[%s9 + $0x10] sm:$0xff]
    %v2399 = vld [vmem:[%s9 + $0x18] sm:$0xff]
    %v2400 = vld [vmem:[%s10] sm:$0x1]
    %v2402 = vlaneseq
    %v2403 = vshrl.u32 %v2402, 7
    %v2404 = vsub.s32 0, %v2403
    %v2405 = vrot.slane %v2400, %v2404
    %v2408 = vsel %vm107, %v2395, 0
    %2410 = vmatprep.subr.mxu0 0.0
    %2411 = vmatpush1.msra.mxu0 %v2396
    %2412 = vmatprep.subr.mxu0 0.0
    %2413 = vmatpush1.msra.mxu0 %v2397
    %2414 = vmatprep.subr.mxu0 0.0
    %2415 = vmatpush1.msra.mxu0 %v2398
    %2416 = vmatprep.subr.mxu0 0.0
    %2417 = vmatpush1.msra.mxu0 %v2399
    %2418 = vmatprep.subr.mxu0 0.0
    %2419 = vmatpush1.msra.mxu0 0.0
    %2420 = vmatprep.subr.mxu0 0.0
    %2421 = vmatpush1.msra.mxu0 0.0
    %2422 = vmatprep.subr.mxu0 0.0
    %2423 = vmatpush1.msra.mxu0 0.0
    %2424 = vmatprep.subr.mxu0 0.0
    %2425 = vmatpush1.msra.mxu0 0.0
    %2426 = vmatprep.subr.mxu0 0.0
    %2427 = vmatpush1.msra.mxu0 0.0
    %2428 = vmatprep.subr.mxu0 0.0
    %2429 = vmatpush1.msra.mxu0 0.0
    %2430 = vmatprep.subr.mxu0 0.0
    %2431 = vmatpush1.msra.mxu0 0.0
    %2432 = vmatprep.subr.mxu0 0.0
    %2433 = vmatpush1.msra.mxu0 0.0
    %2434 = vmatprep.subr.mxu0 0.0
    %2435 = vmatpush1.msra.mxu0 0.0
    %2436 = vmatprep.subr.mxu0 0.0
    %2437 = vmatpush1.msra.mxu0 0.0
    %2438 = vmatprep.subr.mxu0 0.0
    %2439 = vmatpush1.msra.mxu0 0.0
    %2440 = vmatprep.subr.mxu0 0.0
    %2441 = vmatpush1.msra.mxu0 0.0
    %2442 = vmatprep.subr.mxu0 0.0
    %2443 = vmatpush1.msra.mxu0 0.0
    %2444 = vmatprep.subr.mxu0 0.0
    %2445 = vmatpush1.msra.mxu0 0.0
    %2446 = vmatprep.subr.mxu0 0.0
    %2447 = vmatpush1.msra.mxu0 0.0
    %2448 = vmatprep.subr.mxu0 0.0
    %2449 = vmatpush1.msra.mxu0 0.0
    %2450 = vmatprep.subr.mxu0 0.0
    %2451 = vmatpush1.msra.mxu0 0.0
    %2452 = vmatprep.subr.mxu0 0.0
    %2453 = vmatpush1.msra.mxu0 0.0
    %2454 = vmatprep.subr.mxu0 0.0
    %2455 = vmatpush1.msra.mxu0 0.0
    %2456 = vmatprep.subr.mxu0 0.0
    %2457 = vmatpush1.msra.mxu0 0.0
    %2458 = vmatprep.subr.mxu0 0.0
    %2459 = vmatpush1.msra.mxu0 0.0
    %2460 = vmatprep.subr.mxu0 0.0
    %2461 = vmatpush1.msra.mxu0 0.0
    %2462 = vmatprep.subr.mxu0 0.0
    %2463 = vmatpush1.msra.mxu0 0.0
    %2464 = vmatprep.subr.mxu0 0.0
    %2465 = vmatpush1.msra.mxu0 0.0
    %2466 = vmatprep.subr.mxu0 0.0
    %2467 = vmatpush1.msra.mxu0 0.0
    %2468 = vmatprep.subr.mxu0 0.0
    %2469 = vmatpush1.msra.mxu0 0.0
    %2470 = vmatprep.subr.mxu0 0.0
    %2471 = vmatpush1.msra.mxu0 0.0
    %2472 = vmatprep.subr.mxu0 0.0
    %2473 = vmatpush1.msra.mxu0 0.0
    %2474 = vmatprep.mubr.f32.mxu0 0.0
    %2475 = vmatmul.mubr.f32.gmra.mrb[0].mxu0 %v2408
    %v2476 = vpop.f32.mrb[0].mxu0
    %v2477 = vadd.f32 %v2405, %v2476
    %v2478 = vpop.f32.mrb[0].mxu0
    %2479 = vdwg.mxu0
    %v2480 = vadd.f32 %v2347, %v2477
    %v2481 = vadd.f32 %v2352, %v2477
    %v2482 = vadd.f32 %v2357, %v2477
    %v2483 = vadd.f32 %v2362, %v2477
    %v2484 = vadd.f32 %v2367, %v2477
    %v2485 = vadd.f32 %v2372, %v2477
    %v2486 = vadd.f32 %v2377, %v2477
    %v2487 = vadd.f32 %v2382, %v2477
    %v2488 = vadd.f32 %v2387, %v2477
    %v2489 = vadd.f32 %v2392, %v2477
    %v2490 = vtanh.pop %v2480
    %v2491 = vtanh.pop %v2481
    %v2492 = vtanh.pop %v2482
    %v2493 = vtanh.pop %v2483
    %v2494 = vtanh.pop %v2484
    %v2495 = vtanh.pop %v2485
    %v2496 = vtanh.pop %v2486
    %v2497 = vtanh.pop %v2487
    %v2498 = vtanh.pop %v2488
    %v2499 = vtanh.pop %v2489
    %v2500 = vld [vmem:[%s11] sm:$0x1]
    %v2502 = vlaneseq
    %v2503 = vshrl.u32 %v2502, 7
    %v2504 = vsub.s32 0, %v2503
    %v2505 = vrot.slane %v2500, %v2504
    %v2507 = vmul.f32 %v2490, %v2505
    %v2508 = vmul.f32 %v2491, %v2505
    %v2509 = vmul.f32 %v2492, %v2505
    %v2510 = vmul.f32 %v2493, %v2505
    %v2511 = vmul.f32 %v2494, %v2505
    %v2512 = vmul.f32 %v2495, %v2505
    %v2513 = vmul.f32 %v2496, %v2505
    %v2514 = vmul.f32 %v2497, %v2505
    %v2515 = vmul.f32 %v2498, %v2505
    %v2516 = vmul.f32 %v2499, %v2505
    %vm2517 = vcmask 523264
    %v2518 = vsel %vm2517, %v2507, 0.0
    %2519 = vadd.xlane.f32.xlu0 %v2518
    %v2520 = vpop.xlane.xlu0 %2519
    %v2521 = vsel %vm2517, %v2508, 0.0
    %2522 = vadd.xlane.f32.xlu0 %v2521
    %v2523 = vpop.xlane.xlu0 %2522
    %v2524 = vsel %vm2517, %v2509, 0.0
    %2525 = vadd.xlane.f32.xlu0 %v2524
    %v2526 = vpop.xlane.xlu0 %2525
    %v2527 = vsel %vm2517, %v2510, 0.0
    %2528 = vadd.xlane.f32.xlu0 %v2527
    %v2529 = vpop.xlane.xlu0 %2528
    %v2530 = vsel %vm2517, %v2511, 0.0
    %2531 = vadd.xlane.f32.xlu0 %v2530
    %v2532 = vpop.xlane.xlu0 %2531
    %v2533 = vsel %vm2517, %v2512, 0.0
    %2534 = vadd.xlane.f32.xlu0 %v2533
    %v2535 = vpop.xlane.xlu0 %2534
    %v2536 = vsel %vm2517, %v2513, 0.0
    %2537 = vadd.xlane.f32.xlu0 %v2536
    %v2538 = vpop.xlane.xlu0 %2537
    %v2539 = vsel %vm2517, %v2514, 0.0
    %2540 = vadd.xlane.f32.xlu0 %v2539
    %v2541 = vpop.xlane.xlu0 %2540
    %v2542 = vsel %vm2517, %v2515, 0.0
    %2543 = vadd.xlane.f32.xlu0 %v2542
    %v2544 = vpop.xlane.xlu0 %2543
    %v2545 = vsel %vm2517, %v2516, 0.0
    %2546 = vadd.xlane.f32.xlu0 %v2545
    %v2547 = vpop.xlane.xlu0 %2546
    %v2548 = vmul.f32 %v2520, 1.442695
    %v2549 = vpow.pop %v2548
    %v2550 = vmul.f32 %v2523, 1.442695
    %v2551 = vpow.pop %v2550
    %v2552 = vmul.f32 %v2526, 1.442695
    %v2553 = vpow.pop %v2552
    %v2554 = vmul.f32 %v2529, 1.442695
    %v2555 = vpow.pop %v2554
    %v2556 = vmul.f32 %v2532, 1.442695
    %v2557 = vpow.pop %v2556
    %v2558 = vmul.f32 %v2535, 1.442695
    %v2559 = vpow.pop %v2558
    %v2560 = vmul.f32 %v2538, 1.442695
    %v2561 = vpow.pop %v2560
    %v2562 = vmul.f32 %v2541, 1.442695
    %v2563 = vpow.pop %v2562
    %v2564 = vmul.f32 %v2544, 1.442695
    %v2565 = vpow.pop %v2564
    %v2566 = vmul.f32 %v2547, 1.442695
    %v2567 = vpow.pop %v2566
    %v2568 = vld [vmem:[%s2] sm:$0xff]
    %v2569 = vld [vmem:[%s2 + $0x8] sm:$0xff]
    %v2570 = vld [vmem:[%s2 + $0x10] sm:$0xff]
    %v2571 = vld [vmem:[%s2 + $0x18] sm:$0xff]
    %v2572 = vld [vmem:[%s2 + $0x20] sm:$0xff]
    %v2573 = vld [vmem:[%s2 + $0x28] sm:$0xff]
    %v2574 = vld [vmem:[%s2 + $0x30] sm:$0xff]
    %v2575 = vld [vmem:[%s2 + $0x38] sm:$0xff]
    %v2576 = vld [vmem:[%s2 + $0x40] sm:$0xff]
    %v2577 = vld [vmem:[%s2 + $0x48] sm:$0xff]
    %v2578 = vmul.f32 %v2549, %v2568
    %v2579 = vmul.f32 %v2551, %v2569
    %v2580 = vmul.f32 %v2553, %v2570
    %v2581 = vmul.f32 %v2555, %v2571
    %v2582 = vmul.f32 %v2557, %v2572
    %v2583 = vmul.f32 %v2559, %v2573
    %v2584 = vmul.f32 %v2561, %v2574
    %v2585 = vmul.f32 %v2563, %v2575
    %v2586 = vmul.f32 %v2565, %v2576
    %v2587 = vmul.f32 %v2567, %v2577
    %vm2588 = vcmask 7168
    %v2589 = vsel %vm2588, %v2578, 0.0
    %v2590 = vsel %vm2588, %v2579, 0.0
    %v2591 = vadd.f32 %v2589, %v2590
    %v2592 = vsel %vm2588, %v2580, 0.0
    %v2593 = vadd.f32 %v2591, %v2592
    %v2594 = vsel %vm2588, %v2581, 0.0
    %v2595 = vadd.f32 %v2593, %v2594
    %v2596 = vsel %vm2588, %v2582, 0.0
    %v2597 = vadd.f32 %v2595, %v2596
    %v2598 = vsel %vm2588, %v2583, 0.0
    %v2599 = vadd.f32 %v2597, %v2598
    %v2600 = vsel %vm2588, %v2584, 0.0
    %v2601 = vadd.f32 %v2599, %v2600
    %v2602 = vsel %vm2588, %v2585, 0.0
    %v2603 = vadd.f32 %v2601, %v2602
    %v2604 = vsel %vm2588, %v2586, 0.0
    %v2605 = vadd.f32 %v2603, %v2604
    %v2606 = vsel %vm2588, %v2587, 0.0
    %v2607 = vadd.f32 %v2605, %v2606
    %v2608 = vadd.f32 %v2607, 0.0001
    %v2609 = vrcp.pop %v2608
    %v2610 = vmul.f32 %v2578, %v2609
    %v2611 = vmul.f32 %v2579, %v2609
    %v2612 = vmul.f32 %v2580, %v2609
    %v2613 = vmul.f32 %v2581, %v2609
    %v2614 = vmul.f32 %v2582, %v2609
    %v2615 = vmul.f32 %v2583, %v2609
    %v2616 = vmul.f32 %v2584, %v2609
    %v2617 = vmul.f32 %v2585, %v2609
    %v2618 = vmul.f32 %v2586, %v2609
    %v2619 = vmul.f32 %v2587, %v2609
    %2621 = vset.pattern.permute.xlu0 0
    %2622 = vperm.xlu0 %2621, %v2610
    %v2623 = vpop.permute.xlu0 %2622
    %2626 = vset.pattern.permute.xlu0 0
    %2627 = vperm.xlu0 %2626, %v2611
    %v2628 = vpop.permute.xlu0 %2627
    %2631 = vset.pattern.permute.xlu0 0
    %2632 = vperm.xlu0 %2631, %v2612
    %v2633 = vpop.permute.xlu0 %2632
    %2636 = vset.pattern.permute.xlu0 0
    %2637 = vperm.xlu0 %2636, %v2613
    %v2638 = vpop.permute.xlu0 %2637
    %2641 = vset.pattern.permute.xlu0 0
    %2642 = vperm.xlu0 %2641, %v2614
    %v2643 = vpop.permute.xlu0 %2642
    %2646 = vset.pattern.permute.xlu0 0
    %2647 = vperm.xlu0 %2646, %v2615
    %v2648 = vpop.permute.xlu0 %2647
    %2651 = vset.pattern.permute.xlu0 0
    %2652 = vperm.xlu0 %2651, %v2616
    %v2653 = vpop.permute.xlu0 %2652
    %2656 = vset.pattern.permute.xlu0 0
    %2657 = vperm.xlu0 %2656, %v2617
    %v2658 = vpop.permute.xlu0 %2657
    %2661 = vset.pattern.permute.xlu0 0
    %2662 = vperm.xlu0 %2661, %v2618
    %v2663 = vpop.permute.xlu0 %2662
    %2666 = vset.pattern.permute.xlu0 0
    %2667 = vperm.xlu0 %2666, %v2619
    %v2668 = vpop.permute.xlu0 %2667
    %v2670 = vmul.f32 %v2623, %v2254
    %v2671 = vmul.f32 %v2628, %v2255
    %v2672 = vmul.f32 %v2633, %v2256
    %v2673 = vmul.f32 %v2638, %v2257
    %v2674 = vmul.f32 %v2643, %v2258
    %v2675 = vmul.f32 %v2648, %v2259
    %v2676 = vmul.f32 %v2653, %v2260
    %v2677 = vmul.f32 %v2658, %v2261
    %v2678 = vmul.f32 %v2663, %v2262
    %v2679 = vmul.f32 %v2668, %v2263
    %v2680 = vadd.f32 %v2670, %v2671
    %v2681 = vadd.f32 %v2680, %v2672
    %v2682 = vadd.f32 %v2681, %v2673
    %v2683 = vadd.f32 %v2682, %v2674
    %v2684 = vadd.f32 %v2683, %v2675
    %v2685 = vadd.f32 %v2684, %v2676
    %v2686 = vadd.f32 %v2685, %v2677
    %v2687 = vadd.f32 %v2686, %v2678
    %v2688 = vadd.f32 %v2687, %v2679
    %2689 = vst.msk [vmem:[#allocation10] sm:$0xff] %vm107, %v2688
    // Predicated region
    $region58: #{tpu_custom_call.1} parent=1 // pred_check
      _
    $region59: #{tpu_custom_call.1} parent=1 // pred_check_branch
      %2691 = sbr.rel (0) target = $region61
    $region60: #{tpu_custom_call.1} parent=1 // pred_region
      %s2693 = ssub.s32 128, 128
      %2694 = vsyncadd [#allocation7], %s2693
      %s2696 = sshll.u32 [#allocation10], 4
      %s2697 = int_to_ptr.vmem [resolvable:$true] %s2696
      %2699 = dma.vmem_to_hbm [thread:$0]  %s2697, 128, %s12, [#allocation7]
    $region61: #{tpu_custom_call.1} parent=1 // pred_fallthru
      _
    // Predicated region
    $region62: #{tpu_custom_call.1} parent=1 // pred_check
      _
    $region63: #{tpu_custom_call.1} parent=1 // pred_check_branch
      %2701 = sbr.rel (0) target = $region65
    $region64: #{tpu_custom_call.1} parent=1 // pred_region
      %2702 = dma.done [#allocation7], 128
    $region65: #{tpu_custom_call.1} parent=1 // pred_fallthru
      _
    %2703 = vsyncpa [#allocation6], 1
    %2704 = vsyncpa [#allocation9], 1
    %2705 = vsyncpa [#allocation7], 1

</llo_original>
